<compile_context>
chip_gen: v5e
topology: v5e:2x2
jax: 0.10.0
libtpu: 0.0.40
codegen_flags: <defaults>
</compile_context>

<pallas_src>
import functools

import jax
import jax.numpy as jnp
from jax import lax
from jax.experimental import pallas as pl
from jax.experimental.pallas import tpu as pltpu

LANE = 128  # TPU lane width; channel dims are padded to a multiple of this.


def _round_up(x, m):
    return (x + m - 1) // m * m


def _pad_lane(c):
    return max(LANE, _round_up(c, LANE))


def _choose_row_tile(H, n, target=16):
    """Row-tile height TH (divisor of H, >= 2n) and halo-block height hb
    (divisor of TH, >= 2n) used to fetch the 2n extra halo rows per tile."""
    need = 2 * n
    th = None
    for t in range(min(target, H), 0, -1):
        if H % t == 0 and t >= need:
            th = t
            break
    if th is None:
        th = H
    if th < need:
        raise ValueError(f"image height {H} too small for {n} stacked 3x3 convs")
    hb = next(d for d in range(need, th + 1) if th % d == 0)
    return th, hb


def _make_c1_kernel(H, W, TH, n):
    R0 = TH + 2 * n  # rows of the cv1 output tile (center TH rows + n-row halo)

    def kernel(xm_ref, xh_ref, w1_ref, b1_ref, w3_ref, b3_ref,
               o_ref, xwin_ref, acc_ref):
        i = pl.program_id(1)
        g0 = i * TH - n  # global image row of tile-local row 0

        # Assemble the (TH + 2n)-row input window in a VMEM scratch:
        # TH main rows followed by the 2n halo rows just below them.
        xwin_ref[:TH] = xm_ref[0]
        xwin_ref[TH:] = xh_ref[0][: 2 * n]
        x = xwin_ref[...]                                      # (R0, W, C1p) bf16

        # ---- cv1: 1x1 conv (BN scale pre-folded into w1) + bias + SiLU --------
        y = jnp.einsum("rwc,cd->rwd", x, w1_ref[...],
                       preferred_element_type=jnp.float32)
        y = y + b1_ref[...]
        y = y * jax.nn.sigmoid(y)

        # Rows outside the image must be exactly zero: they act as the zero
        # padding of the following 3x3 convolutions.
        row = lax.broadcasted_iota(jnp.int32, (R0, 1, 1), 0) + g0
        y = jnp.where((row >= 0) & (row < H), y, 0.0)

        y_res = y[n:n + TH]  # residual branch (f32); always in-image rows

        col = lax.broadcasted_iota(jnp.int32, (1, W, 1), 1)

        prev = y  # f32, shrinks by 2 rows per 3x3 stage
        for k in range(n):
            rk = R0 - 2 * (k + 1)  # rows produced by this stage
            # kx = -1 / +1 neighbours via XLU rolls along W; zero the wrapped
            # column so the shift behaves like "same" zero padding.
            left = jnp.where(col == 0, 0.0,
                             pltpu.roll(prev, shift=1, axis=1))       # prev[:, w-1]
            right = jnp.where(col == W - 1, 0.0,
                              pltpu.roll(prev, shift=W - 1, axis=1))  # prev[:, w+1]
            taps = (left.astype(jnp.bfloat16),    # kx = 0
                    prev.astype(jnp.bfloat16),    # kx = 1
                    right.astype(jnp.bfloat16))   # kx = 2

            # 9 shifted MXU matmuls accumulated into an explicit f32 VMEM scratch.
            for t in range(9):
                ky, kx = t // 3, t % 3
                contrib = jnp.einsum("rwc,cd->rwd",
                                     taps[kx][ky:ky + rk],
                                     w3_ref[k, t],
                                     preferred_element_type=jnp.float32)
                if t == 0:
                    acc_ref[:rk] = contrib
                else:
                    acc_ref[:rk] += contrib

            z = acc_ref[:rk] + b3_ref[k:k + 1]
            z = z * jax.nn.sigmoid(z)
            if k < n - 1:
                # Intermediate stage: re-zero out-of-image rows so they act as the
                # zero padding of the next 3x3.
                rowk = (lax.broadcasted_iota(jnp.int32, (rk, 1, 1), 0)
                        + (g0 + k + 1))
                z = jnp.where((rowk >= 0) & (rowk < H), z, 0.0)
            prev = z

        # Residual: m(y) + y.
        o_ref[0] = (prev + y_res).astype(o_ref.dtype)

    return kernel


@functools.partial(jax.jit, static_argnames=("c2",))
def c1_forward(x_nchw, w1p, b1p, w3p, b3p, *, c2):
    """C1 forward. x: (B, c1, H, W) f32 NCHW -> (B, c2, H, W) f32 NCHW."""
    B, c1_ch, H, W = x_nchw.shape
    C1p, C2p = w1p.shape
    n = w3p.shape[0]
    TH, hb = _choose_row_tile(H, n)
    halo_blk = TH // hb  # (i+1)*TH is a multiple of hb -> integral block index

    # NCHW -> NHWC, lane-pad channels, add the n-row top/bottom zero halo, cast to
    # bf16.  This is the only host-side layout op; there is no per-stage padding.
    x = jnp.transpose(x_nchw, (0, 2, 3, 1))
    bottom = max(n, hb - n)
    xp = jnp.pad(x, ((0, 0), (n, bottom), (0, 0),
                     (0, C1p - c1_ch))).astype(jnp.bfloat16)

    kernel = _make_c1_kernel(H, W, TH, n)
    out = pl.pallas_call(
        kernel,
        out_shape=jax.ShapeDtypeStruct((B, H, W, C2p), jnp.float32),
        grid=(B, H // TH),
        in_specs=[
            # main TH rows of the tile
            pl.BlockSpec((1, TH, W, C1p), lambda b, i: (b, i, 0, 0)),
            # small block holding the 2n halo rows just below the main block
            pl.BlockSpec((1, hb, W, C1p),
                         lambda b, i: (b, (i + 1) * halo_blk, 0, 0)),
            pl.BlockSpec((C1p, C2p), lambda b, i: (0, 0)),             # cv1 weight
            pl.BlockSpec((1, C2p), lambda b, i: (0, 0)),               # cv1 bias
            pl.BlockSpec((n, 9, C2p, C2p), lambda b, i: (0, 0, 0, 0)),  # 3x3 weights
            pl.BlockSpec((n, C2p), lambda b, i: (0, 0)),               # 3x3 biases
        ],
        out_specs=pl.BlockSpec((1, TH, W, C2p), lambda b, i: (b, i, 0, 0)),
        scratch_shapes=[
            pltpu.VMEM((TH + 2 * n, W, C1p), jnp.bfloat16),        # input window
            pltpu.VMEM((TH + 2 * n - 2, W, C2p), jnp.float32),     # 9-tap accumulator
        ],
        compiler_params=pltpu.CompilerParams(
            dimension_semantics=("parallel", "parallel"),
            vmem_limit_bytes=32 * 1024 * 1024),
    )(xp, xp, w1p, b1p, w3p, b3p)

    return jnp.transpose(out[..., :c2], (0, 3, 1, 2))


# ----------------------------------------------------------------------------
# Parameter creation / packing (fold BN, pad channels, cast matmul operands)
# ----------------------------------------------------------------------------
def init_c1_raw_params(key, c1, c2, n):
    """Deterministic PyTorch-layout parameters (conv weights + BN stats)."""
    k1, *km = jax.random.split(key, 1 + n)
    idx = jnp.arange(c2, dtype=jnp.float32)
    return {
        "cv1_w": jax.random.normal(k1, (c2, c1, 1, 1), jnp.float32) * 0.1,
        "cv1_bn": (1.0 + 0.05 * idx, 0.02 * idx, 0.01 * idx, 1.0 + 0.03 * idx),
        "m_w": [jax.random.normal(km[i], (c2, c2, 3, 3), jnp.float32) * 0.1
                for i in range(n)],
        "m_bn": [(1.0 - 0.02 * idx, -0.01 * idx, 0.005 * idx, 1.0 + 0.01 * idx)
                 for _ in range(n)],
    }


def pack_c1_params(raw, c1, c2, n):
    """Fold inference-mode BN into the conv weights, pad channels to the lane
    width and cast the matmul operands to bf16 (biases stay f32)."""
    C1p, C2p = _pad_lane(c1), _pad_lane(c2)

    def fold(w, gamma, beta, mean, var, eps=1e-5):
        scale = gamma / jnp.sqrt(var + eps)
        w = w * scale.reshape((-1,) + (1,) * (w.ndim - 1))
        return w, beta - mean * scale

    w1, b1 = fold(raw["cv1_w"], *raw["cv1_bn"])                 # (c2,c1,1,1), (c2,)
    w1p = jnp.zeros((C1p, C2p), jnp.float32).at[:c1, :c2].set(w1[:, :, 0, 0].T)
    b1p = jnp.zeros((1, C2p), jnp.float32).at[0, :c2].set(b1)

    w3s, b3s = [], []
    for k in range(n):
        wk, bk = fold(raw["m_w"][k], *raw["m_bn"][k])           # (c2,c2,3,3), (c2,)
        w9 = jnp.transpose(wk, (2, 3, 1, 0)).reshape(9, c2, c2)  # (ky,kx,cin,cout)
        w3s.append(jnp.zeros((9, C2p, C2p), jnp.float32).at[:, :c2, :c2].set(w9))
        b3s.append(jnp.zeros((C2p,), jnp.float32).at[:c2].set(bk))

    return (w1p.astype(jnp.bfloat16), b1p,
            jnp.stack(w3s).astype(jnp.bfloat16), jnp.stack(b3s))


# ----------------------------------------------------------------------------
# Pure-JAX reference (same packed parameters / same bf16-matmul precision)
# ----------------------------------------------------------------------------
def c1_reference(x_nchw, w1p, b1p, w3p, b3p, c2):
    B, c1_ch, H, W = x_nchw.shape
    C1p = w1p.shape[0]
    x = jnp.transpose(x_nchw, (0, 2, 3, 1))
    x = jnp.pad(x, ((0, 0), (0, 0), (0, 0), (0, C1p - c1_ch))).astype(jnp.bfloat16)
    y = jnp.einsum("bhwc,cd->bhwd", x, w1p,
                   preferred_element_type=jnp.float32) + b1p[0]
    y = y * jax.nn.sigmoid(y)
    prev = y
    for k in range(w3p.shape[0]):
        p = jnp.pad(prev.astype(jnp.bfloat16), ((0, 0), (1, 1), (1, 1), (0, 0)))
        acc = jnp.zeros_like(y)
        for t in range(9):
            ky, kx = t // 3, t % 3
            acc = acc + jnp.einsum("bhwc,cd->bhwd",
                                   p[:, ky:ky + H, kx:kx + W, :], w3p[k, t],
                                   preferred_element_type=jnp.float32)
        z = acc + b3p[k]
        prev = z * jax.nn.sigmoid(z)
    out = prev + y
    return jnp.transpose(out[..., :c2], (0, 3, 1, 2))


if __name__ == "__main__":
    key = jax.random.PRNGKey(0)
    kx, kp = jax.random.split(key)

    B, c1_ch, c2_ch, H, W = 2, 4, 8, 16, 16
    x = jax.random.normal(kx, (B, c1_ch, H, W), jnp.float32)

    for n in (1, 2):  # n=1 is the module default; n=2 exercises the stage loop
        raw = init_c1_raw_params(jax.random.fold_in(kp, n), c1_ch, c2_ch, n)
        w1p, b1p, w3p, b3p = pack_c1_params(raw, c1_ch, c2_ch, n)

        out = c1_forward(x, w1p, b1p, w3p, b3p, c2=c2_ch)
        out = jax.block_until_ready(out)
        assert out.shape == (B, c2_ch, H, W), out.shape

        ref = c1_reference(x, w1p, b1p, w3p, b3p, c2_ch)
        err = float(jnp.max(jnp.abs(out - ref)))
        assert err < 2e-3, f"n={n}: max abs diff vs reference = {err}"

    print("KERNEL_OK")
</pallas_src>

<mosaic_0001>
module attributes {stable_mosaic.version = 11 : i64} {
  func.func @kernel(%arg0: i32, %arg1: i32, %arg2: memref<1x16x16x128xbf16, #tpu.memory_space<vmem>>, %arg3: memref<1x2x16x128xbf16, #tpu.memory_space<vmem>>, %arg4: memref<128x128xbf16, #tpu.memory_space<vmem>>, %arg5: memref<1x128xf32, #tpu.memory_space<vmem>>, %arg6: memref<1x9x128x128xbf16, #tpu.memory_space<vmem>>, %arg7: memref<1x128xf32, #tpu.memory_space<vmem>>, %arg8: memref<1x16x16x128xf32, #tpu.memory_space<vmem>>, %arg9: memref<18x16x128xbf16, #tpu.memory_space<vmem>>, %arg10: memref<16x16x128xf32, #tpu.memory_space<vmem>>) attributes {dimension_semantics = [#tpu.dimension_semantics<parallel>, #tpu.dimension_semantics<parallel>], iteration_bounds = array<i64: 2, 1>, scalar_prefetch = 0 : i64, scratch_operands = 2 : i64, tpu.core_type = #tpu.core_type<tc>, window_params = [{transform_indices = @transform_0, window_bounds = array<i64: 1, 16, 16, 128>}, {transform_indices = @transform_1, window_bounds = array<i64: 1, 2, 16, 128>}, {pipeline_mode = #tpu.pipeline_mode<synchronous>, transform_indices = @transform_2, window_bounds = array<i64: 128, 128>}, {pipeline_mode = #tpu.pipeline_mode<synchronous>, transform_indices = @transform_3, window_bounds = array<i64: 1, 128>}, {pipeline_mode = #tpu.pipeline_mode<synchronous>, transform_indices = @transform_4, window_bounds = array<i64: 1, 9, 128, 128>}, {pipeline_mode = #tpu.pipeline_mode<synchronous>, transform_indices = @transform_5, window_bounds = array<i64: 1, 128>}, {transform_indices = @transform_6, window_bounds = array<i64: 1, 16, 16, 128>}]} {
    %c16_i32 = arith.constant 16 : i32
    %0 = arith.muli %arg1, %c16_i32 : i32
    %c1_i32 = arith.constant 1 : i32
    %1 = arith.subi %0, %c1_i32 : i32
    %c0 = arith.constant 0 : index
    %c0_0 = arith.constant 0 : index
    %c0_1 = arith.constant 0 : index
    %c0_2 = arith.constant 0 : index
    %2 = vector.load %arg2[%c0, %c0_0, %c0_1, %c0_2] : memref<1x16x16x128xbf16, #tpu.memory_space<vmem>>, vector<1x16x16x128xbf16>
    %3 = vector.shape_cast %2 : vector<1x16x16x128xbf16> to vector<16x16x128xbf16>
    %c0_3 = arith.constant 0 : index
    %c0_4 = arith.constant 0 : index
    %c0_5 = arith.constant 0 : index
    %4 = vector.load %arg9[%c0_3, %c0_4, %c0_5] : memref<18x16x128xbf16, #tpu.memory_space<vmem>>, vector<16x16x128xbf16>
    tpu.vector_store %arg9[%c0_3, %c0_4, %c0_5], %3 {strides = array<i32>} : memref<18x16x128xbf16, #tpu.memory_space<vmem>>, vector<16x16x128xbf16>,
    %c0_6 = arith.constant 0 : index
    %c0_7 = arith.constant 0 : index
    %c0_8 = arith.constant 0 : index
    %c0_9 = arith.constant 0 : index
    %5 = vector.load %arg3[%c0_6, %c0_7, %c0_8, %c0_9] : memref<1x2x16x128xbf16, #tpu.memory_space<vmem>>, vector<1x2x16x128xbf16>
    %6 = vector.shape_cast %5 : vector<1x2x16x128xbf16> to vector<2x16x128xbf16>
    %c16 = arith.constant 16 : index
    %c0_10 = arith.constant 0 : index
    %c0_11 = arith.constant 0 : index
    %7 = vector.load %arg9[%c16, %c0_10, %c0_11] : memref<18x16x128xbf16, #tpu.memory_space<vmem>>, vector<2x16x128xbf16>
    tpu.vector_store %arg9[%c16, %c0_10, %c0_11], %6 {strides = array<i32>} : memref<18x16x128xbf16, #tpu.memory_space<vmem>>, vector<2x16x128xbf16>,
    %c0_12 = arith.constant 0 : index
    %c0_13 = arith.constant 0 : index
    %c0_14 = arith.constant 0 : index
    %8 = vector.load %arg9[%c0_12, %c0_13, %c0_14] : memref<18x16x128xbf16, #tpu.memory_space<vmem>>, vector<18x16x128xbf16>
    %c0_15 = arith.constant 0 : index
    %c0_16 = arith.constant 0 : index
    %9 = vector.load %arg4[%c0_15, %c0_16] : memref<128x128xbf16, #tpu.memory_space<vmem>>, vector<128x128xbf16>
    "tpu.trace_start"() <{level = 10 : i32, message = "rwc,cd->rwd"}> : () -> ()
    %cst = arith.constant dense<0.000000e+00> : vector<18x16x128xf32>
    %10 = tpu.matmul %8, %9, %cst {dimension_numbers = #tpu.dot_dimension_numbers<[2], [0], [0, 1], [1], [0, 0, 0, 1, 1, 1], [], []>} : vector<18x16x128xbf16>, vector<128x128xbf16>, vector<18x16x128xf32> -> vector<18x16x128xf32>
    "tpu.trace_stop"() : () -> ()
    %c0_17 = arith.constant 0 : index
    %c0_18 = arith.constant 0 : index
    %11 = vector.load %arg5[%c0_17, %c0_18] : memref<1x128xf32, #tpu.memory_space<vmem>>, vector<1x128xf32>
    %12 = vector.shape_cast %11 : vector<1x128xf32> to vector<1x1x128xf32>
    %13 = vector.broadcast %12 : vector<1x1x128xf32> to vector<18x16x128xf32>
    %14 = arith.addf %10, %13 : vector<18x16x128xf32>
    %15 = arith.negf %14 : vector<18x16x128xf32>
    %16 = math.exp %15 : vector<18x16x128xf32>
    %cst_19 = arith.constant 1.000000e+00 : f32
    %17 = vector.broadcast %cst_19 : f32 to vector<18x16x128xf32>
    %18 = arith.addf %17, %16 : vector<18x16x128xf32>
    %19 = arith.divf %17, %18 : vector<18x16x128xf32>
    %20 = arith.mulf %14, %19 : vector<18x16x128xf32>
    %21 = tpu.iota {dimensions = array<i32: 0>} : vector<18x1x1xi32>
    %22 = vector.broadcast %1 : i32 to vector<18x1x1xi32>
    %23 = arith.addi %21, %22 : vector<18x1x1xi32>
    %c0_i32 = arith.constant 0 : i32
    %24 = vector.broadcast %c0_i32 : i32 to vector<18x1x1xi32>
    %25 = arith.cmpi sge, %23, %24 : vector<18x1x1xi32>
    %c16_i32_20 = arith.constant 16 : i32
    %26 = vector.broadcast %c16_i32_20 : i32 to vector<18x1x1xi32>
    %27 = arith.cmpi slt, %23, %26 : vector<18x1x1xi32>
    %28 = arith.andi %25, %27 : vector<18x1x1xi1>
    %cst_21 = arith.constant 0.000000e+00 : f32
    %29 = vector.shape_cast %28 : vector<18x1x1xi1> to vector<18x1x1xi1>
    %30 = vector.broadcast %29 : vector<18x1x1xi1> to vector<18x16x128xi1>
    %31 = vector.broadcast %cst_21 : f32 to vector<18x16x128xf32>
    %32 = arith.select %30, %20, %31 : vector<18x16x128xi1>, vector<18x16x128xf32>
    %33 = vector.extract_strided_slice %32 {offsets = [1, 0, 0], sizes = [16, 16, 128], strides = [1, 1, 1]} : vector<18x16x128xf32> to vector<16x16x128xf32>
    %34 = tpu.iota {dimensions = array<i32: 1>} : vector<1x16x1xi32>
    %c0_i32_22 = arith.constant 0 : i32
    %35 = vector.broadcast %c0_i32_22 : i32 to vector<1x16x1xi32>
    %36 = arith.cmpi eq, %34, %35 : vector<1x16x1xi32>
    %c1_i32_23 = arith.constant 1 : i32
    %37 = tpu.dynamic_rotate %32 by %c1_i32_23 dim 1 : vector<18x16x128xf32>, i32 -> vector<18x16x128xf32>
    %cst_24 = arith.constant 0.000000e+00 : f32
    %38 = vector.shape_cast %36 : vector<1x16x1xi1> to vector<1x16x1xi1>
    %39 = vector.broadcast %38 : vector<1x16x1xi1> to vector<18x16x128xi1>
    %40 = vector.broadcast %cst_24 : f32 to vector<18x16x128xf32>
    %41 = arith.select %39, %40, %37 : vector<18x16x128xi1>, vector<18x16x128xf32>
    %c15_i32 = arith.constant 15 : i32
    %42 = vector.broadcast %c15_i32 : i32 to vector<1x16x1xi32>
    %43 = arith.cmpi eq, %34, %42 : vector<1x16x1xi32>
    %c15_i32_25 = arith.constant 15 : i32
    %44 = tpu.dynamic_rotate %32 by %c15_i32_25 dim 1 : vector<18x16x128xf32>, i32 -> vector<18x16x128xf32>
    %cst_26 = arith.constant 0.000000e+00 : f32
    %45 = vector.shape_cast %43 : vector<1x16x1xi1> to vector<1x16x1xi1>
    %46 = vector.broadcast %45 : vector<1x16x1xi1> to vector<18x16x128xi1>
    %47 = vector.broadcast %cst_26 : f32 to vector<18x16x128xf32>
    %48 = arith.select %46, %47, %44 : vector<18x16x128xi1>, vector<18x16x128xf32>
    %49 = arith.truncf %41 : vector<18x16x128xf32> to vector<18x16x128xbf16>
    %50 = arith.truncf %32 : vector<18x16x128xf32> to vector<18x16x128xbf16>
    %51 = arith.truncf %48 : vector<18x16x128xf32> to vector<18x16x128xbf16>
    %52 = vector.extract_strided_slice %49 {offsets = [0, 0, 0], sizes = [16, 16, 128], strides = [1, 1, 1]} : vector<18x16x128xbf16> to vector<16x16x128xbf16>
    %c0_27 = arith.constant 0 : index
    %c0_28 = arith.constant 0 : index
    %c0_29 = arith.constant 0 : index
    %c0_30 = arith.constant 0 : index
    %53 = vector.load %arg6[%c0_27, %c0_28, %c0_29, %c0_30] : memref<1x9x128x128xbf16, #tpu.memory_space<vmem>>, vector<1x1x128x128xbf16>
    %54 = vector.shape_cast %53 : vector<1x1x128x128xbf16> to vector<128x128xbf16>
    "tpu.trace_start"() <{level = 10 : i32, message = "rwc,cd->rwd"}> : () -> ()
    %cst_31 = arith.constant dense<0.000000e+00> : vector<16x16x128xf32>
    %55 = tpu.matmul %52, %54, %cst_31 {dimension_numbers = #tpu.dot_dimension_numbers<[2], [0], [0, 1], [1], [0, 0, 0, 1, 1, 1], [], []>} : vector<16x16x128xbf16>, vector<128x128xbf16>, vector<16x16x128xf32> -> vector<16x16x128xf32>
    "tpu.trace_stop"() : () -> ()
    %c0_32 = arith.constant 0 : index
    %c0_33 = arith.constant 0 : index
    %c0_34 = arith.constant 0 : index
    %56 = vector.load %arg10[%c0_32, %c0_33, %c0_34] : memref<16x16x128xf32, #tpu.memory_space<vmem>>, vector<16x16x128xf32>
    tpu.vector_store %arg10[%c0_32, %c0_33, %c0_34], %55 {strides = array<i32>} : memref<16x16x128xf32, #tpu.memory_space<vmem>>, vector<16x16x128xf32>,
    %57 = vector.extract_strided_slice %50 {offsets = [0, 0, 0], sizes = [16, 16, 128], strides = [1, 1, 1]} : vector<18x16x128xbf16> to vector<16x16x128xbf16>
    %c0_35 = arith.constant 0 : index
    %c1 = arith.constant 1 : index
    %c0_36 = arith.constant 0 : index
    %c0_37 = arith.constant 0 : index
    %58 = vector.load %arg6[%c0_35, %c1, %c0_36, %c0_37] : memref<1x9x128x128xbf16, #tpu.memory_space<vmem>>, vector<1x1x128x128xbf16>
    %59 = vector.shape_cast %58 : vector<1x1x128x128xbf16> to vector<128x128xbf16>
    "tpu.trace_start"() <{level = 10 : i32, message = "rwc,cd->rwd"}> : () -> ()
    %cst_38 = arith.constant dense<0.000000e+00> : vector<16x16x128xf32>
    %60 = tpu.matmul %57, %59, %cst_38 {dimension_numbers = #tpu.dot_dimension_numbers<[2], [0], [0, 1], [1], [0, 0, 0, 1, 1, 1], [], []>} : vector<16x16x128xbf16>, vector<128x128xbf16>, vector<16x16x128xf32> -> vector<16x16x128xf32>
    "tpu.trace_stop"() : () -> ()
    %c0_39 = arith.constant 0 : index
    %c0_40 = arith.constant 0 : index
    %c0_41 = arith.constant 0 : index
    %61 = vector.load %arg10[%c0_39, %c0_40, %c0_41] : memref<16x16x128xf32, #tpu.memory_space<vmem>>, vector<16x16x128xf32>
    %62 = arith.addf %61, %60 : vector<16x16x128xf32>
    %c0_42 = arith.constant 0 : index
    %c0_43 = arith.constant 0 : index
    %c0_44 = arith.constant 0 : index
    %63 = vector.load %arg10[%c0_42, %c0_43, %c0_44] : memref<16x16x128xf32, #tpu.memory_space<vmem>>, vector<16x16x128xf32>
    tpu.vector_store %arg10[%c0_42, %c0_43, %c0_44], %62 {strides = array<i32>} : memref<16x16x128xf32, #tpu.memory_space<vmem>>, vector<16x16x128xf32>,
    %64 = vector.extract_strided_slice %51 {offsets = [0, 0, 0], sizes = [16, 16, 128], strides = [1, 1, 1]} : vector<18x16x128xbf16> to vector<16x16x128xbf16>
    %c0_45 = arith.constant 0 : index
    %c2 = arith.constant 2 : index
    %c0_46 = arith.constant 0 : index
    %c0_47 = arith.constant 0 : index
    %65 = vector.load %arg6[%c0_45, %c2, %c0_46, %c0_47] : memref<1x9x128x128xbf16, #tpu.memory_space<vmem>>, vector<1x1x128x128xbf16>
    %66 = vector.shape_cast %65 : vector<1x1x128x128xbf16> to vector<128x128xbf16>
    "tpu.trace_start"() <{level = 10 : i32, message = "rwc,cd->rwd"}> : () -> ()
    %cst_48 = arith.constant dense<0.000000e+00> : vector<16x16x128xf32>
    %67 = tpu.matmul %64, %66, %cst_48 {dimension_numbers = #tpu.dot_dimension_numbers<[2], [0], [0, 1], [1], [0, 0, 0, 1, 1, 1], [], []>} : vector<16x16x128xbf16>, vector<128x128xbf16>, vector<16x16x128xf32> -> vector<16x16x128xf32>
    "tpu.trace_stop"() : () -> ()
    %c0_49 = arith.constant 0 : index
    %c0_50 = arith.constant 0 : index
    %c0_51 = arith.constant 0 : index
    %68 = vector.load %arg10[%c0_49, %c0_50, %c0_51] : memref<16x16x128xf32, #tpu.memory_space<vmem>>, vector<16x16x128xf32>
    %69 = arith.addf %68, %67 : vector<16x16x128xf32>
    %c0_52 = arith.constant 0 : index
    %c0_53 = arith.constant 0 : index
    %c0_54 = arith.constant 0 : index
    %70 = vector.load %arg10[%c0_52, %c0_53, %c0_54] : memref<16x16x128xf32, #tpu.memory_space<vmem>>, vector<16x16x128xf32>
    tpu.vector_store %arg10[%c0_52, %c0_53, %c0_54], %69 {strides = array<i32>} : memref<16x16x128xf32, #tpu.memory_space<vmem>>, vector<16x16x128xf32>,
    %71 = vector.extract_strided_slice %49 {offsets = [1, 0, 0], sizes = [16, 16, 128], strides = [1, 1, 1]} : vector<18x16x128xbf16> to vector<16x16x128xbf16>
    %c0_55 = arith.constant 0 : index
    %c3 = arith.constant 3 : index
    %c0_56 = arith.constant 0 : index
    %c0_57 = arith.constant 0 : index
    %72 = vector.load %arg6[%c0_55, %c3, %c0_56, %c0_57] : memref<1x9x128x128xbf16, #tpu.memory_space<vmem>>, vector<1x1x128x128xbf16>
    %73 = vector.shape_cast %72 : vector<1x1x128x128xbf16> to vector<128x128xbf16>
    "tpu.trace_start"() <{level = 10 : i32, message = "rwc,cd->rwd"}> : () -> ()
    %cst_58 = arith.constant dense<0.000000e+00> : vector<16x16x128xf32>
    %74 = tpu.matmul %71, %73, %cst_58 {dimension_numbers = #tpu.dot_dimension_numbers<[2], [0], [0, 1], [1], [0, 0, 0, 1, 1, 1], [], []>} : vector<16x16x128xbf16>, vector<128x128xbf16>, vector<16x16x128xf32> -> vector<16x16x128xf32>
    "tpu.trace_stop"() : () -> ()
    %c0_59 = arith.constant 0 : index
    %c0_60 = arith.constant 0 : index
    %c0_61 = arith.constant 0 : index
    %75 = vector.load %arg10[%c0_59, %c0_60, %c0_61] : memref<16x16x128xf32, #tpu.memory_space<vmem>>, vector<16x16x128xf32>
    %76 = arith.addf %75, %74 : vector<16x16x128xf32>
    %c0_62 = arith.constant 0 : index
    %c0_63 = arith.constant 0 : index
    %c0_64 = arith.constant 0 : index
    %77 = vector.load %arg10[%c0_62, %c0_63, %c0_64] : memref<16x16x128xf32, #tpu.memory_space<vmem>>, vector<16x16x128xf32>
    tpu.vector_store %arg10[%c0_62, %c0_63, %c0_64], %76 {strides = array<i32>} : memref<16x16x128xf32, #tpu.memory_space<vmem>>, vector<16x16x128xf32>,
    %78 = vector.extract_strided_slice %50 {offsets = [1, 0, 0], sizes = [16, 16, 128], strides = [1, 1, 1]} : vector<18x16x128xbf16> to vector<16x16x128xbf16>
    %c0_65 = arith.constant 0 : index
    %c4 = arith.constant 4 : index
    %c0_66 = arith.constant 0 : index
    %c0_67 = arith.constant 0 : index
    %79 = vector.load %arg6[%c0_65, %c4, %c0_66, %c0_67] : memref<1x9x128x128xbf16, #tpu.memory_space<vmem>>, vector<1x1x128x128xbf16>
    %80 = vector.shape_cast %79 : vector<1x1x128x128xbf16> to vector<128x128xbf16>
    "tpu.trace_start"() <{level = 10 : i32, message = "rwc,cd->rwd"}> : () -> ()
    %cst_68 = arith.constant dense<0.000000e+00> : vector<16x16x128xf32>
    %81 = tpu.matmul %78, %80, %cst_68 {dimension_numbers = #tpu.dot_dimension_numbers<[2], [0], [0, 1], [1], [0, 0, 0, 1, 1, 1], [], []>} : vector<16x16x128xbf16>, vector<128x128xbf16>, vector<16x16x128xf32> -> vector<16x16x128xf32>
    "tpu.trace_stop"() : () -> ()
    %c0_69 = arith.constant 0 : index
    %c0_70 = arith.constant 0 : index
    %c0_71 = arith.constant 0 : index
    %82 = vector.load %arg10[%c0_69, %c0_70, %c0_71] : memref<16x16x128xf32, #tpu.memory_space<vmem>>, vector<16x16x128xf32>
    %83 = arith.addf %82, %81 : vector<16x16x128xf32>
    %c0_72 = arith.constant 0 : index
    %c0_73 = arith.constant 0 : index
    %c0_74 = arith.constant 0 : index
    %84 = vector.load %arg10[%c0_72, %c0_73, %c0_74] : memref<16x16x128xf32, #tpu.memory_space<vmem>>, vector<16x16x128xf32>
    tpu.vector_store %arg10[%c0_72, %c0_73, %c0_74], %83 {strides = array<i32>} : memref<16x16x128xf32, #tpu.memory_space<vmem>>, vector<16x16x128xf32>,
    %85 = vector.extract_strided_slice %51 {offsets = [1, 0, 0], sizes = [16, 16, 128], strides = [1, 1, 1]} : vector<18x16x128xbf16> to vector<16x16x128xbf16>
    %c0_75 = arith.constant 0 : index
    %c5 = arith.constant 5 : index
    %c0_76 = arith.constant 0 : index
    %c0_77 = arith.constant 0 : index
    %86 = vector.load %arg6[%c0_75, %c5, %c0_76, %c0_77] : memref<1x9x128x128xbf16, #tpu.memory_space<vmem>>, vector<1x1x128x128xbf16>
    %87 = vector.shape_cast %86 : vector<1x1x128x128xbf16> to vector<128x128xbf16>
    "tpu.trace_start"() <{level = 10 : i32, message = "rwc,cd->rwd"}> : () -> ()
    %cst_78 = arith.constant dense<0.000000e+00> : vector<16x16x128xf32>
    %88 = tpu.matmul %85, %87, %cst_78 {dimension_numbers = #tpu.dot_dimension_numbers<[2], [0], [0, 1], [1], [0, 0, 0, 1, 1, 1], [], []>} : vector<16x16x128xbf16>, vector<128x128xbf16>, vector<16x16x128xf32> -> vector<16x16x128xf32>
    "tpu.trace_stop"() : () -> ()
    %c0_79 = arith.constant 0 : index
    %c0_80 = arith.constant 0 : index
    %c0_81 = arith.constant 0 : index
    %89 = vector.load %arg10[%c0_79, %c0_80, %c0_81] : memref<16x16x128xf32, #tpu.memory_space<vmem>>, vector<16x16x128xf32>
    %90 = arith.addf %89, %88 : vector<16x16x128xf32>
    %c0_82 = arith.constant 0 : index
    %c0_83 = arith.constant 0 : index
    %c0_84 = arith.constant 0 : index
    %91 = vector.load %arg10[%c0_82, %c0_83, %c0_84] : memref<16x16x128xf32, #tpu.memory_space<vmem>>, vector<16x16x128xf32>
    tpu.vector_store %arg10[%c0_82, %c0_83, %c0_84], %90 {strides = array<i32>} : memref<16x16x128xf32, #tpu.memory_space<vmem>>, vector<16x16x128xf32>,
    %92 = vector.extract_strided_slice %49 {offsets = [2, 0, 0], sizes = [16, 16, 128], strides = [1, 1, 1]} : vector<18x16x128xbf16> to vector<16x16x128xbf16>
    %c0_85 = arith.constant 0 : index
    %c6 = arith.constant 6 : index
    %c0_86 = arith.constant 0 : index
    %c0_87 = arith.constant 0 : index
    %93 = vector.load %arg6[%c0_85, %c6, %c0_86, %c0_87] : memref<1x9x128x128xbf16, #tpu.memory_space<vmem>>, vector<1x1x128x128xbf16>
    %94 = vector.shape_cast %93 : vector<1x1x128x128xbf16> to vector<128x128xbf16>
    "tpu.trace_start"() <{level = 10 : i32, message = "rwc,cd->rwd"}> : () -> ()
    %cst_88 = arith.constant dense<0.000000e+00> : vector<16x16x128xf32>
    %95 = tpu.matmul %92, %94, %cst_88 {dimension_numbers = #tpu.dot_dimension_numbers<[2], [0], [0, 1], [1], [0, 0, 0, 1, 1, 1], [], []>} : vector<16x16x128xbf16>, vector<128x128xbf16>, vector<16x16x128xf32> -> vector<16x16x128xf32>
    "tpu.trace_stop"() : () -> ()
    %c0_89 = arith.constant 0 : index
    %c0_90 = arith.constant 0 : index
    %c0_91 = arith.constant 0 : index
    %96 = vector.load %arg10[%c0_89, %c0_90, %c0_91] : memref<16x16x128xf32, #tpu.memory_space<vmem>>, vector<16x16x128xf32>
    %97 = arith.addf %96, %95 : vector<16x16x128xf32>
    %c0_92 = arith.constant 0 : index
    %c0_93 = arith.constant 0 : index
    %c0_94 = arith.constant 0 : index
    %98 = vector.load %arg10[%c0_92, %c0_93, %c0_94] : memref<16x16x128xf32, #tpu.memory_space<vmem>>, vector<16x16x128xf32>
    tpu.vector_store %arg10[%c0_92, %c0_93, %c0_94], %97 {strides = array<i32>} : memref<16x16x128xf32, #tpu.memory_space<vmem>>, vector<16x16x128xf32>,
    %99 = vector.extract_strided_slice %50 {offsets = [2, 0, 0], sizes = [16, 16, 128], strides = [1, 1, 1]} : vector<18x16x128xbf16> to vector<16x16x128xbf16>
    %c0_95 = arith.constant 0 : index
    %c7 = arith.constant 7 : index
    %c0_96 = arith.constant 0 : index
    %c0_97 = arith.constant 0 : index
    %100 = vector.load %arg6[%c0_95, %c7, %c0_96, %c0_97] : memref<1x9x128x128xbf16, #tpu.memory_space<vmem>>, vector<1x1x128x128xbf16>
    %101 = vector.shape_cast %100 : vector<1x1x128x128xbf16> to vector<128x128xbf16>
    "tpu.trace_start"() <{level = 10 : i32, message = "rwc,cd->rwd"}> : () -> ()
    %cst_98 = arith.constant dense<0.000000e+00> : vector<16x16x128xf32>
    %102 = tpu.matmul %99, %101, %cst_98 {dimension_numbers = #tpu.dot_dimension_numbers<[2], [0], [0, 1], [1], [0, 0, 0, 1, 1, 1], [], []>} : vector<16x16x128xbf16>, vector<128x128xbf16>, vector<16x16x128xf32> -> vector<16x16x128xf32>
    "tpu.trace_stop"() : () -> ()
    %c0_99 = arith.constant 0 : index
    %c0_100 = arith.constant 0 : index
    %c0_101 = arith.constant 0 : index
    %103 = vector.load %arg10[%c0_99, %c0_100, %c0_101] : memref<16x16x128xf32, #tpu.memory_space<vmem>>, vector<16x16x128xf32>
    %104 = arith.addf %103, %102 : vector<16x16x128xf32>
    %c0_102 = arith.constant 0 : index
    %c0_103 = arith.constant 0 : index
    %c0_104 = arith.constant 0 : index
    %105 = vector.load %arg10[%c0_102, %c0_103, %c0_104] : memref<16x16x128xf32, #tpu.memory_space<vmem>>, vector<16x16x128xf32>
    tpu.vector_store %arg10[%c0_102, %c0_103, %c0_104], %104 {strides = array<i32>} : memref<16x16x128xf32, #tpu.memory_space<vmem>>, vector<16x16x128xf32>,
    %106 = vector.extract_strided_slice %51 {offsets = [2, 0, 0], sizes = [16, 16, 128], strides = [1, 1, 1]} : vector<18x16x128xbf16> to vector<16x16x128xbf16>
    %c0_105 = arith.constant 0 : index
    %c8 = arith.constant 8 : index
    %c0_106 = arith.constant 0 : index
    %c0_107 = arith.constant 0 : index
    %107 = vector.load %arg6[%c0_105, %c8, %c0_106, %c0_107] : memref<1x9x128x128xbf16, #tpu.memory_space<vmem>>, vector<1x1x128x128xbf16>
    %108 = vector.shape_cast %107 : vector<1x1x128x128xbf16> to vector<128x128xbf16>
    "tpu.trace_start"() <{level = 10 : i32, message = "rwc,cd->rwd"}> : () -> ()
    %cst_108 = arith.constant dense<0.000000e+00> : vector<16x16x128xf32>
    %109 = tpu.matmul %106, %108, %cst_108 {dimension_numbers = #tpu.dot_dimension_numbers<[2], [0], [0, 1], [1], [0, 0, 0, 1, 1, 1], [], []>} : vector<16x16x128xbf16>, vector<128x128xbf16>, vector<16x16x128xf32> -> vector<16x16x128xf32>
    "tpu.trace_stop"() : () -> ()
    %c0_109 = arith.constant 0 : index
    %c0_110 = arith.constant 0 : index
    %c0_111 = arith.constant 0 : index
    %110 = vector.load %arg10[%c0_109, %c0_110, %c0_111] : memref<16x16x128xf32, #tpu.memory_space<vmem>>, vector<16x16x128xf32>
    %111 = arith.addf %110, %109 : vector<16x16x128xf32>
    %c0_112 = arith.constant 0 : index
    %c0_113 = arith.constant 0 : index
    %c0_114 = arith.constant 0 : index
    %112 = vector.load %arg10[%c0_112, %c0_113, %c0_114] : memref<16x16x128xf32, #tpu.memory_space<vmem>>, vector<16x16x128xf32>
    tpu.vector_store %arg10[%c0_112, %c0_113, %c0_114], %111 {strides = array<i32>} : memref<16x16x128xf32, #tpu.memory_space<vmem>>, vector<16x16x128xf32>,
    %c0_115 = arith.constant 0 : index
    %c0_116 = arith.constant 0 : index
    %c0_117 = arith.constant 0 : index
    %113 = vector.load %arg10[%c0_115, %c0_116, %c0_117] : memref<16x16x128xf32, #tpu.memory_space<vmem>>, vector<16x16x128xf32>
    %c0_118 = arith.constant 0 : index
    %c0_119 = arith.constant 0 : index
    %114 = vector.load %arg7[%c0_118, %c0_119] : memref<1x128xf32, #tpu.memory_space<vmem>>, vector<1x128xf32>
    %115 = vector.shape_cast %114 : vector<1x128xf32> to vector<1x1x128xf32>
    %116 = vector.broadcast %115 : vector<1x1x128xf32> to vector<16x16x128xf32>
    %117 = arith.addf %113, %116 : vector<16x16x128xf32>
    %118 = arith.negf %117 : vector<16x16x128xf32>
    %119 = math.exp %118 : vector<16x16x128xf32>
    %cst_120 = arith.constant 1.000000e+00 : f32
    %120 = vector.broadcast %cst_120 : f32 to vector<16x16x128xf32>
    %121 = arith.addf %120, %119 : vector<16x16x128xf32>
    %122 = arith.divf %120, %121 : vector<16x16x128xf32>
    %123 = arith.mulf %117, %122 : vector<16x16x128xf32>
    %124 = arith.addf %123, %33 : vector<16x16x128xf32>
    %c0_121 = arith.constant 0 : index
    %c0_122 = arith.constant 0 : index
    %c0_123 = arith.constant 0 : index
    %c0_124 = arith.constant 0 : index
    %125 = vector.load %arg8[%c0_121, %c0_122, %c0_123, %c0_124] : memref<1x16x16x128xf32, #tpu.memory_space<vmem>>, vector<1x16x16x128xf32>
    %126 = vector.shape_cast %125 : vector<1x16x16x128xf32> to vector<16x16x128xf32>
    %127 = vector.shape_cast %124 : vector<16x16x128xf32> to vector<1x16x16x128xf32>
    tpu.vector_store %arg8[%c0_121, %c0_122, %c0_123, %c0_124], %127 {strides = array<i32>} : memref<1x16x16x128xf32, #tpu.memory_space<vmem>>, vector<1x16x16x128xf32>,
    return
  }
  func.func @transform_0(%arg0: i32, %arg1: i32) -> (i32, i32, i32, i32) {
    %c0_i32 = arith.constant 0 : i32
    %c0_i32_0 = arith.constant 0 : i32
    %c0_i32_1 = arith.constant 0 : i32
    return %arg0, %arg1, %c0_i32, %c0_i32_0 : i32, i32, i32, i32
  }
  func.func @transform_1(%arg0: i32, %arg1: i32) -> (i32, i32, i32, i32) {
    %c1_i32 = arith.constant 1 : i32
    %0 = arith.addi %arg1, %c1_i32 : i32
    %c8_i32 = arith.constant 8 : i32
    %1 = arith.muli %0, %c8_i32 : i32
    %c0_i32 = arith.constant 0 : i32
    %c0_i32_0 = arith.constant 0 : i32
    %c0_i32_1 = arith.constant 0 : i32
    return %arg0, %1, %c0_i32, %c0_i32_0 : i32, i32, i32, i32
  }
  func.func @transform_2(%arg0: i32, %arg1: i32) -> (i32, i32) {
    %c0_i32 = arith.constant 0 : i32
    %c0_i32_0 = arith.constant 0 : i32
    %c0_i32_1 = arith.constant 0 : i32
    return %c0_i32, %c0_i32_0 : i32, i32
  }
  func.func @transform_3(%arg0: i32, %arg1: i32) -> (i32, i32) {
    %c0_i32 = arith.constant 0 : i32
    %c0_i32_0 = arith.constant 0 : i32
    %c0_i32_1 = arith.constant 0 : i32
    return %c0_i32, %c0_i32_0 : i32, i32
  }
  func.func @transform_4(%arg0: i32, %arg1: i32) -> (i32, i32, i32, i32) {
    %c0_i32 = arith.constant 0 : i32
    %c0_i32_0 = arith.constant 0 : i32
    %c0_i32_1 = arith.constant 0 : i32
    %c0_i32_2 = arith.constant 0 : i32
    %c0_i32_3 = arith.constant 0 : i32
    return %c0_i32, %c0_i32_0, %c0_i32_1, %c0_i32_2 : i32, i32, i32, i32
  }
  func.func @transform_5(%arg0: i32, %arg1: i32) -> (i32, i32) {
    %c0_i32 = arith.constant 0 : i32
    %c0_i32_0 = arith.constant 0 : i32
    %c0_i32_1 = arith.constant 0 : i32
    return %c0_i32, %c0_i32_0 : i32, i32
  }
  func.func @transform_6(%arg0: i32, %arg1: i32) -> (i32, i32, i32, i32) {
    %c0_i32 = arith.constant 0 : i32
    %c0_i32_0 = arith.constant 0 : i32
    %c0_i32_1 = arith.constant 0 : i32
    return %arg0, %arg1, %c0_i32, %c0_i32_0 : i32, i32, i32, i32
  }
}

</mosaic_0001>

<llo_original>
// kernel: c1_forward.1
$region0: #{c1_forward.1}
  #allocation0 [shape = 'u32[]', space=smem, size = 0x4, offset = 0x4, fixed_abs, tag = 'smem constant byte address 0x4 - core index']
  #allocation1 [shape = 'u32[72,128]{1,0:T(1,128)}', space=vmem, size = 0x9000, scoped, tag = 'internal scratch']
  #allocation2 [shape = 'bf16[18,16,128]{2,1,0:T(8,128)(2,1)}', space=vmem, size = 0x12000, scoped, tag = 'scratch operand']
  #allocation3 [shape = 'f32[16,16,128]{2,1,0:T(8,128)}', space=vmem, size = 0x20000, scoped, tag = 'scratch operand']
  %s0 = inlined_call_operand.vmem [shape: bf16[2,18,16,128], index: 0, kind: input, shape index: {}, may-alias: {0,1}]
  %s1 = inlined_call_operand.vmem [shape: bf16[2,18,16,128], index: 1, kind: input, shape index: {}, may-alias: {0,1}]
  %s2 = inlined_call_operand.vmem [shape: bf16[128,128], index: 2, kind: input, shape index: {}]
  %s3 = inlined_call_operand.vmem [shape: f32[1,128], index: 3, kind: input, shape index: {}]
  %s4 = inlined_call_operand.vmem [shape: bf16[1,9,128,128], index: 4, kind: input, shape index: {}]
  %s5 = inlined_call_operand.vmem [shape: f32[1,128], index: 5, kind: input, shape index: {}]
  %s6 = inlined_call_operand.vmem [shape: f32[2,16,16,128], index: 6, kind: output, shape index: {}]
  %s7 = sld [smem:[#allocation0]]
  $region57: #{c1_forward.1} parent=0
    _
  %s9 = ssub.s32 1, %s7
  %s10 = scalar_select 0, %s9, %s7
  loop: start=0, step=1, limit=4
  $region2: #{c1_forward.1} parent=0 // loop_pre_header
    _
  $region3: #{c1_forward.1} parent=0 // loop_header
    %s12 = sphi 0, %s16
    %p13 = scmp.ge.s32.totalorder %s12, 4
    %s19 = sphi 0, %s31
    %s20 = sphi 0, %s27
    %s21 = sphi 0, %s19
    %s22 = sphi 0, %s20
    %s23 = sphi 0, %s21
    %s24 = sphi 0, %s22
    %s36 = sphi 0, %s38
    %s39 = sphi 0, %s36
    %s40 = sphi 0, %s39
    %s56 = sphi 0, %s40
    %s68 = sphi 0, %s70
    %s71 = sphi 0, %s68
    %s72 = sphi 0, %s71
    %s88 = sphi 0, %s72
    %s92 = sphi 0, %s92
    %s94 = sphi 0, %s92
    %s95 = sphi 0, %s94
    %s109 = sphi 0, %s95
    %s113 = sphi 0, %s113
    %s115 = sphi 0, %s113
    %s116 = sphi 0, %s115
    %s130 = sphi 0, %s116
    %s134 = sphi 0, %s134
    %s136 = sphi 0, %s134
    %s137 = sphi 0, %s136
    %s151 = sphi 0, %s137
    %s155 = sphi 0, %s155
    %s157 = sphi 0, %s155
    %s158 = sphi 0, %s157
    %s172 = sphi 0, %s158
    %s180 = sphi 0, %s182
    %s183 = sphi 0, %s180
    %s184 = sphi 0, %s183
    %s200 = sphi 0, %s184
  $region4: #{c1_forward.1} parent=0 // loop_header_branch
    %15 = sbr.rel (%p13) target = $region8
  $region5: #{c1_forward.1} parent=0 // loop_body
    %s17 = ssub.s32 %s12, 1
    %s18 = ssub.s32 %s12, 2
    %s25 = sadd.s32 1, %s20
    %p26 = scmp.ge.s32.totalorder %s25, 1
    %s27 = scalar_select %p26, 0, %s25
    %s28 = sadd.s32 1, %s19
    %s29 = scalar_select %p26, %s28, %s19
    %p30 = scmp.ge.s32.totalorder %s29, 2
    %s31 = scalar_select %p30, 0, %s29
    %s32 = ssub.s32 %s19, %s31
    %s33 = ssub.s32 %s20, %s27
    %s34 = sor.u32 %s32, %s33
    %p35 = scmp.eq.s32.totalorder %s34, 0
    %s37 = sadd.s32 %s36, 1
    %s38 = scalar_select %p35, %s36, %s37
    %p41 = pneg %p35
    %p42 = scmp.eq.s32.totalorder %s12, 1
    %p43 = por %p41, %p42
    %p44 = scmp.ne.s32.totalorder %s36, %s39
    %p45 = scmp.eq.s32.totalorder %s12, 0
    %p46 = por %p44, %p45
    %p47 = scmp.ne.s32.totalorder %s36, %s39
    %p48 = scmp.eq.s32.totalorder %s17, 1
    %p49 = por %p47, %p48
    %p50 = scmp.ne.s32.totalorder %s39, %s40
    %p51 = scmp.eq.s32.totalorder %s17, 0
    %p52 = por %p50, %p51
    %p53 = scmp.ne.s32.totalorder %s39, %s40
    %p54 = scmp.eq.s32.totalorder %s18, 1
    %p55 = por %p53, %p54
    %p57 = scmp.ne.s32.totalorder %s40, %s56
    %p58 = scmp.eq.s32.totalorder %s18, 0
    %p59 = por %p57, %p58
    %s60 = sadd.s32 %s20, 1
    %s61 = smul.u32 %s60, 8
    %s62 = sadd.s32 %s27, 1
    %s63 = smul.u32 %s62, 8
    %s64 = ssub.s32 %s19, %s31
    %s65 = ssub.s32 %s61, %s63
    %s66 = sor.u32 %s64, %s65
    %p67 = scmp.eq.s32.totalorder %s66, 0
    %s69 = sadd.s32 %s68, 1
    %s70 = scalar_select %p67, %s68, %s69
    %p73 = pneg %p67
    %p74 = scmp.eq.s32.totalorder %s12, 1
    %p75 = por %p73, %p74
    %p76 = scmp.ne.s32.totalorder %s68, %s71
    %p77 = scmp.eq.s32.totalorder %s12, 0
    %p78 = por %p76, %p77
    %p79 = scmp.ne.s32.totalorder %s68, %s71
    %p80 = scmp.eq.s32.totalorder %s17, 1
    %p81 = por %p79, %p80
    %p82 = scmp.ne.s32.totalorder %s71, %s72
    %p83 = scmp.eq.s32.totalorder %s17, 0
    %p84 = por %p82, %p83
    %p85 = scmp.ne.s32.totalorder %s71, %s72
    %p86 = scmp.eq.s32.totalorder %s18, 1
    %p87 = por %p85, %p86
    %p89 = scmp.ne.s32.totalorder %s72, %s88
    %p90 = scmp.eq.s32.totalorder %s18, 0
    %p91 = por %p89, %p90
    %s93 = sadd.s32 %s92, 1
    %p96 = scmp.eq.s32.totalorder %s12, 1
    %p97 = scmp.ne.s32.totalorder %s92, %s94
    %p98 = scmp.eq.s32.totalorder %s12, 0
    %p99 = por %p97, %p98
    %p100 = scmp.ne.s32.totalorder %s92, %s94
    %p101 = scmp.eq.s32.totalorder %s17, 1
    %p102 = por %p100, %p101
    %p103 = scmp.ne.s32.totalorder %s94, %s95
    %p104 = scmp.eq.s32.totalorder %s17, 0
    %p105 = por %p103, %p104
    %p106 = scmp.ne.s32.totalorder %s94, %s95
    %p107 = scmp.eq.s32.totalorder %s18, 1
    %p108 = por %p106, %p107
    %p110 = scmp.ne.s32.totalorder %s95, %s109
    %p111 = scmp.eq.s32.totalorder %s18, 0
    %p112 = por %p110, %p111
    %s114 = sadd.s32 %s113, 1
    %p117 = scmp.eq.s32.totalorder %s12, 1
    %p118 = scmp.ne.s32.totalorder %s113, %s115
    %p119 = scmp.eq.s32.totalorder %s12, 0
    %p120 = por %p118, %p119
    %p121 = scmp.ne.s32.totalorder %s113, %s115
    %p122 = scmp.eq.s32.totalorder %s17, 1
    %p123 = por %p121, %p122
    %p124 = scmp.ne.s32.totalorder %s115, %s116
    %p125 = scmp.eq.s32.totalorder %s17, 0
    %p126 = por %p124, %p125
    %p127 = scmp.ne.s32.totalorder %s115, %s116
    %p128 = scmp.eq.s32.totalorder %s18, 1
    %p129 = por %p127, %p128
    %p131 = scmp.ne.s32.totalorder %s116, %s130
    %p132 = scmp.eq.s32.totalorder %s18, 0
    %p133 = por %p131, %p132
    %s135 = sadd.s32 %s134, 1
    %p138 = scmp.eq.s32.totalorder %s12, 1
    %p139 = scmp.ne.s32.totalorder %s134, %s136
    %p140 = scmp.eq.s32.totalorder %s12, 0
    %p141 = por %p139, %p140
    %p142 = scmp.ne.s32.totalorder %s134, %s136
    %p143 = scmp.eq.s32.totalorder %s17, 1
    %p144 = por %p142, %p143
    %p145 = scmp.ne.s32.totalorder %s136, %s137
    %p146 = scmp.eq.s32.totalorder %s17, 0
    %p147 = por %p145, %p146
    %p148 = scmp.ne.s32.totalorder %s136, %s137
    %p149 = scmp.eq.s32.totalorder %s18, 1
    %p150 = por %p148, %p149
    %p152 = scmp.ne.s32.totalorder %s137, %s151
    %p153 = scmp.eq.s32.totalorder %s18, 0
    %p154 = por %p152, %p153
    %s156 = sadd.s32 %s155, 1
    %p159 = scmp.eq.s32.totalorder %s12, 1
    %p160 = scmp.ne.s32.totalorder %s155, %s157
    %p161 = scmp.eq.s32.totalorder %s12, 0
    %p162 = por %p160, %p161
    %p163 = scmp.ne.s32.totalorder %s155, %s157
    %p164 = scmp.eq.s32.totalorder %s17, 1
    %p165 = por %p163, %p164
    %p166 = scmp.ne.s32.totalorder %s157, %s158
    %p167 = scmp.eq.s32.totalorder %s17, 0
    %p168 = por %p166, %p167
    %p169 = scmp.ne.s32.totalorder %s157, %s158
    %p170 = scmp.eq.s32.totalorder %s18, 1
    %p171 = por %p169, %p170
    %p173 = scmp.ne.s32.totalorder %s158, %s172
    %p174 = scmp.eq.s32.totalorder %s18, 0
    %p175 = por %p173, %p174
    %s176 = ssub.s32 %s19, %s31
    %s177 = ssub.s32 %s20, %s27
    %s178 = sor.u32 %s176, %s177
    %p179 = scmp.eq.s32.totalorder %s178, 0
    %s181 = sadd.s32 %s180, 1
    %s182 = scalar_select %p179, %s180, %s181
    %p185 = pneg %p179
    %p186 = scmp.eq.s32.totalorder %s12, 1
    %p187 = por %p185, %p186
    %p188 = scmp.ne.s32.totalorder %s180, %s183
    %p189 = scmp.eq.s32.totalorder %s12, 0
    %p190 = por %p188, %p189
    %p191 = scmp.ne.s32.totalorder %s180, %s183
    %p192 = scmp.eq.s32.totalorder %s17, 1
    %p193 = por %p191, %p192
    %p194 = scmp.ne.s32.totalorder %s183, %s184
    %p195 = scmp.eq.s32.totalorder %s17, 0
    %p196 = por %p194, %p195
    %p197 = scmp.ne.s32.totalorder %s183, %s184
    %p198 = scmp.eq.s32.totalorder %s18, 1
    %p199 = por %p197, %p198
    %p201 = scmp.ne.s32.totalorder %s184, %s200
    %p202 = scmp.eq.s32.totalorder %s18, 0
    %p203 = por %p201, %p202
    %p204 = scmp.le.s32.totalorder 1, %s12
    %p205 = scmp.lt.s32.totalorder %s12, 3
    %p206 = pnand %p204, %p205
    %p207 = pneg %p206
    // Predicated region
    $region9: #{c1_forward.1} parent=5 // pred_check
      _
    $region10: #{c1_forward.1} parent=5 // pred_check_branch
      %209 = sbr.rel (%p206) target = $region12
    $region11: #{c1_forward.1} parent=5 // pred_region
      %s210 = ssub.s32 %s12, 1
      // Predicated region
      $region13: #{c1_forward.1} parent=11 // pred_check
        %p211 = pneg %p105
      $region14: #{c1_forward.1} parent=11 // pred_check_branch
        %213 = sbr.rel (%p211) target = $region16
      $region15: #{c1_forward.1} parent=11 // pred_region
        _
      $region16: #{c1_forward.1} parent=11 // pred_fallthru
        _
      // Predicated region
      $region17: #{c1_forward.1} parent=11 // pred_check
        %p214 = pneg %p126
      $region18: #{c1_forward.1} parent=11 // pred_check_branch
        %216 = sbr.rel (%p214) target = $region20
      $region19: #{c1_forward.1} parent=11 // pred_region
        _
      $region20: #{c1_forward.1} parent=11 // pred_fallthru
        _
      // Predicated region
      $region21: #{c1_forward.1} parent=11 // pred_check
        %p217 = pneg %p147
      $region22: #{c1_forward.1} parent=11 // pred_check_branch
        %219 = sbr.rel (%p217) target = $region24
      $region23: #{c1_forward.1} parent=11 // pred_region
        _
      $region24: #{c1_forward.1} parent=11 // pred_fallthru
        _
      // Predicated region
      $region25: #{c1_forward.1} parent=11 // pred_check
        %p220 = pneg %p168
      $region26: #{c1_forward.1} parent=11 // pred_check_branch
        %222 = sbr.rel (%p220) target = $region28
      $region27: #{c1_forward.1} parent=11 // pred_region
        _
      $region28: #{c1_forward.1} parent=11 // pred_fallthru
        _
    $region12: #{c1_forward.1} parent=5 // pred_fallthru
      _
    %p223 = scmp.lt.s32.totalorder %s12, 2
    // Predicated region
    $region29: #{c1_forward.1} parent=5 // pred_check
      %p224 = pneg %p223
    $region30: #{c1_forward.1} parent=5 // pred_check_branch
      %226 = sbr.rel (%p224) target = $region32
    $region31: #{c1_forward.1} parent=5 // pred_region
      // Predicated region
      $region33: #{c1_forward.1} parent=31 // pred_check
        %p227 = pneg %p46
      $region34: #{c1_forward.1} parent=31 // pred_check_branch
        %229 = sbr.rel (%p227) target = $region36
      $region35: #{c1_forward.1} parent=31 // pred_region
        %s230 = smul.u32 16, %s20
        %s231 = ssub.s32 18, %s230
        %p232 = scmp.lt.s32.totalorder %s231, 16
        %s233 = scalar_select %p232, %s231, 16
        %s234 = smul.u32 4, %s233
        %s235 = smul.u32 %s234, 2
        %p236 = scmp.lt.s32.totalorder %s19, 1
        %s237 = scalar_select %p236, %s19, 1
        %p238 = scmp.lt.s32.totalorder %s230, 17
        %s239 = scalar_select %p238, %s230, 17
        %s240 = smul.addr %s239, 2
        %s241 = smul.addr %s237, 36
        %s242 = sadd.s32 %s240, %s241
        %s243 = smul.addr %s242, 4
        %s244 = scalar_lea.vmem %s0, %s243
        %s245 = smul.u32 16, %s20
        %s246 = ssub.s32 18, %s245
        %p247 = scmp.lt.s32.totalorder %s246, 16
        %s248 = scalar_select %p247, %s246, 16
        %s249 = smul.u32 4, %s248
        %s250 = smul.u32 %s249, 2
      $region36: #{c1_forward.1} parent=31 // pred_fallthru
        _
      // Predicated region
      $region37: #{c1_forward.1} parent=31 // pred_check
        %p251 = pneg %p78
      $region38: #{c1_forward.1} parent=31 // pred_check_branch
        %253 = sbr.rel (%p251) target = $region40
      $region39: #{c1_forward.1} parent=31 // pred_region
        %s254 = sadd.s32 %s20, 1
        %s255 = smul.u32 %s254, 8
        %s256 = smul.u32 2, %s255
        %p257 = scmp.lt.s32.totalorder %s19, 1
        %s258 = scalar_select %p257, %s19, 1
        %p259 = scmp.lt.s32.totalorder %s256, 17
        %s260 = scalar_select %p259, %s256, 17
        %s261 = smul.addr %s260, 2
        %s262 = smul.addr %s258, 36
        %s263 = sadd.s32 %s261, %s262
        %s264 = smul.addr %s263, 4
        %s265 = scalar_lea.vmem %s1, %s264
        %s266 = sadd.s32 %s20, 1
        %s267 = smul.u32 %s266, 8
        %s268 = smul.u32 2, %s267
      $region40: #{c1_forward.1} parent=31 // pred_fallthru
        _
    $region32: #{c1_forward.1} parent=5 // pred_fallthru
      _
    %p269 = scmp.le.s32.totalorder 1, %s12
    %p270 = scmp.lt.s32.totalorder %s12, 3
    %p271 = pnand %p269, %p270
    %p272 = pneg %p271
    // Predicated region
    $region41: #{c1_forward.1} parent=5 // pred_check
      _
    $region42: #{c1_forward.1} parent=5 // pred_check_branch
      %274 = sbr.rel (%p271) target = $region44
    $region43: #{c1_forward.1} parent=5 // pred_region
      %s275 = ssub.s32 %s12, 1
      %s276 = smul.u32 16, %s22
      %s277 = ssub.s32 18, %s276
      %p278 = scmp.lt.s32.totalorder %s277, 16
      %s279 = scalar_select %p278, %s277, 16
      %s280 = smul.u32 4, %s279
      %s281 = smul.u32 %s280, 2
      %p282 = scmp.lt.s32.totalorder %s21, 1
      %s283 = scalar_select %p282, %s21, 1
      %p284 = scmp.lt.s32.totalorder %s276, 17
      %s285 = scalar_select %p284, %s276, 17
      %s286 = smul.addr %s285, 2
      %s287 = smul.addr %s283, 36
      %s288 = sadd.s32 %s286, %s287
      %s289 = smul.addr %s288, 4
      %s290 = scalar_lea.vmem %s0, %s289
      %p291 = pneg %p52
      %p292 = pneg %p49
      %s293 = sadd.s32 %s22, 1
      %s294 = smul.u32 %s293, 8
      %s295 = smul.u32 2, %s294
      %p296 = scmp.lt.s32.totalorder %s21, 1
      %s297 = scalar_select %p296, %s21, 1
      %p298 = scmp.lt.s32.totalorder %s295, 17
      %s299 = scalar_select %p298, %s295, 17
      %s300 = smul.addr %s299, 2
      %s301 = smul.addr %s297, 36
      %s302 = sadd.s32 %s300, %s301
      %s303 = smul.addr %s302, 4
      %s304 = scalar_lea.vmem %s1, %s303
      %p305 = pneg %p84
      %p306 = pneg %p81
      %p307 = pneg %p105
      %p308 = pneg %p102
      %p309 = pneg %p126
      %p310 = pneg %p123
      %p311 = pneg %p147
      %p312 = pneg %p144
      %p313 = pneg %p168
      %p314 = pneg %p165
      %p315 = pneg %p196
      %p316 = pneg %p193
      %s317 = smul.u32 16, %s22
      %p318 = scmp.lt.s32.totalorder %s21, 1
      %s319 = scalar_select %p318, %s21, 1
      %p320 = scmp.lt.s32.totalorder %s317, 15
      %s321 = scalar_select %p320, %s317, 15
      %s322 = smul.addr %s321, 2
      %s323 = smul.addr %s319, 32
      %s324 = sadd.s32 %s322, %s323
      %s325 = smul.addr %s324, 8
      %s326 = scalar_lea.vmem %s6, %s325
      %s327 = smul.u32 16, %s22
      %s328 = ssub.s32 18, %s327
      %p329 = scmp.lt.s32.totalorder %s328, 16
      %s330 = scalar_select %p329, %s328, 16
      %s331 = smul.u32 4, %s330
      %s332 = smul.u32 %s331, 2
      %p333 = scmp.lt.s32.totalorder %s21, 1
      %s334 = scalar_select %p333, %s21, 1
      %p335 = scmp.lt.s32.totalorder %s327, 17
      %s336 = scalar_select %p335, %s327, 17
      %s337 = smul.addr %s336, 2
      %s338 = smul.addr %s334, 36
      %s339 = sadd.s32 %s337, %s338
      %s340 = smul.addr %s339, 4
      %s341 = scalar_lea.vmem %s0, %s340
      %s342 = smul.u32 16, %s22
      %s343 = ssub.s32 18, %s342
      %p344 = scmp.lt.s32.totalorder %s343, 16
      %s345 = scalar_select %p344, %s343, 16
      %s346 = smul.u32 4, %s345
      %s347 = smul.u32 %s346, 2
      %s348 = sadd.s32 %s22, 1
      %s349 = smul.u32 %s348, 8
      %s350 = smul.u32 2, %s349
      %p351 = scmp.lt.s32.totalorder %s21, 1
      %s352 = scalar_select %p351, %s21, 1
      %p353 = scmp.lt.s32.totalorder %s350, 17
      %s354 = scalar_select %p353, %s350, 17
      %s355 = smul.addr %s354, 2
      %s356 = smul.addr %s352, 36
      %s357 = sadd.s32 %s355, %s356
      %s358 = smul.addr %s357, 4
      %s359 = scalar_lea.vmem %s1, %s358
      %s360 = sadd.s32 %s22, 1
      %s361 = smul.u32 %s360, 8
      %s362 = smul.u32 2, %s361
      %s363 = smul.u32 16, %s22
      %p364 = scmp.lt.s32.totalorder %s21, 1
      %s365 = scalar_select %p364, %s21, 1
      %p366 = scmp.lt.s32.totalorder %s363, 15
      %s367 = scalar_select %p366, %s363, 15
      %s368 = smul.addr %s367, 2
      %s369 = smul.addr %s365, 32
      %s370 = sadd.s32 %s368, %s369
      %s371 = smul.addr %s370, 8
      %s372 = scalar_lea.vmem %s6, %s371
      %s373 = smul.u32 16, %s22
      %s374 = smul.u32 %s22, 16
      %s375 = ssub.s32 %s374, 1
      %v376 = vld [vmem:[%s341] sm:$0xf]
      %v377 = vld [vmem:[%s341 + $0x4] sm:$0xf]
      %v378 = vld [vmem:[%s341 + $0x8] sm:$0xf]
      %v379 = vld [vmem:[%s341 + $0xc] sm:$0xf]
      %v380 = vld [vmem:[%s341 + $0x10] sm:$0xf]
      %v381 = vld [vmem:[%s341 + $0x14] sm:$0xf]
      %v382 = vld [vmem:[%s341 + $0x18] sm:$0xf]
      %v383 = vld [vmem:[%s341 + $0x1c] sm:$0xf]
      %v384 = vld [vmem:[%s341 + $0x20] sm:$0xf]
      %v385 = vld [vmem:[%s341 + $0x24] sm:$0xf]
      %v386 = vld [vmem:[%s341 + $0x28] sm:$0xf]
      %v387 = vld [vmem:[%s341 + $0x2c] sm:$0xf]
      %v388 = vld [vmem:[%s341 + $0x30] sm:$0xf]
      %v389 = vld [vmem:[%s341 + $0x34] sm:$0xf]
      %v390 = vld [vmem:[%s341 + $0x38] sm:$0xf]
      %v391 = vld [vmem:[%s341 + $0x3c] sm:$0xf]
      %v392 = vld [vmem:[%s341 + $0x40] sm:$0xf]
      %v393 = vld [vmem:[%s341 + $0x44] sm:$0xf]
      %v394 = vld [vmem:[%s341 + $0x48] sm:$0xf]
      %v395 = vld [vmem:[%s341 + $0x4c] sm:$0xf]
      %v396 = vld [vmem:[%s341 + $0x50] sm:$0xf]
      %v397 = vld [vmem:[%s341 + $0x54] sm:$0xf]
      %v398 = vld [vmem:[%s341 + $0x58] sm:$0xf]
      %v399 = vld [vmem:[%s341 + $0x5c] sm:$0xf]
      %v400 = vld [vmem:[%s341 + $0x60] sm:$0xf]
      %v401 = vld [vmem:[%s341 + $0x64] sm:$0xf]
      %v402 = vld [vmem:[%s341 + $0x68] sm:$0xf]
      %v403 = vld [vmem:[%s341 + $0x6c] sm:$0xf]
      %v404 = vld [vmem:[%s341 + $0x70] sm:$0xf]
      %v405 = vld [vmem:[%s341 + $0x74] sm:$0xf]
      %v406 = vld [vmem:[%s341 + $0x78] sm:$0xf]
      %v407 = vld [vmem:[%s341 + $0x7c] sm:$0xf]
      %408 = vst [vmem:[#allocation2] sm:$0xf] %v376
      %409 = vst [vmem:[#allocation2 + $0x4] sm:$0xf] %v377
      %410 = vst [vmem:[#allocation2 + $0x8] sm:$0xf] %v378
      %411 = vst [vmem:[#allocation2 + $0xc] sm:$0xf] %v379
      %412 = vst [vmem:[#allocation2 + $0x10] sm:$0xf] %v380
      %413 = vst [vmem:[#allocation2 + $0x14] sm:$0xf] %v381
      %414 = vst [vmem:[#allocation2 + $0x18] sm:$0xf] %v382
      %415 = vst [vmem:[#allocation2 + $0x1c] sm:$0xf] %v383
      %416 = vst [vmem:[#allocation2 + $0x20] sm:$0xf] %v384
      %417 = vst [vmem:[#allocation2 + $0x24] sm:$0xf] %v385
      %418 = vst [vmem:[#allocation2 + $0x28] sm:$0xf] %v386
      %419 = vst [vmem:[#allocation2 + $0x2c] sm:$0xf] %v387
      %420 = vst [vmem:[#allocation2 + $0x30] sm:$0xf] %v388
      %421 = vst [vmem:[#allocation2 + $0x34] sm:$0xf] %v389
      %422 = vst [vmem:[#allocation2 + $0x38] sm:$0xf] %v390
      %423 = vst [vmem:[#allocation2 + $0x3c] sm:$0xf] %v391
      %424 = vst [vmem:[#allocation2 + $0x40] sm:$0xf] %v392
      %425 = vst [vmem:[#allocation2 + $0x44] sm:$0xf] %v393
      %426 = vst [vmem:[#allocation2 + $0x48] sm:$0xf] %v394
      %427 = vst [vmem:[#allocation2 + $0x4c] sm:$0xf] %v395
      %428 = vst [vmem:[#allocation2 + $0x50] sm:$0xf] %v396
      %429 = vst [vmem:[#allocation2 + $0x54] sm:$0xf] %v397
      %430 = vst [vmem:[#allocation2 + $0x58] sm:$0xf] %v398
      %431 = vst [vmem:[#allocation2 + $0x5c] sm:$0xf] %v399
      %432 = vst [vmem:[#allocation2 + $0x60] sm:$0xf] %v400
      %433 = vst [vmem:[#allocation2 + $0x64] sm:$0xf] %v401
      %434 = vst [vmem:[#allocation2 + $0x68] sm:$0xf] %v402
      %435 = vst [vmem:[#allocation2 + $0x6c] sm:$0xf] %v403
      %436 = vst [vmem:[#allocation2 + $0x70] sm:$0xf] %v404
      %437 = vst [vmem:[#allocation2 + $0x74] sm:$0xf] %v405
      %438 = vst [vmem:[#allocation2 + $0x78] sm:$0xf] %v406
      %439 = vst [vmem:[#allocation2 + $0x7c] sm:$0xf] %v407
      %v440 = vld [vmem:[%s359] sm:$0xf]
      %v441 = vld [vmem:[%s359 + $0x4] sm:$0xf]
      %v442 = vld [vmem:[%s359 + $0x8] sm:$0xf]
      %v443 = vld [vmem:[%s359 + $0xc] sm:$0xf]
      %s444 = scalar_lea.vmem [#allocation2], 128
      %445 = vst [vmem:[%s444] sm:$0xf] %v440
      %446 = vst [vmem:[%s444 + $0x4] sm:$0xf] %v441
      %447 = vst [vmem:[%s444 + $0x8] sm:$0xf] %v442
      %448 = vst [vmem:[%s444 + $0xc] sm:$0xf] %v443
      %v449 = vld [vmem:[#allocation2] sm:$0xf]
      %v450 = vld [vmem:[#allocation2 + $0x4] sm:$0xf]
      %v451 = vld [vmem:[#allocation2 + $0x8] sm:$0xf]
      %v452 = vld [vmem:[#allocation2 + $0xc] sm:$0xf]
      %v453 = vld [vmem:[#allocation2 + $0x10] sm:$0xf]
      %v454 = vld [vmem:[#allocation2 + $0x14] sm:$0xf]
      %v455 = vld [vmem:[#allocation2 + $0x18] sm:$0xf]
      %v456 = vld [vmem:[#allocation2 + $0x1c] sm:$0xf]
      %v457 = vld [vmem:[#allocation2 + $0x20] sm:$0xf]
      %v458 = vld [vmem:[#allocation2 + $0x24] sm:$0xf]
      %v459 = vld [vmem:[#allocation2 + $0x28] sm:$0xf]
      %v460 = vld [vmem:[#allocation2 + $0x2c] sm:$0xf]
      %v461 = vld [vmem:[#allocation2 + $0x30] sm:$0xf]
      %v462 = vld [vmem:[#allocation2 + $0x34] sm:$0xf]
      %v463 = vld [vmem:[#allocation2 + $0x38] sm:$0xf]
      %v464 = vld [vmem:[#allocation2 + $0x3c] sm:$0xf]
      %v465 = vld [vmem:[#allocation2 + $0x40] sm:$0xf]
      %v466 = vld [vmem:[#allocation2 + $0x44] sm:$0xf]
      %v467 = vld [vmem:[#allocation2 + $0x48] sm:$0xf]
      %v468 = vld [vmem:[#allocation2 + $0x4c] sm:$0xf]
      %v469 = vld [vmem:[#allocation2 + $0x50] sm:$0xf]
      %v470 = vld [vmem:[#allocation2 + $0x54] sm:$0xf]
      %v471 = vld [vmem:[#allocation2 + $0x58] sm:$0xf]
      %v472 = vld [vmem:[#allocation2 + $0x5c] sm:$0xf]
      %v473 = vld [vmem:[#allocation2 + $0x60] sm:$0xf]
      %v474 = vld [vmem:[#allocation2 + $0x64] sm:$0xf]
      %v475 = vld [vmem:[#allocation2 + $0x68] sm:$0xf]
      %v476 = vld [vmem:[#allocation2 + $0x6c] sm:$0xf]
      %v477 = vld [vmem:[#allocation2 + $0x70] sm:$0xf]
      %v478 = vld [vmem:[#allocation2 + $0x74] sm:$0xf]
      %v479 = vld [vmem:[#allocation2 + $0x78] sm:$0xf]
      %v480 = vld [vmem:[#allocation2 + $0x7c] sm:$0xf]
      %v481 = vld [vmem:[#allocation2 + $0x80] sm:$0xf]
      %v482 = vld [vmem:[#allocation2 + $0x84] sm:$0xf]
      %v483 = vld [vmem:[#allocation2 + $0x88] sm:$0xf]
      %v484 = vld [vmem:[#allocation2 + $0x8c] sm:$0xf]
      %v485 = vld [vmem:[%s2] sm:$0xf]
      %v486 = vld [vmem:[%s2 + $0x4] sm:$0xf]
      %v487 = vld [vmem:[%s2 + $0x8] sm:$0xf]
      %v488 = vld [vmem:[%s2 + $0xc] sm:$0xf]
      %v489 = vld [vmem:[%s2 + $0x10] sm:$0xf]
      %v490 = vld [vmem:[%s2 + $0x14] sm:$0xf]
      %v491 = vld [vmem:[%s2 + $0x18] sm:$0xf]
      %v492 = vld [vmem:[%s2 + $0x1c] sm:$0xf]
      %v493 = vld [vmem:[%s2 + $0x20] sm:$0xf]
      %v494 = vld [vmem:[%s2 + $0x24] sm:$0xf]
      %v495 = vld [vmem:[%s2 + $0x28] sm:$0xf]
      %v496 = vld [vmem:[%s2 + $0x2c] sm:$0xf]
      %v497 = vld [vmem:[%s2 + $0x30] sm:$0xf]
      %v498 = vld [vmem:[%s2 + $0x34] sm:$0xf]
      %v499 = vld [vmem:[%s2 + $0x38] sm:$0xf]
      %v500 = vld [vmem:[%s2 + $0x3c] sm:$0xf]
      %v501 = vld [vmem:[%s3] sm:$0x1]
      %v503 = vperm.slane %v501, 0
      %v541 = vunpack.c.l.b16 %v449
      %v542 = vunpack.c.l.b16 %v450
      %v543 = vunpack.c.l.b16 %v451
      %v544 = vunpack.c.l.b16 %v452
      %v545 = vunpack.c.l.b16 %v453
      %v546 = vunpack.c.l.b16 %v454
      %v547 = vunpack.c.l.b16 %v455
      %v548 = vunpack.c.l.b16 %v456
      %v549 = vunpack.c.l.b16 %v457
      %v550 = vunpack.c.l.b16 %v458
      %v551 = vunpack.c.l.b16 %v459
      %v552 = vunpack.c.l.b16 %v460
      %v553 = vunpack.c.l.b16 %v461
      %v554 = vunpack.c.l.b16 %v462
      %v555 = vunpack.c.l.b16 %v463
      %v556 = vunpack.c.l.b16 %v464
      %v557 = vunpack.c.l.b16 %v465
      %v558 = vunpack.c.l.b16 %v466
      %v559 = vunpack.c.l.b16 %v467
      %v560 = vunpack.c.l.b16 %v468
      %v561 = vunpack.c.l.b16 %v469
      %v562 = vunpack.c.l.b16 %v470
      %v563 = vunpack.c.l.b16 %v471
      %v564 = vunpack.c.l.b16 %v472
      %v565 = vunpack.c.l.b16 %v473
      %v566 = vunpack.c.l.b16 %v474
      %v567 = vunpack.c.l.b16 %v475
      %v568 = vunpack.c.l.b16 %v476
      %v569 = vunpack.c.l.b16 %v477
      %v570 = vunpack.c.l.b16 %v478
      %v571 = vunpack.c.l.b16 %v479
      %v572 = vunpack.c.l.b16 %v480
      %v573 = vunpack.c.l.b16 %v481
      %v574 = vunpack.c.l.b16 %v482
      %v575 = vunpack.c.l.b16 %v483
      %v576 = vunpack.c.l.b16 %v484
      %v577 = vpack.c.b16 %v542, %v541
      %v578 = vpack.c.b16 %v544, %v543
      %v579 = vpack.c.b16 %v546, %v545
      %v580 = vpack.c.b16 %v548, %v547
      %v581 = vpack.c.b16 %v550, %v549
      %v582 = vpack.c.b16 %v552, %v551
      %v583 = vpack.c.b16 %v554, %v553
      %v584 = vpack.c.b16 %v556, %v555
      %v585 = vpack.c.b16 %v558, %v557
      %v586 = vpack.c.b16 %v560, %v559
      %v587 = vpack.c.b16 %v562, %v561
      %v588 = vpack.c.b16 %v564, %v563
      %v589 = vpack.c.b16 %v566, %v565
      %v590 = vpack.c.b16 %v568, %v567
      %v591 = vpack.c.b16 %v570, %v569
      %v592 = vpack.c.b16 %v572, %v571
      %v593 = vpack.c.b16 %v574, %v573
      %v594 = vpack.c.b16 %v576, %v575
      %v629 = vunpack.c.l.b16 %v485
      %v630 = vunpack.c.l.b16 %v486
      %v631 = vunpack.c.l.b16 %v487
      %v632 = vunpack.c.l.b16 %v488
      %v633 = vunpack.c.l.b16 %v489
      %v634 = vunpack.c.l.b16 %v490
      %v635 = vunpack.c.l.b16 %v491
      %v636 = vunpack.c.l.b16 %v492
      %v637 = vunpack.c.l.b16 %v493
      %v638 = vunpack.c.l.b16 %v494
      %v639 = vunpack.c.l.b16 %v495
      %v640 = vunpack.c.l.b16 %v496
      %v641 = vunpack.c.l.b16 %v497
      %v642 = vunpack.c.l.b16 %v498
      %v643 = vunpack.c.l.b16 %v499
      %v644 = vunpack.c.l.b16 %v500
      %v645 = vpack.c.b16 %v630, %v629
      %v646 = vpack.c.b16 %v632, %v631
      %v647 = vpack.c.b16 %v634, %v633
      %v648 = vpack.c.b16 %v636, %v635
      %v649 = vpack.c.b16 %v638, %v637
      %v650 = vpack.c.b16 %v640, %v639
      %v651 = vpack.c.b16 %v642, %v641
      %v652 = vpack.c.b16 %v644, %v643
      %661 = vmatpush.bf16.msra.mxu0 %v652
      %662 = vmatpush.bf16.msra.mxu0 %v651
      %663 = vmatpush.bf16.msra.mxu0 %v650
      %664 = vmatpush.bf16.msra.mxu0 %v649
      %665 = vmatpush.bf16.msra.mxu0 %v648
      %666 = vmatpush.bf16.msra.mxu0 %v647
      %667 = vmatpush.bf16.msra.mxu0 %v646
      %668 = vmatpush.bf16.msra.mxu0 %v645
      %669 = vmatmul.bf16.gmra.mxu0 %v577
      %v670 = vpop.f32.mrf.mxu0
      %v671 = vadd.f32 %v503, %v670
      %v672 = vpop.f32.mrf.mxu0
      %v673 = vadd.f32 %v503, %v672
      %674 = vmatmul.bf16.gmra.mxu0 %v578
      %v675 = vpop.f32.mrf.mxu0
      %v676 = vadd.f32 %v503, %v675
      %v677 = vpop.f32.mrf.mxu0
      %v678 = vadd.f32 %v503, %v677
      %679 = vmatmul.bf16.gmra.mxu0 %v579
      %v680 = vpop.f32.mrf.mxu0
      %v681 = vadd.f32 %v503, %v680
      %v682 = vpop.f32.mrf.mxu0
      %v683 = vadd.f32 %v503, %v682
      %684 = vmatmul.bf16.gmra.mxu0 %v580
      %v685 = vpop.f32.mrf.mxu0
      %v686 = vadd.f32 %v503, %v685
      %v687 = vpop.f32.mrf.mxu0
      %v688 = vadd.f32 %v503, %v687
      %689 = vmatmul.bf16.gmra.mxu0 %v581
      %v690 = vpop.f32.mrf.mxu0
      %v691 = vadd.f32 %v503, %v690
      %v692 = vpop.f32.mrf.mxu0
      %v693 = vadd.f32 %v503, %v692
      %694 = vmatmul.bf16.gmra.mxu0 %v582
      %v695 = vpop.f32.mrf.mxu0
      %v696 = vadd.f32 %v503, %v695
      %v697 = vpop.f32.mrf.mxu0
      %v698 = vadd.f32 %v503, %v697
      %699 = vmatmul.bf16.gmra.mxu0 %v583
      %v700 = vpop.f32.mrf.mxu0
      %v701 = vadd.f32 %v503, %v700
      %v702 = vpop.f32.mrf.mxu0
      %v703 = vadd.f32 %v503, %v702
      %704 = vmatmul.bf16.gmra.mxu0 %v584
      %v705 = vpop.f32.mrf.mxu0
      %v706 = vadd.f32 %v503, %v705
      %v707 = vpop.f32.mrf.mxu0
      %v708 = vadd.f32 %v503, %v707
      %709 = vmatmul.bf16.gmra.mxu0 %v585
      %v710 = vpop.f32.mrf.mxu0
      %v711 = vadd.f32 %v503, %v710
      %v712 = vpop.f32.mrf.mxu0
      %v713 = vadd.f32 %v503, %v712
      %714 = vmatmul.bf16.gmra.mxu0 %v586
      %v715 = vpop.f32.mrf.mxu0
      %v716 = vadd.f32 %v503, %v715
      %v717 = vpop.f32.mrf.mxu0
      %v718 = vadd.f32 %v503, %v717
      %719 = vmatmul.bf16.gmra.mxu0 %v587
      %v720 = vpop.f32.mrf.mxu0
      %v721 = vadd.f32 %v503, %v720
      %v722 = vpop.f32.mrf.mxu0
      %v723 = vadd.f32 %v503, %v722
      %724 = vmatmul.bf16.gmra.mxu0 %v588
      %v725 = vpop.f32.mrf.mxu0
      %v726 = vadd.f32 %v503, %v725
      %v727 = vpop.f32.mrf.mxu0
      %v728 = vadd.f32 %v503, %v727
      %729 = vmatmul.bf16.gmra.mxu0 %v589
      %v730 = vpop.f32.mrf.mxu0
      %v731 = vadd.f32 %v503, %v730
      %v732 = vpop.f32.mrf.mxu0
      %v733 = vadd.f32 %v503, %v732
      %734 = vmatmul.bf16.gmra.mxu0 %v590
      %v735 = vpop.f32.mrf.mxu0
      %v736 = vadd.f32 %v503, %v735
      %v737 = vpop.f32.mrf.mxu0
      %v738 = vadd.f32 %v503, %v737
      %739 = vmatmul.bf16.gmra.mxu0 %v591
      %v740 = vpop.f32.mrf.mxu0
      %v741 = vadd.f32 %v503, %v740
      %v742 = vpop.f32.mrf.mxu0
      %v743 = vadd.f32 %v503, %v742
      %744 = vmatmul.bf16.gmra.mxu0 %v592
      %v745 = vpop.f32.mrf.mxu0
      %v746 = vadd.f32 %v503, %v745
      %v747 = vpop.f32.mrf.mxu0
      %v748 = vadd.f32 %v503, %v747
      %749 = vmatmul.bf16.gmra.mxu0 %v593
      %v750 = vpop.f32.mrf.mxu0
      %v751 = vadd.f32 %v503, %v750
      %v752 = vpop.f32.mrf.mxu0
      %v753 = vadd.f32 %v503, %v752
      %754 = vmatmul.bf16.gmra.mxu0 %v594
      %v755 = vpop.f32.mrf.mxu0
      %v756 = vadd.f32 %v503, %v755
      %v757 = vpop.f32.mrf.mxu0
      %v758 = vadd.f32 %v503, %v757
      %759 = vdwg.mxu0
      %v760 = vxor.u32 %v671, 2147483648
      %v761 = vxor.u32 %v673, 2147483648
      %v762 = vxor.u32 %v676, 2147483648
      %v763 = vxor.u32 %v678, 2147483648
      %v764 = vxor.u32 %v681, 2147483648
      %v765 = vxor.u32 %v683, 2147483648
      %v766 = vxor.u32 %v686, 2147483648
      %v767 = vxor.u32 %v688, 2147483648
      %v768 = vxor.u32 %v691, 2147483648
      %v769 = vxor.u32 %v693, 2147483648
      %v770 = vxor.u32 %v696, 2147483648
      %v771 = vxor.u32 %v698, 2147483648
      %v772 = vxor.u32 %v701, 2147483648
      %v773 = vxor.u32 %v703, 2147483648
      %v774 = vxor.u32 %v706, 2147483648
      %v775 = vxor.u32 %v708, 2147483648
      %v776 = vxor.u32 %v711, 2147483648
      %v777 = vxor.u32 %v713, 2147483648
      %v778 = vxor.u32 %v716, 2147483648
      %v779 = vxor.u32 %v718, 2147483648
      %v780 = vxor.u32 %v721, 2147483648
      %v781 = vxor.u32 %v723, 2147483648
      %v782 = vxor.u32 %v726, 2147483648
      %v783 = vxor.u32 %v728, 2147483648
      %v784 = vxor.u32 %v731, 2147483648
      %v785 = vxor.u32 %v733, 2147483648
      %v786 = vxor.u32 %v736, 2147483648
      %v787 = vxor.u32 %v738, 2147483648
      %v788 = vxor.u32 %v741, 2147483648
      %v789 = vxor.u32 %v743, 2147483648
      %v790 = vxor.u32 %v746, 2147483648
      %v791 = vxor.u32 %v748, 2147483648
      %v792 = vxor.u32 %v751, 2147483648
      %v793 = vxor.u32 %v753, 2147483648
      %v794 = vxor.u32 %v756, 2147483648
      %v795 = vxor.u32 %v758, 2147483648
      %v796 = vmul.f32 %v760, 1.442695
      %v797 = vpow.pop %v796
      %v798 = vmul.f32 %v761, 1.442695
      %v799 = vpow.pop %v798
      %v800 = vmul.f32 %v762, 1.442695
      %v801 = vpow.pop %v800
      %v802 = vmul.f32 %v763, 1.442695
      %v803 = vpow.pop %v802
      %v804 = vmul.f32 %v764, 1.442695
      %v805 = vpow.pop %v804
      %v806 = vmul.f32 %v765, 1.442695
      %v807 = vpow.pop %v806
      %v808 = vmul.f32 %v766, 1.442695
      %v809 = vpow.pop %v808
      %v810 = vmul.f32 %v767, 1.442695
      %v811 = vpow.pop %v810
      %v812 = vmul.f32 %v768, 1.442695
      %v813 = vpow.pop %v812
      %v814 = vmul.f32 %v769, 1.442695
      %v815 = vpow.pop %v814
      %v816 = vmul.f32 %v770, 1.442695
      %v817 = vpow.pop %v816
      %v818 = vmul.f32 %v771, 1.442695
      %v819 = vpow.pop %v818
      %v820 = vmul.f32 %v772, 1.442695
      %v821 = vpow.pop %v820
      %v822 = vmul.f32 %v773, 1.442695
      %v823 = vpow.pop %v822
      %v824 = vmul.f32 %v774, 1.442695
      %v825 = vpow.pop %v824
      %v826 = vmul.f32 %v775, 1.442695
      %v827 = vpow.pop %v826
      %v828 = vmul.f32 %v776, 1.442695
      %v829 = vpow.pop %v828
      %v830 = vmul.f32 %v777, 1.442695
      %v831 = vpow.pop %v830
      %v832 = vmul.f32 %v778, 1.442695
      %v833 = vpow.pop %v832
      %v834 = vmul.f32 %v779, 1.442695
      %v835 = vpow.pop %v834
      %v836 = vmul.f32 %v780, 1.442695
      %v837 = vpow.pop %v836
      %v838 = vmul.f32 %v781, 1.442695
      %v839 = vpow.pop %v838
      %v840 = vmul.f32 %v782, 1.442695
      %v841 = vpow.pop %v840
      %v842 = vmul.f32 %v783, 1.442695
      %v843 = vpow.pop %v842
      %v844 = vmul.f32 %v784, 1.442695
      %v845 = vpow.pop %v844
      %v846 = vmul.f32 %v785, 1.442695
      %v847 = vpow.pop %v846
      %v848 = vmul.f32 %v786, 1.442695
      %v849 = vpow.pop %v848
      %v850 = vmul.f32 %v787, 1.442695
      %v851 = vpow.pop %v850
      %v852 = vmul.f32 %v788, 1.442695
      %v853 = vpow.pop %v852
      %v854 = vmul.f32 %v789, 1.442695
      %v855 = vpow.pop %v854
      %v856 = vmul.f32 %v790, 1.442695
      %v857 = vpow.pop %v856
      %v858 = vmul.f32 %v791, 1.442695
      %v859 = vpow.pop %v858
      %v860 = vmul.f32 %v792, 1.442695
      %v861 = vpow.pop %v860
      %v862 = vmul.f32 %v793, 1.442695
      %v863 = vpow.pop %v862
      %v864 = vmul.f32 %v794, 1.442695
      %v865 = vpow.pop %v864
      %v866 = vmul.f32 %v795, 1.442695
      %v867 = vpow.pop %v866
      %v868 = vadd.f32 %v797, 1.0
      %v869 = vadd.f32 %v799, 1.0
      %v870 = vadd.f32 %v801, 1.0
      %v871 = vadd.f32 %v803, 1.0
      %v872 = vadd.f32 %v805, 1.0
      %v873 = vadd.f32 %v807, 1.0
      %v874 = vadd.f32 %v809, 1.0
      %v875 = vadd.f32 %v811, 1.0
      %v876 = vadd.f32 %v813, 1.0
      %v877 = vadd.f32 %v815, 1.0
      %v878 = vadd.f32 %v817, 1.0
      %v879 = vadd.f32 %v819, 1.0
      %v880 = vadd.f32 %v821, 1.0
      %v881 = vadd.f32 %v823, 1.0
      %v882 = vadd.f32 %v825, 1.0
      %v883 = vadd.f32 %v827, 1.0
      %v884 = vadd.f32 %v829, 1.0
      %v885 = vadd.f32 %v831, 1.0
      %v886 = vadd.f32 %v833, 1.0
      %v887 = vadd.f32 %v835, 1.0
      %v888 = vadd.f32 %v837, 1.0
      %v889 = vadd.f32 %v839, 1.0
      %v890 = vadd.f32 %v841, 1.0
      %v891 = vadd.f32 %v843, 1.0
      %v892 = vadd.f32 %v845, 1.0
      %v893 = vadd.f32 %v847, 1.0
      %v894 = vadd.f32 %v849, 1.0
      %v895 = vadd.f32 %v851, 1.0
      %v896 = vadd.f32 %v853, 1.0
      %v897 = vadd.f32 %v855, 1.0
      %v898 = vadd.f32 %v857, 1.0
      %v899 = vadd.f32 %v859, 1.0
      %v900 = vadd.f32 %v861, 1.0
      %v901 = vadd.f32 %v863, 1.0
      %v902 = vadd.f32 %v865, 1.0
      %v903 = vadd.f32 %v867, 1.0
      %v904 = vrcp.pop %v868
      %v905 = vmul.f32 %v868, %v904
      %v906 = vsub.f32 1.0, %v905
      %v907 = vmul.f32 %v904, %v906
      %v908 = vadd.f32 %v904, %v907
      %vm909 = vweird.f32 %v868
      %vm910 = vweird.f32 %v904
      %vm911 = vmor %vm909, %vm910
      %v912 = vsel %vm911, %v904, %v908
      %v913 = vand.u32 2147483647, %v868
      %vm914 = vcmp.eq.f32.partialorder %v913, 8.507059e+37
      %v915 = vand.u32 %v868, 2147483648
      %v916 = vor.u32 1.1754944e-38, %v915
      %v917 = vsel %vm914, %v916, %v912
      %v918 = vmul.f32 1.0, %v917
      %v919 = vrcp.pop %v869
      %v920 = vmul.f32 %v869, %v919
      %v921 = vsub.f32 1.0, %v920
      %v922 = vmul.f32 %v919, %v921
      %v923 = vadd.f32 %v919, %v922
      %vm924 = vweird.f32 %v869
      %vm925 = vweird.f32 %v919
      %vm926 = vmor %vm924, %vm925
      %v927 = vsel %vm926, %v919, %v923
      %v928 = vand.u32 2147483647, %v869
      %vm929 = vcmp.eq.f32.partialorder %v928, 8.507059e+37
      %v930 = vand.u32 %v869, 2147483648
      %v931 = vor.u32 1.1754944e-38, %v930
      %v932 = vsel %vm929, %v931, %v927
      %v933 = vmul.f32 1.0, %v932
      %v934 = vrcp.pop %v870
      %v935 = vmul.f32 %v870, %v934
      %v936 = vsub.f32 1.0, %v935
      %v937 = vmul.f32 %v934, %v936
      %v938 = vadd.f32 %v934, %v937
      %vm939 = vweird.f32 %v870
      %vm940 = vweird.f32 %v934
      %vm941 = vmor %vm939, %vm940
      %v942 = vsel %vm941, %v934, %v938
      %v943 = vand.u32 2147483647, %v870
      %vm944 = vcmp.eq.f32.partialorder %v943, 8.507059e+37
      %v945 = vand.u32 %v870, 2147483648
      %v946 = vor.u32 1.1754944e-38, %v945
      %v947 = vsel %vm944, %v946, %v942
      %v948 = vmul.f32 1.0, %v947
      %v949 = vrcp.pop %v871
      %v950 = vmul.f32 %v871, %v949
      %v951 = vsub.f32 1.0, %v950
      %v952 = vmul.f32 %v949, %v951
      %v953 = vadd.f32 %v949, %v952
      %vm954 = vweird.f32 %v871
      %vm955 = vweird.f32 %v949
      %vm956 = vmor %vm954, %vm955
      %v957 = vsel %vm956, %v949, %v953
      %v958 = vand.u32 2147483647, %v871
      %vm959 = vcmp.eq.f32.partialorder %v958, 8.507059e+37
      %v960 = vand.u32 %v871, 2147483648
      %v961 = vor.u32 1.1754944e-38, %v960
      %v962 = vsel %vm959, %v961, %v957
      %v963 = vmul.f32 1.0, %v962
      %v964 = vrcp.pop %v872
      %v965 = vmul.f32 %v872, %v964
      %v966 = vsub.f32 1.0, %v965
      %v967 = vmul.f32 %v964, %v966
      %v968 = vadd.f32 %v964, %v967
      %vm969 = vweird.f32 %v872
      %vm970 = vweird.f32 %v964
      %vm971 = vmor %vm969, %vm970
      %v972 = vsel %vm971, %v964, %v968
      %v973 = vand.u32 2147483647, %v872
      %vm974 = vcmp.eq.f32.partialorder %v973, 8.507059e+37
      %v975 = vand.u32 %v872, 2147483648
      %v976 = vor.u32 1.1754944e-38, %v975
      %v977 = vsel %vm974, %v976, %v972
      %v978 = vmul.f32 1.0, %v977
      %v979 = vrcp.pop %v873
      %v980 = vmul.f32 %v873, %v979
      %v981 = vsub.f32 1.0, %v980
      %v982 = vmul.f32 %v979, %v981
      %v983 = vadd.f32 %v979, %v982
      %vm984 = vweird.f32 %v873
      %vm985 = vweird.f32 %v979
      %vm986 = vmor %vm984, %vm985
      %v987 = vsel %vm986, %v979, %v983
      %v988 = vand.u32 2147483647, %v873
      %vm989 = vcmp.eq.f32.partialorder %v988, 8.507059e+37
      %v990 = vand.u32 %v873, 2147483648
      %v991 = vor.u32 1.1754944e-38, %v990
      %v992 = vsel %vm989, %v991, %v987
      %v993 = vmul.f32 1.0, %v992
      %v994 = vrcp.pop %v874
      %v995 = vmul.f32 %v874, %v994
      %v996 = vsub.f32 1.0, %v995
      %v997 = vmul.f32 %v994, %v996
      %v998 = vadd.f32 %v994, %v997
      %vm999 = vweird.f32 %v874
      %vm1000 = vweird.f32 %v994
      %vm1001 = vmor %vm999, %vm1000
      %v1002 = vsel %vm1001, %v994, %v998
      %v1003 = vand.u32 2147483647, %v874
      %vm1004 = vcmp.eq.f32.partialorder %v1003, 8.507059e+37
      %v1005 = vand.u32 %v874, 2147483648
      %v1006 = vor.u32 1.1754944e-38, %v1005
      %v1007 = vsel %vm1004, %v1006, %v1002
      %v1008 = vmul.f32 1.0, %v1007
      %v1009 = vrcp.pop %v875
      %v1010 = vmul.f32 %v875, %v1009
      %v1011 = vsub.f32 1.0, %v1010
      %v1012 = vmul.f32 %v1009, %v1011
      %v1013 = vadd.f32 %v1009, %v1012
      %vm1014 = vweird.f32 %v875
      %vm1015 = vweird.f32 %v1009
      %vm1016 = vmor %vm1014, %vm1015
      %v1017 = vsel %vm1016, %v1009, %v1013
      %v1018 = vand.u32 2147483647, %v875
      %vm1019 = vcmp.eq.f32.partialorder %v1018, 8.507059e+37
      %v1020 = vand.u32 %v875, 2147483648
      %v1021 = vor.u32 1.1754944e-38, %v1020
      %v1022 = vsel %vm1019, %v1021, %v1017
      %v1023 = vmul.f32 1.0, %v1022
      %v1024 = vrcp.pop %v876
      %v1025 = vmul.f32 %v876, %v1024
      %v1026 = vsub.f32 1.0, %v1025
      %v1027 = vmul.f32 %v1024, %v1026
      %v1028 = vadd.f32 %v1024, %v1027
      %vm1029 = vweird.f32 %v876
      %vm1030 = vweird.f32 %v1024
      %vm1031 = vmor %vm1029, %vm1030
      %v1032 = vsel %vm1031, %v1024, %v1028
      %v1033 = vand.u32 2147483647, %v876
      %vm1034 = vcmp.eq.f32.partialorder %v1033, 8.507059e+37
      %v1035 = vand.u32 %v876, 2147483648
      %v1036 = vor.u32 1.1754944e-38, %v1035
      %v1037 = vsel %vm1034, %v1036, %v1032
      %v1038 = vmul.f32 1.0, %v1037
      %v1039 = vrcp.pop %v877
      %v1040 = vmul.f32 %v877, %v1039
      %v1041 = vsub.f32 1.0, %v1040
      %v1042 = vmul.f32 %v1039, %v1041
      %v1043 = vadd.f32 %v1039, %v1042
      %vm1044 = vweird.f32 %v877
      %vm1045 = vweird.f32 %v1039
      %vm1046 = vmor %vm1044, %vm1045
      %v1047 = vsel %vm1046, %v1039, %v1043
      %v1048 = vand.u32 2147483647, %v877
      %vm1049 = vcmp.eq.f32.partialorder %v1048, 8.507059e+37
      %v1050 = vand.u32 %v877, 2147483648
      %v1051 = vor.u32 1.1754944e-38, %v1050
      %v1052 = vsel %vm1049, %v1051, %v1047
      %v1053 = vmul.f32 1.0, %v1052
      %v1054 = vrcp.pop %v878
      %v1055 = vmul.f32 %v878, %v1054
      %v1056 = vsub.f32 1.0, %v1055
      %v1057 = vmul.f32 %v1054, %v1056
      %v1058 = vadd.f32 %v1054, %v1057
      %vm1059 = vweird.f32 %v878
      %vm1060 = vweird.f32 %v1054
      %vm1061 = vmor %vm1059, %vm1060
      %v1062 = vsel %vm1061, %v1054, %v1058
      %v1063 = vand.u32 2147483647, %v878
      %vm1064 = vcmp.eq.f32.partialorder %v1063, 8.507059e+37
      %v1065 = vand.u32 %v878, 2147483648
      %v1066 = vor.u32 1.1754944e-38, %v1065
      %v1067 = vsel %vm1064, %v1066, %v1062
      %v1068 = vmul.f32 1.0, %v1067
      %v1069 = vrcp.pop %v879
      %v1070 = vmul.f32 %v879, %v1069
      %v1071 = vsub.f32 1.0, %v1070
      %v1072 = vmul.f32 %v1069, %v1071
      %v1073 = vadd.f32 %v1069, %v1072
      %vm1074 = vweird.f32 %v879
      %vm1075 = vweird.f32 %v1069
      %vm1076 = vmor %vm1074, %vm1075
      %v1077 = vsel %vm1076, %v1069, %v1073
      %v1078 = vand.u32 2147483647, %v879
      %vm1079 = vcmp.eq.f32.partialorder %v1078, 8.507059e+37
      %v1080 = vand.u32 %v879, 2147483648
      %v1081 = vor.u32 1.1754944e-38, %v1080
      %v1082 = vsel %vm1079, %v1081, %v1077
      %v1083 = vmul.f32 1.0, %v1082
      %v1084 = vrcp.pop %v880
      %v1085 = vmul.f32 %v880, %v1084
      %v1086 = vsub.f32 1.0, %v1085
      %v1087 = vmul.f32 %v1084, %v1086
      %v1088 = vadd.f32 %v1084, %v1087
      %vm1089 = vweird.f32 %v880
      %vm1090 = vweird.f32 %v1084
      %vm1091 = vmor %vm1089, %vm1090
      %v1092 = vsel %vm1091, %v1084, %v1088
      %v1093 = vand.u32 2147483647, %v880
      %vm1094 = vcmp.eq.f32.partialorder %v1093, 8.507059e+37
      %v1095 = vand.u32 %v880, 2147483648
      %v1096 = vor.u32 1.1754944e-38, %v1095
      %v1097 = vsel %vm1094, %v1096, %v1092
      %v1098 = vmul.f32 1.0, %v1097
      %v1099 = vrcp.pop %v881
      %v1100 = vmul.f32 %v881, %v1099
      %v1101 = vsub.f32 1.0, %v1100
      %v1102 = vmul.f32 %v1099, %v1101
      %v1103 = vadd.f32 %v1099, %v1102
      %vm1104 = vweird.f32 %v881
      %vm1105 = vweird.f32 %v1099
      %vm1106 = vmor %vm1104, %vm1105
      %v1107 = vsel %vm1106, %v1099, %v1103
      %v1108 = vand.u32 2147483647, %v881
      %vm1109 = vcmp.eq.f32.partialorder %v1108, 8.507059e+37
      %v1110 = vand.u32 %v881, 2147483648
      %v1111 = vor.u32 1.1754944e-38, %v1110
      %v1112 = vsel %vm1109, %v1111, %v1107
      %v1113 = vmul.f32 1.0, %v1112
      %v1114 = vrcp.pop %v882
      %v1115 = vmul.f32 %v882, %v1114
      %v1116 = vsub.f32 1.0, %v1115
      %v1117 = vmul.f32 %v1114, %v1116
      %v1118 = vadd.f32 %v1114, %v1117
      %vm1119 = vweird.f32 %v882
      %vm1120 = vweird.f32 %v1114
      %vm1121 = vmor %vm1119, %vm1120
      %v1122 = vsel %vm1121, %v1114, %v1118
      %v1123 = vand.u32 2147483647, %v882
      %vm1124 = vcmp.eq.f32.partialorder %v1123, 8.507059e+37
      %v1125 = vand.u32 %v882, 2147483648
      %v1126 = vor.u32 1.1754944e-38, %v1125
      %v1127 = vsel %vm1124, %v1126, %v1122
      %v1128 = vmul.f32 1.0, %v1127
      %v1129 = vrcp.pop %v883
      %v1130 = vmul.f32 %v883, %v1129
      %v1131 = vsub.f32 1.0, %v1130
      %v1132 = vmul.f32 %v1129, %v1131
      %v1133 = vadd.f32 %v1129, %v1132
      %vm1134 = vweird.f32 %v883
      %vm1135 = vweird.f32 %v1129
      %vm1136 = vmor %vm1134, %vm1135
      %v1137 = vsel %vm1136, %v1129, %v1133
      %v1138 = vand.u32 2147483647, %v883
      %vm1139 = vcmp.eq.f32.partialorder %v1138, 8.507059e+37
      %v1140 = vand.u32 %v883, 2147483648
      %v1141 = vor.u32 1.1754944e-38, %v1140
      %v1142 = vsel %vm1139, %v1141, %v1137
      %v1143 = vmul.f32 1.0, %v1142
      %v1144 = vrcp.pop %v884
      %v1145 = vmul.f32 %v884, %v1144
      %v1146 = vsub.f32 1.0, %v1145
      %v1147 = vmul.f32 %v1144, %v1146
      %v1148 = vadd.f32 %v1144, %v1147
      %vm1149 = vweird.f32 %v884
      %vm1150 = vweird.f32 %v1144
      %vm1151 = vmor %vm1149, %vm1150
      %v1152 = vsel %vm1151, %v1144, %v1148
      %v1153 = vand.u32 2147483647, %v884
      %vm1154 = vcmp.eq.f32.partialorder %v1153, 8.507059e+37
      %v1155 = vand.u32 %v884, 2147483648
      %v1156 = vor.u32 1.1754944e-38, %v1155
      %v1157 = vsel %vm1154, %v1156, %v1152
      %v1158 = vmul.f32 1.0, %v1157
      %v1159 = vrcp.pop %v885
      %v1160 = vmul.f32 %v885, %v1159
      %v1161 = vsub.f32 1.0, %v1160
      %v1162 = vmul.f32 %v1159, %v1161
      %v1163 = vadd.f32 %v1159, %v1162
      %vm1164 = vweird.f32 %v885
      %vm1165 = vweird.f32 %v1159
      %vm1166 = vmor %vm1164, %vm1165
      %v1167 = vsel %vm1166, %v1159, %v1163
      %v1168 = vand.u32 2147483647, %v885
      %vm1169 = vcmp.eq.f32.partialorder %v1168, 8.507059e+37
      %v1170 = vand.u32 %v885, 2147483648
      %v1171 = vor.u32 1.1754944e-38, %v1170
      %v1172 = vsel %vm1169, %v1171, %v1167
      %v1173 = vmul.f32 1.0, %v1172
      %v1174 = vrcp.pop %v886
      %v1175 = vmul.f32 %v886, %v1174
      %v1176 = vsub.f32 1.0, %v1175
      %v1177 = vmul.f32 %v1174, %v1176
      %v1178 = vadd.f32 %v1174, %v1177
      %vm1179 = vweird.f32 %v886
      %vm1180 = vweird.f32 %v1174
      %vm1181 = vmor %vm1179, %vm1180
      %v1182 = vsel %vm1181, %v1174, %v1178
      %v1183 = vand.u32 2147483647, %v886
      %vm1184 = vcmp.eq.f32.partialorder %v1183, 8.507059e+37
      %v1185 = vand.u32 %v886, 2147483648
      %v1186 = vor.u32 1.1754944e-38, %v1185
      %v1187 = vsel %vm1184, %v1186, %v1182
      %v1188 = vmul.f32 1.0, %v1187
      %v1189 = vrcp.pop %v887
      %v1190 = vmul.f32 %v887, %v1189
      %v1191 = vsub.f32 1.0, %v1190
      %v1192 = vmul.f32 %v1189, %v1191
      %v1193 = vadd.f32 %v1189, %v1192
      %vm1194 = vweird.f32 %v887
      %vm1195 = vweird.f32 %v1189
      %vm1196 = vmor %vm1194, %vm1195
      %v1197 = vsel %vm1196, %v1189, %v1193
      %v1198 = vand.u32 2147483647, %v887
      %vm1199 = vcmp.eq.f32.partialorder %v1198, 8.507059e+37
      %v1200 = vand.u32 %v887, 2147483648
      %v1201 = vor.u32 1.1754944e-38, %v1200
      %v1202 = vsel %vm1199, %v1201, %v1197
      %v1203 = vmul.f32 1.0, %v1202
      %v1204 = vrcp.pop %v888
      %v1205 = vmul.f32 %v888, %v1204
      %v1206 = vsub.f32 1.0, %v1205
      %v1207 = vmul.f32 %v1204, %v1206
      %v1208 = vadd.f32 %v1204, %v1207
      %vm1209 = vweird.f32 %v888
      %vm1210 = vweird.f32 %v1204
      %vm1211 = vmor %vm1209, %vm1210
      %v1212 = vsel %vm1211, %v1204, %v1208
      %v1213 = vand.u32 2147483647, %v888
      %vm1214 = vcmp.eq.f32.partialorder %v1213, 8.507059e+37
      %v1215 = vand.u32 %v888, 2147483648
      %v1216 = vor.u32 1.1754944e-38, %v1215
      %v1217 = vsel %vm1214, %v1216, %v1212
      %v1218 = vmul.f32 1.0, %v1217
      %v1219 = vrcp.pop %v889
      %v1220 = vmul.f32 %v889, %v1219
      %v1221 = vsub.f32 1.0, %v1220
      %v1222 = vmul.f32 %v1219, %v1221
      %v1223 = vadd.f32 %v1219, %v1222
      %vm1224 = vweird.f32 %v889
      %vm1225 = vweird.f32 %v1219
      %vm1226 = vmor %vm1224, %vm1225
      %v1227 = vsel %vm1226, %v1219, %v1223
      %v1228 = vand.u32 2147483647, %v889
      %vm1229 = vcmp.eq.f32.partialorder %v1228, 8.507059e+37
      %v1230 = vand.u32 %v889, 2147483648
      %v1231 = vor.u32 1.1754944e-38, %v1230
      %v1232 = vsel %vm1229, %v1231, %v1227
      %v1233 = vmul.f32 1.0, %v1232
      %v1234 = vrcp.pop %v890
      %v1235 = vmul.f32 %v890, %v1234
      %v1236 = vsub.f32 1.0, %v1235
      %v1237 = vmul.f32 %v1234, %v1236
      %v1238 = vadd.f32 %v1234, %v1237
      %vm1239 = vweird.f32 %v890
      %vm1240 = vweird.f32 %v1234
      %vm1241 = vmor %vm1239, %vm1240
      %v1242 = vsel %vm1241, %v1234, %v1238
      %v1243 = vand.u32 2147483647, %v890
      %vm1244 = vcmp.eq.f32.partialorder %v1243, 8.507059e+37
      %v1245 = vand.u32 %v890, 2147483648
      %v1246 = vor.u32 1.1754944e-38, %v1245
      %v1247 = vsel %vm1244, %v1246, %v1242
      %v1248 = vmul.f32 1.0, %v1247
      %v1249 = vrcp.pop %v891
      %v1250 = vmul.f32 %v891, %v1249
      %v1251 = vsub.f32 1.0, %v1250
      %v1252 = vmul.f32 %v1249, %v1251
      %v1253 = vadd.f32 %v1249, %v1252
      %vm1254 = vweird.f32 %v891
      %vm1255 = vweird.f32 %v1249
      %vm1256 = vmor %vm1254, %vm1255
      %v1257 = vsel %vm1256, %v1249, %v1253
      %v1258 = vand.u32 2147483647, %v891
      %vm1259 = vcmp.eq.f32.partialorder %v1258, 8.507059e+37
      %v1260 = vand.u32 %v891, 2147483648
      %v1261 = vor.u32 1.1754944e-38, %v1260
      %v1262 = vsel %vm1259, %v1261, %v1257
      %v1263 = vmul.f32 1.0, %v1262
      %v1264 = vrcp.pop %v892
      %v1265 = vmul.f32 %v892, %v1264
      %v1266 = vsub.f32 1.0, %v1265
      %v1267 = vmul.f32 %v1264, %v1266
      %v1268 = vadd.f32 %v1264, %v1267
      %vm1269 = vweird.f32 %v892
      %vm1270 = vweird.f32 %v1264
      %vm1271 = vmor %vm1269, %vm1270
      %v1272 = vsel %vm1271, %v1264, %v1268
      %v1273 = vand.u32 2147483647, %v892
      %vm1274 = vcmp.eq.f32.partialorder %v1273, 8.507059e+37
      %v1275 = vand.u32 %v892, 2147483648
      %v1276 = vor.u32 1.1754944e-38, %v1275
      %v1277 = vsel %vm1274, %v1276, %v1272
      %v1278 = vmul.f32 1.0, %v1277
      %v1279 = vrcp.pop %v893
      %v1280 = vmul.f32 %v893, %v1279
      %v1281 = vsub.f32 1.0, %v1280
      %v1282 = vmul.f32 %v1279, %v1281
      %v1283 = vadd.f32 %v1279, %v1282
      %vm1284 = vweird.f32 %v893
      %vm1285 = vweird.f32 %v1279
      %vm1286 = vmor %vm1284, %vm1285
      %v1287 = vsel %vm1286, %v1279, %v1283
      %v1288 = vand.u32 2147483647, %v893
      %vm1289 = vcmp.eq.f32.partialorder %v1288, 8.507059e+37
      %v1290 = vand.u32 %v893, 2147483648
      %v1291 = vor.u32 1.1754944e-38, %v1290
      %v1292 = vsel %vm1289, %v1291, %v1287
      %v1293 = vmul.f32 1.0, %v1292
      %v1294 = vrcp.pop %v894
      %v1295 = vmul.f32 %v894, %v1294
      %v1296 = vsub.f32 1.0, %v1295
      %v1297 = vmul.f32 %v1294, %v1296
      %v1298 = vadd.f32 %v1294, %v1297
      %vm1299 = vweird.f32 %v894
      %vm1300 = vweird.f32 %v1294
      %vm1301 = vmor %vm1299, %vm1300
      %v1302 = vsel %vm1301, %v1294, %v1298
      %v1303 = vand.u32 2147483647, %v894
      %vm1304 = vcmp.eq.f32.partialorder %v1303, 8.507059e+37
      %v1305 = vand.u32 %v894, 2147483648
      %v1306 = vor.u32 1.1754944e-38, %v1305
      %v1307 = vsel %vm1304, %v1306, %v1302
      %v1308 = vmul.f32 1.0, %v1307
      %v1309 = vrcp.pop %v895
      %v1310 = vmul.f32 %v895, %v1309
      %v1311 = vsub.f32 1.0, %v1310
      %v1312 = vmul.f32 %v1309, %v1311
      %v1313 = vadd.f32 %v1309, %v1312
      %vm1314 = vweird.f32 %v895
      %vm1315 = vweird.f32 %v1309
      %vm1316 = vmor %vm1314, %vm1315
      %v1317 = vsel %vm1316, %v1309, %v1313
      %v1318 = vand.u32 2147483647, %v895
      %vm1319 = vcmp.eq.f32.partialorder %v1318, 8.507059e+37
      %v1320 = vand.u32 %v895, 2147483648
      %v1321 = vor.u32 1.1754944e-38, %v1320
      %v1322 = vsel %vm1319, %v1321, %v1317
      %v1323 = vmul.f32 1.0, %v1322
      %v1324 = vrcp.pop %v896
      %v1325 = vmul.f32 %v896, %v1324
      %v1326 = vsub.f32 1.0, %v1325
      %v1327 = vmul.f32 %v1324, %v1326
      %v1328 = vadd.f32 %v1324, %v1327
      %vm1329 = vweird.f32 %v896
      %vm1330 = vweird.f32 %v1324
      %vm1331 = vmor %vm1329, %vm1330
      %v1332 = vsel %vm1331, %v1324, %v1328
      %v1333 = vand.u32 2147483647, %v896
      %vm1334 = vcmp.eq.f32.partialorder %v1333, 8.507059e+37
      %v1335 = vand.u32 %v896, 2147483648
      %v1336 = vor.u32 1.1754944e-38, %v1335
      %v1337 = vsel %vm1334, %v1336, %v1332
      %v1338 = vmul.f32 1.0, %v1337
      %v1339 = vrcp.pop %v897
      %v1340 = vmul.f32 %v897, %v1339
      %v1341 = vsub.f32 1.0, %v1340
      %v1342 = vmul.f32 %v1339, %v1341
      %v1343 = vadd.f32 %v1339, %v1342
      %vm1344 = vweird.f32 %v897
      %vm1345 = vweird.f32 %v1339
      %vm1346 = vmor %vm1344, %vm1345
      %v1347 = vsel %vm1346, %v1339, %v1343
      %v1348 = vand.u32 2147483647, %v897
      %vm1349 = vcmp.eq.f32.partialorder %v1348, 8.507059e+37
      %v1350 = vand.u32 %v897, 2147483648
      %v1351 = vor.u32 1.1754944e-38, %v1350
      %v1352 = vsel %vm1349, %v1351, %v1347
      %v1353 = vmul.f32 1.0, %v1352
      %v1354 = vrcp.pop %v898
      %v1355 = vmul.f32 %v898, %v1354
      %v1356 = vsub.f32 1.0, %v1355
      %v1357 = vmul.f32 %v1354, %v1356
      %v1358 = vadd.f32 %v1354, %v1357
      %vm1359 = vweird.f32 %v898
      %vm1360 = vweird.f32 %v1354
      %vm1361 = vmor %vm1359, %vm1360
      %v1362 = vsel %vm1361, %v1354, %v1358
      %v1363 = vand.u32 2147483647, %v898
      %vm1364 = vcmp.eq.f32.partialorder %v1363, 8.507059e+37
      %v1365 = vand.u32 %v898, 2147483648
      %v1366 = vor.u32 1.1754944e-38, %v1365
      %v1367 = vsel %vm1364, %v1366, %v1362
      %v1368 = vmul.f32 1.0, %v1367
      %v1369 = vrcp.pop %v899
      %v1370 = vmul.f32 %v899, %v1369
      %v1371 = vsub.f32 1.0, %v1370
      %v1372 = vmul.f32 %v1369, %v1371
      %v1373 = vadd.f32 %v1369, %v1372
      %vm1374 = vweird.f32 %v899
      %vm1375 = vweird.f32 %v1369
      %vm1376 = vmor %vm1374, %vm1375
      %v1377 = vsel %vm1376, %v1369, %v1373
      %v1378 = vand.u32 2147483647, %v899
      %vm1379 = vcmp.eq.f32.partialorder %v1378, 8.507059e+37
      %v1380 = vand.u32 %v899, 2147483648
      %v1381 = vor.u32 1.1754944e-38, %v1380
      %v1382 = vsel %vm1379, %v1381, %v1377
      %v1383 = vmul.f32 1.0, %v1382
      %v1384 = vrcp.pop %v900
      %v1385 = vmul.f32 %v900, %v1384
      %v1386 = vsub.f32 1.0, %v1385
      %v1387 = vmul.f32 %v1384, %v1386
      %v1388 = vadd.f32 %v1384, %v1387
      %vm1389 = vweird.f32 %v900
      %vm1390 = vweird.f32 %v1384
      %vm1391 = vmor %vm1389, %vm1390
      %v1392 = vsel %vm1391, %v1384, %v1388
      %v1393 = vand.u32 2147483647, %v900
      %vm1394 = vcmp.eq.f32.partialorder %v1393, 8.507059e+37
      %v1395 = vand.u32 %v900, 2147483648
      %v1396 = vor.u32 1.1754944e-38, %v1395
      %v1397 = vsel %vm1394, %v1396, %v1392
      %v1398 = vmul.f32 1.0, %v1397
      %v1399 = vrcp.pop %v901
      %v1400 = vmul.f32 %v901, %v1399
      %v1401 = vsub.f32 1.0, %v1400
      %v1402 = vmul.f32 %v1399, %v1401
      %v1403 = vadd.f32 %v1399, %v1402
      %vm1404 = vweird.f32 %v901
      %vm1405 = vweird.f32 %v1399
      %vm1406 = vmor %vm1404, %vm1405
      %v1407 = vsel %vm1406, %v1399, %v1403
      %v1408 = vand.u32 2147483647, %v901
      %vm1409 = vcmp.eq.f32.partialorder %v1408, 8.507059e+37
      %v1410 = vand.u32 %v901, 2147483648
      %v1411 = vor.u32 1.1754944e-38, %v1410
      %v1412 = vsel %vm1409, %v1411, %v1407
      %v1413 = vmul.f32 1.0, %v1412
      %v1414 = vrcp.pop %v902
      %v1415 = vmul.f32 %v902, %v1414
      %v1416 = vsub.f32 1.0, %v1415
      %v1417 = vmul.f32 %v1414, %v1416
      %v1418 = vadd.f32 %v1414, %v1417
      %vm1419 = vweird.f32 %v902
      %vm1420 = vweird.f32 %v1414
      %vm1421 = vmor %vm1419, %vm1420
      %v1422 = vsel %vm1421, %v1414, %v1418
      %v1423 = vand.u32 2147483647, %v902
      %vm1424 = vcmp.eq.f32.partialorder %v1423, 8.507059e+37
      %v1425 = vand.u32 %v902, 2147483648
      %v1426 = vor.u32 1.1754944e-38, %v1425
      %v1427 = vsel %vm1424, %v1426, %v1422
      %v1428 = vmul.f32 1.0, %v1427
      %v1429 = vrcp.pop %v903
      %v1430 = vmul.f32 %v903, %v1429
      %v1431 = vsub.f32 1.0, %v1430
      %v1432 = vmul.f32 %v1429, %v1431
      %v1433 = vadd.f32 %v1429, %v1432
      %vm1434 = vweird.f32 %v903
      %vm1435 = vweird.f32 %v1429
      %vm1436 = vmor %vm1434, %vm1435
      %v1437 = vsel %vm1436, %v1429, %v1433
      %v1438 = vand.u32 2147483647, %v903
      %vm1439 = vcmp.eq.f32.partialorder %v1438, 8.507059e+37
      %v1440 = vand.u32 %v903, 2147483648
      %v1441 = vor.u32 1.1754944e-38, %v1440
      %v1442 = vsel %vm1439, %v1441, %v1437
      %v1443 = vmul.f32 1.0, %v1442
      %v1444 = vmul.f32 %v671, %v918
      %v1445 = vmul.f32 %v673, %v933
      %v1446 = vmul.f32 %v676, %v948
      %v1447 = vmul.f32 %v678, %v963
      %v1448 = vmul.f32 %v681, %v978
      %v1449 = vmul.f32 %v683, %v993
      %v1450 = vmul.f32 %v686, %v1008
      %v1451 = vmul.f32 %v688, %v1023
      %v1452 = vmul.f32 %v691, %v1038
      %v1453 = vmul.f32 %v693, %v1053
      %v1454 = vmul.f32 %v696, %v1068
      %v1455 = vmul.f32 %v698, %v1083
      %v1456 = vmul.f32 %v701, %v1098
      %v1457 = vmul.f32 %v703, %v1113
      %v1458 = vmul.f32 %v706, %v1128
      %v1459 = vmul.f32 %v708, %v1143
      %v1460 = vmul.f32 %v711, %v1158
      %v1461 = vmul.f32 %v713, %v1173
      %v1462 = vmul.f32 %v716, %v1188
      %v1463 = vmul.f32 %v718, %v1203
      %v1464 = vmul.f32 %v721, %v1218
      %v1465 = vmul.f32 %v723, %v1233
      %v1466 = vmul.f32 %v726, %v1248
      %v1467 = vmul.f32 %v728, %v1263
      %v1468 = vmul.f32 %v731, %v1278
      %v1469 = vmul.f32 %v733, %v1293
      %v1470 = vmul.f32 %v736, %v1308
      %v1471 = vmul.f32 %v738, %v1323
      %v1472 = vmul.f32 %v741, %v1338
      %v1473 = vmul.f32 %v743, %v1353
      %v1474 = vmul.f32 %v746, %v1368
      %v1475 = vmul.f32 %v748, %v1383
      %v1476 = vmul.f32 %v751, %v1398
      %v1477 = vmul.f32 %v753, %v1413
      %v1478 = vmul.f32 %v756, %v1428
      %v1479 = vmul.f32 %v758, %v1443
      %v1480 = vstv %s375
      %v1481 = vadd.s32 %v1480, 1
      %v1482 = vadd.s32 %v1480, 2
      %v1483 = vadd.s32 %v1480, 3
      %v1484 = vadd.s32 %v1480, 4
      %v1485 = vadd.s32 %v1480, 5
      %v1486 = vadd.s32 %v1480, 6
      %v1487 = vadd.s32 %v1480, 7
      %v1488 = vadd.s32 %v1480, 8
      %v1489 = vadd.s32 %v1480, 9
      %v1490 = vadd.s32 %v1480, 10
      %v1491 = vadd.s32 %v1480, 11
      %v1492 = vadd.s32 %v1480, 12
      %v1493 = vadd.s32 %v1480, 13
      %v1494 = vadd.s32 %v1480, 14
      %v1495 = vadd.s32 %v1480, 15
      %v1496 = vadd.s32 %v1480, 16
      %v1497 = vadd.s32 %v1480, 17
      %vm1498 = vcmp.ge.s32.totalorder %v1480, 0
      %vm1499 = vcmp.ge.s32.totalorder %v1481, 0
      %vm1500 = vcmp.ge.s32.totalorder %v1482, 0
      %vm1501 = vcmp.ge.s32.totalorder %v1483, 0
      %vm1502 = vcmp.ge.s32.totalorder %v1484, 0
      %vm1503 = vcmp.ge.s32.totalorder %v1485, 0
      %vm1504 = vcmp.ge.s32.totalorder %v1486, 0
      %vm1505 = vcmp.ge.s32.totalorder %v1487, 0
      %vm1506 = vcmp.ge.s32.totalorder %v1488, 0
      %vm1507 = vcmp.ge.s32.totalorder %v1489, 0
      %vm1508 = vcmp.ge.s32.totalorder %v1490, 0
      %vm1509 = vcmp.ge.s32.totalorder %v1491, 0
      %vm1510 = vcmp.ge.s32.totalorder %v1492, 0
      %vm1511 = vcmp.ge.s32.totalorder %v1493, 0
      %vm1512 = vcmp.ge.s32.totalorder %v1494, 0
      %vm1513 = vcmp.ge.s32.totalorder %v1495, 0
      %vm1514 = vcmp.ge.s32.totalorder %v1496, 0
      %vm1515 = vcmp.ge.s32.totalorder %v1497, 0
      %vm1516 = vcmp.lt.s32.totalorder %v1480, 16
      %vm1517 = vcmp.lt.s32.totalorder %v1481, 16
      %vm1518 = vcmp.lt.s32.totalorder %v1482, 16
      %vm1519 = vcmp.lt.s32.totalorder %v1483, 16
      %vm1520 = vcmp.lt.s32.totalorder %v1484, 16
      %vm1521 = vcmp.lt.s32.totalorder %v1485, 16
      %vm1522 = vcmp.lt.s32.totalorder %v1486, 16
      %vm1523 = vcmp.lt.s32.totalorder %v1487, 16
      %vm1524 = vcmp.lt.s32.totalorder %v1488, 16
      %vm1525 = vcmp.lt.s32.totalorder %v1489, 16
      %vm1526 = vcmp.lt.s32.totalorder %v1490, 16
      %vm1527 = vcmp.lt.s32.totalorder %v1491, 16
      %vm1528 = vcmp.lt.s32.totalorder %v1492, 16
      %vm1529 = vcmp.lt.s32.totalorder %v1493, 16
      %vm1530 = vcmp.lt.s32.totalorder %v1494, 16
      %vm1531 = vcmp.lt.s32.totalorder %v1495, 16
      %vm1532 = vcmp.lt.s32.totalorder %v1496, 16
      %vm1533 = vcmp.lt.s32.totalorder %v1497, 16
      %vm1534 = vmand %vm1498, %vm1516
      %vm1535 = vmand %vm1499, %vm1517
      %vm1536 = vmand %vm1500, %vm1518
      %vm1537 = vmand %vm1501, %vm1519
      %vm1538 = vmand %vm1502, %vm1520
      %vm1539 = vmand %vm1503, %vm1521
      %vm1540 = vmand %vm1504, %vm1522
      %vm1541 = vmand %vm1505, %vm1523
      %vm1542 = vmand %vm1506, %vm1524
      %vm1543 = vmand %vm1507, %vm1525
      %vm1544 = vmand %vm1508, %vm1526
      %vm1545 = vmand %vm1509, %vm1527
      %vm1546 = vmand %vm1510, %vm1528
      %vm1547 = vmand %vm1511, %vm1529
      %vm1548 = vmand %vm1512, %vm1530
      %vm1549 = vmand %vm1513, %vm1531
      %vm1550 = vmand %vm1514, %vm1532
      %vm1551 = vmand %vm1515, %vm1533
      %v1552 = vsel %vm1534, 1, 0
      %v1553 = vsel %vm1535, 1, 0
      %v1554 = vsel %vm1536, 1, 0
      %v1555 = vsel %vm1537, 1, 0
      %v1556 = vsel %vm1538, 1, 0
      %v1557 = vsel %vm1539, 1, 0
      %v1558 = vsel %vm1540, 1, 0
      %v1559 = vsel %vm1541, 1, 0
      %v1560 = vsel %vm1542, 1, 0
      %v1561 = vsel %vm1543, 1, 0
      %v1562 = vsel %vm1544, 1, 0
      %v1563 = vsel %vm1545, 1, 0
      %v1564 = vsel %vm1546, 1, 0
      %v1565 = vsel %vm1547, 1, 0
      %v1566 = vsel %vm1548, 1, 0
      %v1567 = vsel %vm1549, 1, 0
      %v1568 = vsel %vm1550, 1, 0
      %v1569 = vsel %vm1551, 1, 0
      %vm1570 = vcmp.eq.s32.totalorder %v1552, 1
      %vm1571 = vcmp.eq.s32.totalorder %v1553, 1
      %vm1572 = vcmp.eq.s32.totalorder %v1554, 1
      %vm1573 = vcmp.eq.s32.totalorder %v1555, 1
      %vm1574 = vcmp.eq.s32.totalorder %v1556, 1
      %vm1575 = vcmp.eq.s32.totalorder %v1557, 1
      %vm1576 = vcmp.eq.s32.totalorder %v1558, 1
      %vm1577 = vcmp.eq.s32.totalorder %v1559, 1
      %vm1578 = vcmp.eq.s32.totalorder %v1560, 1
      %vm1579 = vcmp.eq.s32.totalorder %v1561, 1
      %vm1580 = vcmp.eq.s32.totalorder %v1562, 1
      %vm1581 = vcmp.eq.s32.totalorder %v1563, 1
      %vm1582 = vcmp.eq.s32.totalorder %v1564, 1
      %vm1583 = vcmp.eq.s32.totalorder %v1565, 1
      %vm1584 = vcmp.eq.s32.totalorder %v1566, 1
      %vm1585 = vcmp.eq.s32.totalorder %v1567, 1
      %vm1586 = vcmp.eq.s32.totalorder %v1568, 1
      %vm1587 = vcmp.eq.s32.totalorder %v1569, 1
      %v1588 = vsel %vm1570, %v1444, 0.0
      %v1589 = vsel %vm1570, %v1445, 0.0
      %v1590 = vsel %vm1571, %v1446, 0.0
      %v1591 = vsel %vm1571, %v1447, 0.0
      %v1592 = vsel %vm1572, %v1448, 0.0
      %v1593 = vsel %vm1572, %v1449, 0.0
      %v1594 = vsel %vm1573, %v1450, 0.0
      %v1595 = vsel %vm1573, %v1451, 0.0
      %v1596 = vsel %vm1574, %v1452, 0.0
      %v1597 = vsel %vm1574, %v1453, 0.0
      %v1598 = vsel %vm1575, %v1454, 0.0
      %v1599 = vsel %vm1575, %v1455, 0.0
      %v1600 = vsel %vm1576, %v1456, 0.0
      %v1601 = vsel %vm1576, %v1457, 0.0
      %v1602 = vsel %vm1577, %v1458, 0.0
      %v1603 = vsel %vm1577, %v1459, 0.0
      %v1604 = vsel %vm1578, %v1460, 0.0
      %v1605 = vsel %vm1578, %v1461, 0.0
      %v1606 = vsel %vm1579, %v1462, 0.0
      %v1607 = vsel %vm1579, %v1463, 0.0
      %v1608 = vsel %vm1580, %v1464, 0.0
      %v1609 = vsel %vm1580, %v1465, 0.0
      %v1610 = vsel %vm1581, %v1466, 0.0
      %v1611 = vsel %vm1581, %v1467, 0.0
      %v1612 = vsel %vm1582, %v1468, 0.0
      %v1613 = vsel %vm1582, %v1469, 0.0
      %v1614 = vsel %vm1583, %v1470, 0.0
      %v1615 = vsel %vm1583, %v1471, 0.0
      %v1616 = vsel %vm1584, %v1472, 0.0
      %v1617 = vsel %vm1584, %v1473, 0.0
      %v1618 = vsel %vm1585, %v1474, 0.0
      %v1619 = vsel %vm1585, %v1475, 0.0
      %v1620 = vsel %vm1586, %v1476, 0.0
      %v1621 = vsel %vm1586, %v1477, 0.0
      %v1622 = vsel %vm1587, %v1478, 0.0
      %v1623 = vsel %vm1587, %v1479, 0.0
      %v1624 = vlaneseq
      %v1625 = vshrl.u32 %v1624, 7
      %v1626 = vadd.s32 %v1625, 8
      %vm1627 = vcmp.eq.s32.totalorder %v1625, 0
      %vm1628 = vcmp.eq.s32.totalorder %v1626, 0
      %v1629 = vrot.slane %v1588, 7
      %v1630 = vrot.slane %v1590, 7
      %v1631 = vrot.slane %v1592, 7
      %v1632 = vrot.slane %v1594, 7
      %v1633 = vrot.slane %v1596, 7
      %v1634 = vrot.slane %v1598, 7
      %v1635 = vrot.slane %v1600, 7
      %v1636 = vrot.slane %v1602, 7
      %v1637 = vrot.slane %v1604, 7
      %v1638 = vrot.slane %v1606, 7
      %v1639 = vrot.slane %v1608, 7
      %v1640 = vrot.slane %v1610, 7
      %v1641 = vrot.slane %v1612, 7
      %v1642 = vrot.slane %v1614, 7
      %v1643 = vrot.slane %v1616, 7
      %v1644 = vrot.slane %v1618, 7
      %v1645 = vrot.slane %v1620, 7
      %v1646 = vrot.slane %v1622, 7
      %v1647 = vrot.slane %v1589, 7
      %v1648 = vrot.slane %v1591, 7
      %v1649 = vrot.slane %v1593, 7
      %v1650 = vrot.slane %v1595, 7
      %v1651 = vrot.slane %v1597, 7
      %v1652 = vrot.slane %v1599, 7
      %v1653 = vrot.slane %v1601, 7
      %v1654 = vrot.slane %v1603, 7
      %v1655 = vrot.slane %v1605, 7
      %v1656 = vrot.slane %v1607, 7
      %v1657 = vrot.slane %v1609, 7
      %v1658 = vrot.slane %v1611, 7
      %v1659 = vrot.slane %v1613, 7
      %v1660 = vrot.slane %v1615, 7
      %v1661 = vrot.slane %v1617, 7
      %v1662 = vrot.slane %v1619, 7
      %v1663 = vrot.slane %v1621, 7
      %v1664 = vrot.slane %v1623, 7
      %vm1665 = vcmp.lt.s32.totalorder %v1625, 1
      %v1666 = vsel %vm1665, %v1629, %v1647
      %v1667 = vsel %vm1665, %v1630, %v1648
      %v1668 = vsel %vm1665, %v1631, %v1649
      %v1669 = vsel %vm1665, %v1632, %v1650
      %v1670 = vsel %vm1665, %v1633, %v1651
      %v1671 = vsel %vm1665, %v1634, %v1652
      %v1672 = vsel %vm1665, %v1635, %v1653
      %v1673 = vsel %vm1665, %v1636, %v1654
      %v1674 = vsel %vm1665, %v1637, %v1655
      %v1675 = vsel %vm1665, %v1638, %v1656
      %v1676 = vsel %vm1665, %v1639, %v1657
      %v1677 = vsel %vm1665, %v1640, %v1658
      %v1678 = vsel %vm1665, %v1641, %v1659
      %v1679 = vsel %vm1665, %v1642, %v1660
      %v1680 = vsel %vm1665, %v1643, %v1661
      %v1681 = vsel %vm1665, %v1644, %v1662
      %v1682 = vsel %vm1665, %v1645, %v1663
      %v1683 = vsel %vm1665, %v1646, %v1664
      %v1684 = vsel %vm1665, %v1647, %v1629
      %v1685 = vsel %vm1665, %v1648, %v1630
      %v1686 = vsel %vm1665, %v1649, %v1631
      %v1687 = vsel %vm1665, %v1650, %v1632
      %v1688 = vsel %vm1665, %v1651, %v1633
      %v1689 = vsel %vm1665, %v1652, %v1634
      %v1690 = vsel %vm1665, %v1653, %v1635
      %v1691 = vsel %vm1665, %v1654, %v1636
      %v1692 = vsel %vm1665, %v1655, %v1637
      %v1693 = vsel %vm1665, %v1656, %v1638
      %v1694 = vsel %vm1665, %v1657, %v1639
      %v1695 = vsel %vm1665, %v1658, %v1640
      %v1696 = vsel %vm1665, %v1659, %v1641
      %v1697 = vsel %vm1665, %v1660, %v1642
      %v1698 = vsel %vm1665, %v1661, %v1643
      %v1699 = vsel %vm1665, %v1662, %v1644
      %v1700 = vsel %vm1665, %v1663, %v1645
      %v1701 = vsel %vm1665, %v1664, %v1646
      %v1702 = vsel %vm1627, 1, 0
      %v1703 = vsel %vm1628, 1, 0
      %vm1704 = vcmp.eq.s32.totalorder %v1702, 1
      %vm1705 = vcmp.eq.s32.totalorder %v1703, 1
      %v1706 = vsel %vm1704, 0.0, %v1684
      %v1707 = vsel %vm1705, 0.0, %v1666
      %v1708 = vsel %vm1704, 0.0, %v1685
      %v1709 = vsel %vm1705, 0.0, %v1667
      %v1710 = vsel %vm1704, 0.0, %v1686
      %v1711 = vsel %vm1705, 0.0, %v1668
      %v1712 = vsel %vm1704, 0.0, %v1687
      %v1713 = vsel %vm1705, 0.0, %v1669
      %v1714 = vsel %vm1704, 0.0, %v1688
      %v1715 = vsel %vm1705, 0.0, %v1670
      %v1716 = vsel %vm1704, 0.0, %v1689
      %v1717 = vsel %vm1705, 0.0, %v1671
      %v1718 = vsel %vm1704, 0.0, %v1690
      %v1719 = vsel %vm1705, 0.0, %v1672
      %v1720 = vsel %vm1704, 0.0, %v1691
      %v1721 = vsel %vm1705, 0.0, %v1673
      %v1722 = vsel %vm1704, 0.0, %v1692
      %v1723 = vsel %vm1705, 0.0, %v1674
      %v1724 = vsel %vm1704, 0.0, %v1693
      %v1725 = vsel %vm1705, 0.0, %v1675
      %v1726 = vsel %vm1704, 0.0, %v1694
      %v1727 = vsel %vm1705, 0.0, %v1676
      %v1728 = vsel %vm1704, 0.0, %v1695
      %v1729 = vsel %vm1705, 0.0, %v1677
      %v1730 = vsel %vm1704, 0.0, %v1696
      %v1731 = vsel %vm1705, 0.0, %v1678
      %v1732 = vsel %vm1704, 0.0, %v1697
      %v1733 = vsel %vm1705, 0.0, %v1679
      %v1734 = vsel %vm1704, 0.0, %v1698
      %v1735 = vsel %vm1705, 0.0, %v1680
      %v1736 = vsel %vm1704, 0.0, %v1699
      %v1737 = vsel %vm1705, 0.0, %v1681
      %v1738 = vsel %vm1704, 0.0, %v1700
      %v1739 = vsel %vm1705, 0.0, %v1682
      %v1740 = vsel %vm1704, 0.0, %v1701
      %v1741 = vsel %vm1705, 0.0, %v1683
      %vm1742 = vcmp.eq.s32.totalorder %v1625, 15
      %vm1743 = vcmp.eq.s32.totalorder %v1626, 15
      %v1744 = vrot.slane %v1588, 1
      %v1745 = vrot.slane %v1590, 1
      %v1746 = vrot.slane %v1592, 1
      %v1747 = vrot.slane %v1594, 1
      %v1748 = vrot.slane %v1596, 1
      %v1749 = vrot.slane %v1598, 1
      %v1750 = vrot.slane %v1600, 1
      %v1751 = vrot.slane %v1602, 1
      %v1752 = vrot.slane %v1604, 1
      %v1753 = vrot.slane %v1606, 1
      %v1754 = vrot.slane %v1608, 1
      %v1755 = vrot.slane %v1610, 1
      %v1756 = vrot.slane %v1612, 1
      %v1757 = vrot.slane %v1614, 1
      %v1758 = vrot.slane %v1616, 1
      %v1759 = vrot.slane %v1618, 1
      %v1760 = vrot.slane %v1620, 1
      %v1761 = vrot.slane %v1622, 1
      %v1762 = vrot.slane %v1589, 1
      %v1763 = vrot.slane %v1591, 1
      %v1764 = vrot.slane %v1593, 1
      %v1765 = vrot.slane %v1595, 1
      %v1766 = vrot.slane %v1597, 1
      %v1767 = vrot.slane %v1599, 1
      %v1768 = vrot.slane %v1601, 1
      %v1769 = vrot.slane %v1603, 1
      %v1770 = vrot.slane %v1605, 1
      %v1771 = vrot.slane %v1607, 1
      %v1772 = vrot.slane %v1609, 1
      %v1773 = vrot.slane %v1611, 1
      %v1774 = vrot.slane %v1613, 1
      %v1775 = vrot.slane %v1615, 1
      %v1776 = vrot.slane %v1617, 1
      %v1777 = vrot.slane %v1619, 1
      %v1778 = vrot.slane %v1621, 1
      %v1779 = vrot.slane %v1623, 1
      %vm1780 = vcmp.lt.s32.totalorder %v1625, 7
      %v1781 = vsel %vm1780, %v1744, %v1762
      %v1782 = vsel %vm1780, %v1745, %v1763
      %v1783 = vsel %vm1780, %v1746, %v1764
      %v1784 = vsel %vm1780, %v1747, %v1765
      %v1785 = vsel %vm1780, %v1748, %v1766
      %v1786 = vsel %vm1780, %v1749, %v1767
      %v1787 = vsel %vm1780, %v1750, %v1768
      %v1788 = vsel %vm1780, %v1751, %v1769
      %v1789 = vsel %vm1780, %v1752, %v1770
      %v1790 = vsel %vm1780, %v1753, %v1771
      %v1791 = vsel %vm1780, %v1754, %v1772
      %v1792 = vsel %vm1780, %v1755, %v1773
      %v1793 = vsel %vm1780, %v1756, %v1774
      %v1794 = vsel %vm1780, %v1757, %v1775
      %v1795 = vsel %vm1780, %v1758, %v1776
      %v1796 = vsel %vm1780, %v1759, %v1777
      %v1797 = vsel %vm1780, %v1760, %v1778
      %v1798 = vsel %vm1780, %v1761, %v1779
      %v1799 = vsel %vm1780, %v1762, %v1744
      %v1800 = vsel %vm1780, %v1763, %v1745
      %v1801 = vsel %vm1780, %v1764, %v1746
      %v1802 = vsel %vm1780, %v1765, %v1747
      %v1803 = vsel %vm1780, %v1766, %v1748
      %v1804 = vsel %vm1780, %v1767, %v1749
      %v1805 = vsel %vm1780, %v1768, %v1750
      %v1806 = vsel %vm1780, %v1769, %v1751
      %v1807 = vsel %vm1780, %v1770, %v1752
      %v1808 = vsel %vm1780, %v1771, %v1753
      %v1809 = vsel %vm1780, %v1772, %v1754
      %v1810 = vsel %vm1780, %v1773, %v1755
      %v1811 = vsel %vm1780, %v1774, %v1756
      %v1812 = vsel %vm1780, %v1775, %v1757
      %v1813 = vsel %vm1780, %v1776, %v1758
      %v1814 = vsel %vm1780, %v1777, %v1759
      %v1815 = vsel %vm1780, %v1778, %v1760
      %v1816 = vsel %vm1780, %v1779, %v1761
      %v1817 = vsel %vm1742, 1, 0
      %v1818 = vsel %vm1743, 1, 0
      %vm1819 = vcmp.eq.s32.totalorder %v1817, 1
      %vm1820 = vcmp.eq.s32.totalorder %v1818, 1
      %v1821 = vsel %vm1819, 0.0, %v1781
      %v1822 = vsel %vm1820, 0.0, %v1799
      %v1823 = vsel %vm1819, 0.0, %v1782
      %v1824 = vsel %vm1820, 0.0, %v1800
      %v1825 = vsel %vm1819, 0.0, %v1783
      %v1826 = vsel %vm1820, 0.0, %v1801
      %v1827 = vsel %vm1819, 0.0, %v1784
      %v1828 = vsel %vm1820, 0.0, %v1802
      %v1829 = vsel %vm1819, 0.0, %v1785
      %v1830 = vsel %vm1820, 0.0, %v1803
      %v1831 = vsel %vm1819, 0.0, %v1786
      %v1832 = vsel %vm1820, 0.0, %v1804
      %v1833 = vsel %vm1819, 0.0, %v1787
      %v1834 = vsel %vm1820, 0.0, %v1805
      %v1835 = vsel %vm1819, 0.0, %v1788
      %v1836 = vsel %vm1820, 0.0, %v1806
      %v1837 = vsel %vm1819, 0.0, %v1789
      %v1838 = vsel %vm1820, 0.0, %v1807
      %v1839 = vsel %vm1819, 0.0, %v1790
      %v1840 = vsel %vm1820, 0.0, %v1808
      %v1841 = vsel %vm1819, 0.0, %v1791
      %v1842 = vsel %vm1820, 0.0, %v1809
      %v1843 = vsel %vm1819, 0.0, %v1792
      %v1844 = vsel %vm1820, 0.0, %v1810
      %v1845 = vsel %vm1819, 0.0, %v1793
      %v1846 = vsel %vm1820, 0.0, %v1811
      %v1847 = vsel %vm1819, 0.0, %v1794
      %v1848 = vsel %vm1820, 0.0, %v1812
      %v1849 = vsel %vm1819, 0.0, %v1795
      %v1850 = vsel %vm1820, 0.0, %v1813
      %v1851 = vsel %vm1819, 0.0, %v1796
      %v1852 = vsel %vm1820, 0.0, %v1814
      %v1853 = vsel %vm1819, 0.0, %v1797
      %v1854 = vsel %vm1820, 0.0, %v1815
      %v1855 = vsel %vm1819, 0.0, %v1798
      %v1856 = vsel %vm1820, 0.0, %v1816
      %v1857 = vpack.c.bf16 %v1706, %v1706
      %v1858 = vpack.c.bf16 %v1707, %v1707
      %v1859 = vpack.c.bf16 %v1708, %v1708
      %v1860 = vpack.c.bf16 %v1709, %v1709
      %v1861 = vpack.c.bf16 %v1710, %v1710
      %v1862 = vpack.c.bf16 %v1711, %v1711
      %v1863 = vpack.c.bf16 %v1712, %v1712
      %v1864 = vpack.c.bf16 %v1713, %v1713
      %v1865 = vpack.c.bf16 %v1714, %v1714
      %v1866 = vpack.c.bf16 %v1715, %v1715
      %v1867 = vpack.c.bf16 %v1716, %v1716
      %v1868 = vpack.c.bf16 %v1717, %v1717
      %v1869 = vpack.c.bf16 %v1718, %v1718
      %v1870 = vpack.c.bf16 %v1719, %v1719
      %v1871 = vpack.c.bf16 %v1720, %v1720
      %v1872 = vpack.c.bf16 %v1721, %v1721
      %v1873 = vpack.c.bf16 %v1722, %v1722
      %v1874 = vpack.c.bf16 %v1723, %v1723
      %v1875 = vpack.c.bf16 %v1724, %v1724
      %v1876 = vpack.c.bf16 %v1725, %v1725
      %v1877 = vpack.c.bf16 %v1726, %v1726
      %v1878 = vpack.c.bf16 %v1727, %v1727
      %v1879 = vpack.c.bf16 %v1728, %v1728
      %v1880 = vpack.c.bf16 %v1729, %v1729
      %v1881 = vpack.c.bf16 %v1730, %v1730
      %v1882 = vpack.c.bf16 %v1731, %v1731
      %v1883 = vpack.c.bf16 %v1732, %v1732
      %v1884 = vpack.c.bf16 %v1733, %v1733
      %v1885 = vpack.c.bf16 %v1734, %v1734
      %v1886 = vpack.c.bf16 %v1735, %v1735
      %v1887 = vpack.c.bf16 %v1736, %v1736
      %v1888 = vpack.c.bf16 %v1737, %v1737
      %v1889 = vpack.c.bf16 %v1738, %v1738
      %v1890 = vpack.c.bf16 %v1739, %v1739
      %v1891 = vpack.c.bf16 %v1740, %v1740
      %v1892 = vpack.c.bf16 %v1741, %v1741
      %v1893 = vpack.c.bf16 %v1588, %v1588
      %v1894 = vpack.c.bf16 %v1589, %v1589
      %v1895 = vpack.c.bf16 %v1590, %v1590
      %v1896 = vpack.c.bf16 %v1591, %v1591
      %v1897 = vpack.c.bf16 %v1592, %v1592
      %v1898 = vpack.c.bf16 %v1593, %v1593
      %v1899 = vpack.c.bf16 %v1594, %v1594
      %v1900 = vpack.c.bf16 %v1595, %v1595
      %v1901 = vpack.c.bf16 %v1596, %v1596
      %v1902 = vpack.c.bf16 %v1597, %v1597
      %v1903 = vpack.c.bf16 %v1598, %v1598
      %v1904 = vpack.c.bf16 %v1599, %v1599
      %v1905 = vpack.c.bf16 %v1600, %v1600
      %v1906 = vpack.c.bf16 %v1601, %v1601
      %v1907 = vpack.c.bf16 %v1602, %v1602
      %v1908 = vpack.c.bf16 %v1603, %v1603
      %v1909 = vpack.c.bf16 %v1604, %v1604
      %v1910 = vpack.c.bf16 %v1605, %v1605
      %v1911 = vpack.c.bf16 %v1606, %v1606
      %v1912 = vpack.c.bf16 %v1607, %v1607
      %v1913 = vpack.c.bf16 %v1608, %v1608
      %v1914 = vpack.c.bf16 %v1609, %v1609
      %v1915 = vpack.c.bf16 %v1610, %v1610
      %v1916 = vpack.c.bf16 %v1611, %v1611
      %v1917 = vpack.c.bf16 %v1612, %v1612
      %v1918 = vpack.c.bf16 %v1613, %v1613
      %v1919 = vpack.c.bf16 %v1614, %v1614
      %v1920 = vpack.c.bf16 %v1615, %v1615
      %v1921 = vpack.c.bf16 %v1616, %v1616
      %v1922 = vpack.c.bf16 %v1617, %v1617
      %v1923 = vpack.c.bf16 %v1618, %v1618
      %v1924 = vpack.c.bf16 %v1619, %v1619
      %v1925 = vpack.c.bf16 %v1620, %v1620
      %v1926 = vpack.c.bf16 %v1621, %v1621
      %v1927 = vpack.c.bf16 %v1622, %v1622
      %v1928 = vpack.c.bf16 %v1623, %v1623
      %v1929 = vpack.c.bf16 %v1821, %v1821
      %v1930 = vpack.c.bf16 %v1822, %v1822
      %v1931 = vpack.c.bf16 %v1823, %v1823
      %v1932 = vpack.c.bf16 %v1824, %v1824
      %v1933 = vpack.c.bf16 %v1825, %v1825
      %v1934 = vpack.c.bf16 %v1826, %v1826
      %v1935 = vpack.c.bf16 %v1827, %v1827
      %v1936 = vpack.c.bf16 %v1828, %v1828
      %v1937 = vpack.c.bf16 %v1829, %v1829
      %v1938 = vpack.c.bf16 %v1830, %v1830
      %v1939 = vpack.c.bf16 %v1831, %v1831
      %v1940 = vpack.c.bf16 %v1832, %v1832
      %v1941 = vpack.c.bf16 %v1833, %v1833
      %v1942 = vpack.c.bf16 %v1834, %v1834
      %v1943 = vpack.c.bf16 %v1835, %v1835
      %v1944 = vpack.c.bf16 %v1836, %v1836
      %v1945 = vpack.c.bf16 %v1837, %v1837
      %v1946 = vpack.c.bf16 %v1838, %v1838
      %v1947 = vpack.c.bf16 %v1839, %v1839
      %v1948 = vpack.c.bf16 %v1840, %v1840
      %v1949 = vpack.c.bf16 %v1841, %v1841
      %v1950 = vpack.c.bf16 %v1842, %v1842
      %v1951 = vpack.c.bf16 %v1843, %v1843
      %v1952 = vpack.c.bf16 %v1844, %v1844
      %v1953 = vpack.c.bf16 %v1845, %v1845
      %v1954 = vpack.c.bf16 %v1846, %v1846
      %v1955 = vpack.c.bf16 %v1847, %v1847
      %v1956 = vpack.c.bf16 %v1848, %v1848
      %v1957 = vpack.c.bf16 %v1849, %v1849
      %v1958 = vpack.c.bf16 %v1850, %v1850
      %v1959 = vpack.c.bf16 %v1851, %v1851
      %v1960 = vpack.c.bf16 %v1852, %v1852
      %v1961 = vpack.c.bf16 %v1853, %v1853
      %v1962 = vpack.c.bf16 %v1854, %v1854
      %v1963 = vpack.c.bf16 %v1855, %v1855
      %v1964 = vpack.c.bf16 %v1856, %v1856
      %v1965 = vld [vmem:[%s4] sm:$0xf]
      %v1966 = vld [vmem:[%s4 + $0x4] sm:$0xf]
      %v1967 = vld [vmem:[%s4 + $0x8] sm:$0xf]
      %v1968 = vld [vmem:[%s4 + $0xc] sm:$0xf]
      %v1969 = vld [vmem:[%s4 + $0x10] sm:$0xf]
      %v1970 = vld [vmem:[%s4 + $0x14] sm:$0xf]
      %v1971 = vld [vmem:[%s4 + $0x18] sm:$0xf]
      %v1972 = vld [vmem:[%s4 + $0x1c] sm:$0xf]
      %v1973 = vld [vmem:[%s4 + $0x20] sm:$0xf]
      %v1974 = vld [vmem:[%s4 + $0x24] sm:$0xf]
      %v1975 = vld [vmem:[%s4 + $0x28] sm:$0xf]
      %v1976 = vld [vmem:[%s4 + $0x2c] sm:$0xf]
      %v1977 = vld [vmem:[%s4 + $0x30] sm:$0xf]
      %v1978 = vld [vmem:[%s4 + $0x34] sm:$0xf]
      %v1979 = vld [vmem:[%s4 + $0x38] sm:$0xf]
      %v1980 = vld [vmem:[%s4 + $0x3c] sm:$0xf]
      %v2013 = vunpack.c.l.b16 %v1857
      %v2014 = vunpack.c.l.b16 %v1858
      %v2015 = vunpack.c.l.b16 %v1859
      %v2016 = vunpack.c.l.b16 %v1860
      %v2017 = vunpack.c.l.b16 %v1861
      %v2018 = vunpack.c.l.b16 %v1862
      %v2019 = vunpack.c.l.b16 %v1863
      %v2020 = vunpack.c.l.b16 %v1864
      %v2021 = vunpack.c.l.b16 %v1865
      %v2022 = vunpack.c.l.b16 %v1866
      %v2023 = vunpack.c.l.b16 %v1867
      %v2024 = vunpack.c.l.b16 %v1868
      %v2025 = vunpack.c.l.b16 %v1869
      %v2026 = vunpack.c.l.b16 %v1870
      %v2027 = vunpack.c.l.b16 %v1871
      %v2028 = vunpack.c.l.b16 %v1872
      %v2029 = vunpack.c.l.b16 %v1873
      %v2030 = vunpack.c.l.b16 %v1874
      %v2031 = vunpack.c.l.b16 %v1875
      %v2032 = vunpack.c.l.b16 %v1876
      %v2033 = vunpack.c.l.b16 %v1877
      %v2034 = vunpack.c.l.b16 %v1878
      %v2035 = vunpack.c.l.b16 %v1879
      %v2036 = vunpack.c.l.b16 %v1880
      %v2037 = vunpack.c.l.b16 %v1881
      %v2038 = vunpack.c.l.b16 %v1882
      %v2039 = vunpack.c.l.b16 %v1883
      %v2040 = vunpack.c.l.b16 %v1884
      %v2041 = vunpack.c.l.b16 %v1885
      %v2042 = vunpack.c.l.b16 %v1886
      %v2043 = vunpack.c.l.b16 %v1887
      %v2044 = vunpack.c.l.b16 %v1888
      %v2045 = vpack.c.b16 %v2014, %v2013
      %v2046 = vpack.c.b16 %v2016, %v2015
      %v2047 = vpack.c.b16 %v2018, %v2017
      %v2048 = vpack.c.b16 %v2020, %v2019
      %v2049 = vpack.c.b16 %v2022, %v2021
      %v2050 = vpack.c.b16 %v2024, %v2023
      %v2051 = vpack.c.b16 %v2026, %v2025
      %v2052 = vpack.c.b16 %v2028, %v2027
      %v2053 = vpack.c.b16 %v2030, %v2029
      %v2054 = vpack.c.b16 %v2032, %v2031
      %v2055 = vpack.c.b16 %v2034, %v2033
      %v2056 = vpack.c.b16 %v2036, %v2035
      %v2057 = vpack.c.b16 %v2038, %v2037
      %v2058 = vpack.c.b16 %v2040, %v2039
      %v2059 = vpack.c.b16 %v2042, %v2041
      %v2060 = vpack.c.b16 %v2044, %v2043
      %v2093 = vunpack.c.l.b16 %v1965
      %v2094 = vunpack.c.l.b16 %v1966
      %v2095 = vunpack.c.l.b16 %v1967
      %v2096 = vunpack.c.l.b16 %v1968
      %v2097 = vunpack.c.l.b16 %v1969
      %v2098 = vunpack.c.l.b16 %v1970
      %v2099 = vunpack.c.l.b16 %v1971
      %v2100 = vunpack.c.l.b16 %v1972
      %v2101 = vunpack.c.l.b16 %v1973
      %v2102 = vunpack.c.l.b16 %v1974
      %v2103 = vunpack.c.l.b16 %v1975
      %v2104 = vunpack.c.l.b16 %v1976
      %v2105 = vunpack.c.l.b16 %v1977
      %v2106 = vunpack.c.l.b16 %v1978
      %v2107 = vunpack.c.l.b16 %v1979
      %v2108 = vunpack.c.l.b16 %v1980
      %v2109 = vpack.c.b16 %v2094, %v2093
      %v2110 = vpack.c.b16 %v2096, %v2095
      %v2111 = vpack.c.b16 %v2098, %v2097
      %v2112 = vpack.c.b16 %v2100, %v2099
      %v2113 = vpack.c.b16 %v2102, %v2101
      %v2114 = vpack.c.b16 %v2104, %v2103
      %v2115 = vpack.c.b16 %v2106, %v2105
      %v2116 = vpack.c.b16 %v2108, %v2107
      %2125 = vmatpush.bf16.msra.mxu0 %v2116
      %2126 = vmatpush.bf16.msra.mxu0 %v2115
      %2127 = vmatpush.bf16.msra.mxu0 %v2114
      %2128 = vmatpush.bf16.msra.mxu0 %v2113
      %2129 = vmatpush.bf16.msra.mxu0 %v2112
      %2130 = vmatpush.bf16.msra.mxu0 %v2111
      %2131 = vmatpush.bf16.msra.mxu0 %v2110
      %2132 = vmatpush.bf16.msra.mxu0 %v2109
      %2133 = vmatmul.bf16.gmra.mxu0 %v2045
      %v2134 = vpop.f32.mrf.mxu0
      %v2135 = vadd.f32 0.0, %v2134
      %v2136 = vpop.f32.mrf.mxu0
      %v2137 = vadd.f32 0.0, %v2136
      %2138 = vmatmul.bf16.gmra.mxu0 %v2046
      %v2139 = vpop.f32.mrf.mxu0
      %v2140 = vadd.f32 0.0, %v2139
      %v2141 = vpop.f32.mrf.mxu0
      %v2142 = vadd.f32 0.0, %v2141
      %2143 = vmatmul.bf16.gmra.mxu0 %v2047
      %v2144 = vpop.f32.mrf.mxu0
      %v2145 = vadd.f32 0.0, %v2144
      %v2146 = vpop.f32.mrf.mxu0
      %v2147 = vadd.f32 0.0, %v2146
      %2148 = vmatmul.bf16.gmra.mxu0 %v2048
      %v2149 = vpop.f32.mrf.mxu0
      %v2150 = vadd.f32 0.0, %v2149
      %v2151 = vpop.f32.mrf.mxu0
      %v2152 = vadd.f32 0.0, %v2151
      %2153 = vmatmul.bf16.gmra.mxu0 %v2049
      %v2154 = vpop.f32.mrf.mxu0
      %v2155 = vadd.f32 0.0, %v2154
      %v2156 = vpop.f32.mrf.mxu0
      %v2157 = vadd.f32 0.0, %v2156
      %2158 = vmatmul.bf16.gmra.mxu0 %v2050
      %v2159 = vpop.f32.mrf.mxu0
      %v2160 = vadd.f32 0.0, %v2159
      %v2161 = vpop.f32.mrf.mxu0
      %v2162 = vadd.f32 0.0, %v2161
      %2163 = vmatmul.bf16.gmra.mxu0 %v2051
      %v2164 = vpop.f32.mrf.mxu0
      %v2165 = vadd.f32 0.0, %v2164
      %v2166 = vpop.f32.mrf.mxu0
      %v2167 = vadd.f32 0.0, %v2166
      %2168 = vmatmul.bf16.gmra.mxu0 %v2052
      %v2169 = vpop.f32.mrf.mxu0
      %v2170 = vadd.f32 0.0, %v2169
      %v2171 = vpop.f32.mrf.mxu0
      %v2172 = vadd.f32 0.0, %v2171
      %2173 = vmatmul.bf16.gmra.mxu0 %v2053
      %v2174 = vpop.f32.mrf.mxu0
      %v2175 = vadd.f32 0.0, %v2174
      %v2176 = vpop.f32.mrf.mxu0
      %v2177 = vadd.f32 0.0, %v2176
      %2178 = vmatmul.bf16.gmra.mxu0 %v2054
      %v2179 = vpop.f32.mrf.mxu0
      %v2180 = vadd.f32 0.0, %v2179
      %v2181 = vpop.f32.mrf.mxu0
      %v2182 = vadd.f32 0.0, %v2181
      %2183 = vmatmul.bf16.gmra.mxu0 %v2055
      %v2184 = vpop.f32.mrf.mxu0
      %v2185 = vadd.f32 0.0, %v2184
      %v2186 = vpop.f32.mrf.mxu0
      %v2187 = vadd.f32 0.0, %v2186
      %2188 = vmatmul.bf16.gmra.mxu0 %v2056
      %v2189 = vpop.f32.mrf.mxu0
      %v2190 = vadd.f32 0.0, %v2189
      %v2191 = vpop.f32.mrf.mxu0
      %v2192 = vadd.f32 0.0, %v2191
      %2193 = vmatmul.bf16.gmra.mxu0 %v2057
      %v2194 = vpop.f32.mrf.mxu0
      %v2195 = vadd.f32 0.0, %v2194
      %v2196 = vpop.f32.mrf.mxu0
      %v2197 = vadd.f32 0.0, %v2196
      %2198 = vmatmul.bf16.gmra.mxu0 %v2058
      %v2199 = vpop.f32.mrf.mxu0
      %v2200 = vadd.f32 0.0, %v2199
      %v2201 = vpop.f32.mrf.mxu0
      %v2202 = vadd.f32 0.0, %v2201
      %2203 = vmatmul.bf16.gmra.mxu0 %v2059
      %v2204 = vpop.f32.mrf.mxu0
      %v2205 = vadd.f32 0.0, %v2204
      %v2206 = vpop.f32.mrf.mxu0
      %v2207 = vadd.f32 0.0, %v2206
      %2208 = vmatmul.bf16.gmra.mxu0 %v2060
      %v2209 = vpop.f32.mrf.mxu0
      %v2210 = vadd.f32 0.0, %v2209
      %v2211 = vpop.f32.mrf.mxu0
      %v2212 = vadd.f32 0.0, %v2211
      %2213 = vdwg.mxu0
      %2214 = vst [vmem:[#allocation3] sm:$0xff] %v2135
      %2215 = vst [vmem:[#allocation3 + $0x8] sm:$0xff] %v2137
      %2216 = vst [vmem:[#allocation3 + $0x10] sm:$0xff] %v2140
      %2217 = vst [vmem:[#allocation3 + $0x18] sm:$0xff] %v2142
      %2218 = vst [vmem:[#allocation3 + $0x20] sm:$0xff] %v2145
      %2219 = vst [vmem:[#allocation3 + $0x28] sm:$0xff] %v2147
      %2220 = vst [vmem:[#allocation3 + $0x30] sm:$0xff] %v2150
      %2221 = vst [vmem:[#allocation3 + $0x38] sm:$0xff] %v2152
      %2222 = vst [vmem:[#allocation3 + $0x40] sm:$0xff] %v2155
      %2223 = vst [vmem:[#allocation3 + $0x48] sm:$0xff] %v2157
      %2224 = vst [vmem:[#allocation3 + $0x50] sm:$0xff] %v2160
      %2225 = vst [vmem:[#allocation3 + $0x58] sm:$0xff] %v2162
      %2226 = vst [vmem:[#allocation3 + $0x60] sm:$0xff] %v2165
      %2227 = vst [vmem:[#allocation3 + $0x68] sm:$0xff] %v2167
      %2228 = vst [vmem:[#allocation3 + $0x70] sm:$0xff] %v2170
      %2229 = vst [vmem:[#allocation3 + $0x78] sm:$0xff] %v2172
      %2230 = vst [vmem:[#allocation3 + $0x80] sm:$0xff] %v2175
      %2231 = vst [vmem:[#allocation3 + $0x88] sm:$0xff] %v2177
      %2232 = vst [vmem:[#allocation3 + $0x90] sm:$0xff] %v2180
      %2233 = vst [vmem:[#allocation3 + $0x98] sm:$0xff] %v2182
      %2234 = vst [vmem:[#allocation3 + $0xa0] sm:$0xff] %v2185
      %2235 = vst [vmem:[#allocation3 + $0xa8] sm:$0xff] %v2187
      %2236 = vst [vmem:[#allocation3 + $0xb0] sm:$0xff] %v2190
      %2237 = vst [vmem:[#allocation3 + $0xb8] sm:$0xff] %v2192
      %2238 = vst [vmem:[#allocation3 + $0xc0] sm:$0xff] %v2195
      %2239 = vst [vmem:[#allocation3 + $0xc8] sm:$0xff] %v2197
      %2240 = vst [vmem:[#allocation3 + $0xd0] sm:$0xff] %v2200
      %2241 = vst [vmem:[#allocation3 + $0xd8] sm:$0xff] %v2202
      %2242 = vst [vmem:[#allocation3 + $0xe0] sm:$0xff] %v2205
      %2243 = vst [vmem:[#allocation3 + $0xe8] sm:$0xff] %v2207
      %2244 = vst [vmem:[#allocation3 + $0xf0] sm:$0xff] %v2210
      %2245 = vst [vmem:[#allocation3 + $0xf8] sm:$0xff] %v2212
      %s2246 = scalar_lea.vmem %s4, 64
      %v2247 = vld [vmem:[%s2246] sm:$0xf]
      %v2248 = vld [vmem:[%s2246 + $0x4] sm:$0xf]
      %v2249 = vld [vmem:[%s2246 + $0x8] sm:$0xf]
      %v2250 = vld [vmem:[%s2246 + $0xc] sm:$0xf]
      %v2251 = vld [vmem:[%s2246 + $0x10] sm:$0xf]
      %v2252 = vld [vmem:[%s2246 + $0x14] sm:$0xf]
      %v2253 = vld [vmem:[%s2246 + $0x18] sm:$0xf]
      %v2254 = vld [vmem:[%s2246 + $0x1c] sm:$0xf]
      %v2255 = vld [vmem:[%s2246 + $0x20] sm:$0xf]
      %v2256 = vld [vmem:[%s2246 + $0x24] sm:$0xf]
      %v2257 = vld [vmem:[%s2246 + $0x28] sm:$0xf]
      %v2258 = vld [vmem:[%s2246 + $0x2c] sm:$0xf]
      %v2259 = vld [vmem:[%s2246 + $0x30] sm:$0xf]
      %v2260 = vld [vmem:[%s2246 + $0x34] sm:$0xf]
      %v2261 = vld [vmem:[%s2246 + $0x38] sm:$0xf]
      %v2262 = vld [vmem:[%s2246 + $0x3c] sm:$0xf]
      %v2295 = vunpack.c.l.b16 %v1893
      %v2296 = vunpack.c.l.b16 %v1894
      %v2297 = vunpack.c.l.b16 %v1895
      %v2298 = vunpack.c.l.b16 %v1896
      %v2299 = vunpack.c.l.b16 %v1897
      %v2300 = vunpack.c.l.b16 %v1898
      %v2301 = vunpack.c.l.b16 %v1899
      %v2302 = vunpack.c.l.b16 %v1900
      %v2303 = vunpack.c.l.b16 %v1901
      %v2304 = vunpack.c.l.b16 %v1902
      %v2305 = vunpack.c.l.b16 %v1903
      %v2306 = vunpack.c.l.b16 %v1904
      %v2307 = vunpack.c.l.b16 %v1905
      %v2308 = vunpack.c.l.b16 %v1906
      %v2309 = vunpack.c.l.b16 %v1907
      %v2310 = vunpack.c.l.b16 %v1908
      %v2311 = vunpack.c.l.b16 %v1909
      %v2312 = vunpack.c.l.b16 %v1910
      %v2313 = vunpack.c.l.b16 %v1911
      %v2314 = vunpack.c.l.b16 %v1912
      %v2315 = vunpack.c.l.b16 %v1913
      %v2316 = vunpack.c.l.b16 %v1914
      %v2317 = vunpack.c.l.b16 %v1915
      %v2318 = vunpack.c.l.b16 %v1916
      %v2319 = vunpack.c.l.b16 %v1917
      %v2320 = vunpack.c.l.b16 %v1918
      %v2321 = vunpack.c.l.b16 %v1919
      %v2322 = vunpack.c.l.b16 %v1920
      %v2323 = vunpack.c.l.b16 %v1921
      %v2324 = vunpack.c.l.b16 %v1922
      %v2325 = vunpack.c.l.b16 %v1923
      %v2326 = vunpack.c.l.b16 %v1924
      %v2327 = vpack.c.b16 %v2296, %v2295
      %v2328 = vpack.c.b16 %v2298, %v2297
      %v2329 = vpack.c.b16 %v2300, %v2299
      %v2330 = vpack.c.b16 %v2302, %v2301
      %v2331 = vpack.c.b16 %v2304, %v2303
      %v2332 = vpack.c.b16 %v2306, %v2305
      %v2333 = vpack.c.b16 %v2308, %v2307
      %v2334 = vpack.c.b16 %v2310, %v2309
      %v2335 = vpack.c.b16 %v2312, %v2311
      %v2336 = vpack.c.b16 %v2314, %v2313
      %v2337 = vpack.c.b16 %v2316, %v2315
      %v2338 = vpack.c.b16 %v2318, %v2317
      %v2339 = vpack.c.b16 %v2320, %v2319
      %v2340 = vpack.c.b16 %v2322, %v2321
      %v2341 = vpack.c.b16 %v2324, %v2323
      %v2342 = vpack.c.b16 %v2326, %v2325
      %v2375 = vunpack.c.l.b16 %v2247
      %v2376 = vunpack.c.l.b16 %v2248
      %v2377 = vunpack.c.l.b16 %v2249
      %v2378 = vunpack.c.l.b16 %v2250
      %v2379 = vunpack.c.l.b16 %v2251
      %v2380 = vunpack.c.l.b16 %v2252
      %v2381 = vunpack.c.l.b16 %v2253
      %v2382 = vunpack.c.l.b16 %v2254
      %v2383 = vunpack.c.l.b16 %v2255
      %v2384 = vunpack.c.l.b16 %v2256
      %v2385 = vunpack.c.l.b16 %v2257
      %v2386 = vunpack.c.l.b16 %v2258
      %v2387 = vunpack.c.l.b16 %v2259
      %v2388 = vunpack.c.l.b16 %v2260
      %v2389 = vunpack.c.l.b16 %v2261
      %v2390 = vunpack.c.l.b16 %v2262
      %v2391 = vpack.c.b16 %v2376, %v2375
      %v2392 = vpack.c.b16 %v2378, %v2377
      %v2393 = vpack.c.b16 %v2380, %v2379
      %v2394 = vpack.c.b16 %v2382, %v2381
      %v2395 = vpack.c.b16 %v2384, %v2383
      %v2396 = vpack.c.b16 %v2386, %v2385
      %v2397 = vpack.c.b16 %v2388, %v2387
      %v2398 = vpack.c.b16 %v2390, %v2389
      %2407 = vmatpush.bf16.msra.mxu0 %v2398
      %2408 = vmatpush.bf16.msra.mxu0 %v2397
      %2409 = vmatpush.bf16.msra.mxu0 %v2396
      %2410 = vmatpush.bf16.msra.mxu0 %v2395
      %2411 = vmatpush.bf16.msra.mxu0 %v2394
      %2412 = vmatpush.bf16.msra.mxu0 %v2393
      %2413 = vmatpush.bf16.msra.mxu0 %v2392
      %2414 = vmatpush.bf16.msra.mxu0 %v2391
      %2415 = vmatmul.bf16.gmra.mxu0 %v2327
      %v2416 = vpop.f32.mrf.mxu0
      %v2417 = vadd.f32 0.0, %v2416
      %v2418 = vpop.f32.mrf.mxu0
      %v2419 = vadd.f32 0.0, %v2418
      %2420 = vmatmul.bf16.gmra.mxu0 %v2328
      %v2421 = vpop.f32.mrf.mxu0
      %v2422 = vadd.f32 0.0, %v2421
      %v2423 = vpop.f32.mrf.mxu0
      %v2424 = vadd.f32 0.0, %v2423
      %2425 = vmatmul.bf16.gmra.mxu0 %v2329
      %v2426 = vpop.f32.mrf.mxu0
      %v2427 = vadd.f32 0.0, %v2426
      %v2428 = vpop.f32.mrf.mxu0
      %v2429 = vadd.f32 0.0, %v2428
      %2430 = vmatmul.bf16.gmra.mxu0 %v2330
      %v2431 = vpop.f32.mrf.mxu0
      %v2432 = vadd.f32 0.0, %v2431
      %v2433 = vpop.f32.mrf.mxu0
      %v2434 = vadd.f32 0.0, %v2433
      %2435 = vmatmul.bf16.gmra.mxu0 %v2331
      %v2436 = vpop.f32.mrf.mxu0
      %v2437 = vadd.f32 0.0, %v2436
      %v2438 = vpop.f32.mrf.mxu0
      %v2439 = vadd.f32 0.0, %v2438
      %2440 = vmatmul.bf16.gmra.mxu0 %v2332
      %v2441 = vpop.f32.mrf.mxu0
      %v2442 = vadd.f32 0.0, %v2441
      %v2443 = vpop.f32.mrf.mxu0
      %v2444 = vadd.f32 0.0, %v2443
      %2445 = vmatmul.bf16.gmra.mxu0 %v2333
      %v2446 = vpop.f32.mrf.mxu0
      %v2447 = vadd.f32 0.0, %v2446
      %v2448 = vpop.f32.mrf.mxu0
      %v2449 = vadd.f32 0.0, %v2448
      %2450 = vmatmul.bf16.gmra.mxu0 %v2334
      %v2451 = vpop.f32.mrf.mxu0
      %v2452 = vadd.f32 0.0, %v2451
      %v2453 = vpop.f32.mrf.mxu0
      %v2454 = vadd.f32 0.0, %v2453
      %2455 = vmatmul.bf16.gmra.mxu0 %v2335
      %v2456 = vpop.f32.mrf.mxu0
      %v2457 = vadd.f32 0.0, %v2456
      %v2458 = vpop.f32.mrf.mxu0
      %v2459 = vadd.f32 0.0, %v2458
      %2460 = vmatmul.bf16.gmra.mxu0 %v2336
      %v2461 = vpop.f32.mrf.mxu0
      %v2462 = vadd.f32 0.0, %v2461
      %v2463 = vpop.f32.mrf.mxu0
      %v2464 = vadd.f32 0.0, %v2463
      %2465 = vmatmul.bf16.gmra.mxu0 %v2337
      %v2466 = vpop.f32.mrf.mxu0
      %v2467 = vadd.f32 0.0, %v2466
      %v2468 = vpop.f32.mrf.mxu0
      %v2469 = vadd.f32 0.0, %v2468
      %2470 = vmatmul.bf16.gmra.mxu0 %v2338
      %v2471 = vpop.f32.mrf.mxu0
      %v2472 = vadd.f32 0.0, %v2471
      %v2473 = vpop.f32.mrf.mxu0
      %v2474 = vadd.f32 0.0, %v2473
      %2475 = vmatmul.bf16.gmra.mxu0 %v2339
      %v2476 = vpop.f32.mrf.mxu0
      %v2477 = vadd.f32 0.0, %v2476
      %v2478 = vpop.f32.mrf.mxu0
      %v2479 = vadd.f32 0.0, %v2478
      %2480 = vmatmul.bf16.gmra.mxu0 %v2340
      %v2481 = vpop.f32.mrf.mxu0
      %v2482 = vadd.f32 0.0, %v2481
      %v2483 = vpop.f32.mrf.mxu0
      %v2484 = vadd.f32 0.0, %v2483
      %2485 = vmatmul.bf16.gmra.mxu0 %v2341
      %v2486 = vpop.f32.mrf.mxu0
      %v2487 = vadd.f32 0.0, %v2486
      %v2488 = vpop.f32.mrf.mxu0
      %v2489 = vadd.f32 0.0, %v2488
      %2490 = vmatmul.bf16.gmra.mxu0 %v2342
      %v2491 = vpop.f32.mrf.mxu0
      %v2492 = vadd.f32 0.0, %v2491
      %v2493 = vpop.f32.mrf.mxu0
      %v2494 = vadd.f32 0.0, %v2493
      %2495 = vdwg.mxu0
      %v2496 = vld [vmem:[#allocation3] sm:$0xff]
      %v2497 = vld [vmem:[#allocation3 + $0x8] sm:$0xff]
      %v2498 = vld [vmem:[#allocation3 + $0x10] sm:$0xff]
      %v2499 = vld [vmem:[#allocation3 + $0x18] sm:$0xff]
      %v2500 = vld [vmem:[#allocation3 + $0x20] sm:$0xff]
      %v2501 = vld [vmem:[#allocation3 + $0x28] sm:$0xff]
      %v2502 = vld [vmem:[#allocation3 + $0x30] sm:$0xff]
      %v2503 = vld [vmem:[#allocation3 + $0x38] sm:$0xff]
      %v2504 = vld [vmem:[#allocation3 + $0x40] sm:$0xff]
      %v2505 = vld [vmem:[#allocation3 + $0x48] sm:$0xff]
      %v2506 = vld [vmem:[#allocation3 + $0x50] sm:$0xff]
      %v2507 = vld [vmem:[#allocation3 + $0x58] sm:$0xff]
      %v2508 = vld [vmem:[#allocation3 + $0x60] sm:$0xff]
      %v2509 = vld [vmem:[#allocation3 + $0x68] sm:$0xff]
      %v2510 = vld [vmem:[#allocation3 + $0x70] sm:$0xff]
      %v2511 = vld [vmem:[#allocation3 + $0x78] sm:$0xff]
      %v2512 = vld [vmem:[#allocation3 + $0x80] sm:$0xff]
      %v2513 = vld [vmem:[#allocation3 + $0x88] sm:$0xff]
      %v2514 = vld [vmem:[#allocation3 + $0x90] sm:$0xff]
      %v2515 = vld [vmem:[#allocation3 + $0x98] sm:$0xff]
      %v2516 = vld [vmem:[#allocation3 + $0xa0] sm:$0xff]
      %v2517 = vld [vmem:[#allocation3 + $0xa8] sm:$0xff]
      %v2518 = vld [vmem:[#allocation3 + $0xb0] sm:$0xff]
      %v2519 = vld [vmem:[#allocation3 + $0xb8] sm:$0xff]
      %v2520 = vld [vmem:[#allocation3 + $0xc0] sm:$0xff]
      %v2521 = vld [vmem:[#allocation3 + $0xc8] sm:$0xff]
      %v2522 = vld [vmem:[#allocation3 + $0xd0] sm:$0xff]
      %v2523 = vld [vmem:[#allocation3 + $0xd8] sm:$0xff]
      %v2524 = vld [vmem:[#allocation3 + $0xe0] sm:$0xff]
      %v2525 = vld [vmem:[#allocation3 + $0xe8] sm:$0xff]
      %v2526 = vld [vmem:[#allocation3 + $0xf0] sm:$0xff]
      %v2527 = vld [vmem:[#allocation3 + $0xf8] sm:$0xff]
      %v2528 = vadd.f32 %v2496, %v2417
      %v2529 = vadd.f32 %v2497, %v2419
      %v2530 = vadd.f32 %v2498, %v2422
      %v2531 = vadd.f32 %v2499, %v2424
      %v2532 = vadd.f32 %v2500, %v2427
      %v2533 = vadd.f32 %v2501, %v2429
      %v2534 = vadd.f32 %v2502, %v2432
      %v2535 = vadd.f32 %v2503, %v2434
      %v2536 = vadd.f32 %v2504, %v2437
      %v2537 = vadd.f32 %v2505, %v2439
      %v2538 = vadd.f32 %v2506, %v2442
      %v2539 = vadd.f32 %v2507, %v2444
      %v2540 = vadd.f32 %v2508, %v2447
      %v2541 = vadd.f32 %v2509, %v2449
      %v2542 = vadd.f32 %v2510, %v2452
      %v2543 = vadd.f32 %v2511, %v2454
      %v2544 = vadd.f32 %v2512, %v2457
      %v2545 = vadd.f32 %v2513, %v2459
      %v2546 = vadd.f32 %v2514, %v2462
      %v2547 = vadd.f32 %v2515, %v2464
      %v2548 = vadd.f32 %v2516, %v2467
      %v2549 = vadd.f32 %v2517, %v2469
      %v2550 = vadd.f32 %v2518, %v2472
      %v2551 = vadd.f32 %v2519, %v2474
      %v2552 = vadd.f32 %v2520, %v2477
      %v2553 = vadd.f32 %v2521, %v2479
      %v2554 = vadd.f32 %v2522, %v2482
      %v2555 = vadd.f32 %v2523, %v2484
      %v2556 = vadd.f32 %v2524, %v2487
      %v2557 = vadd.f32 %v2525, %v2489
      %v2558 = vadd.f32 %v2526, %v2492
      %v2559 = vadd.f32 %v2527, %v2494
      %2560 = vst [vmem:[#allocation3] sm:$0xff] %v2528
      %2561 = vst [vmem:[#allocation3 + $0x8] sm:$0xff] %v2529
      %2562 = vst [vmem:[#allocation3 + $0x10] sm:$0xff] %v2530
      %2563 = vst [vmem:[#allocation3 + $0x18] sm:$0xff] %v2531
      %2564 = vst [vmem:[#allocation3 + $0x20] sm:$0xff] %v2532
      %2565 = vst [vmem:[#allocation3 + $0x28] sm:$0xff] %v2533
      %2566 = vst [vmem:[#allocation3 + $0x30] sm:$0xff] %v2534
      %2567 = vst [vmem:[#allocation3 + $0x38] sm:$0xff] %v2535
      %2568 = vst [vmem:[#allocation3 + $0x40] sm:$0xff] %v2536
      %2569 = vst [vmem:[#allocation3 + $0x48] sm:$0xff] %v2537
      %2570 = vst [vmem:[#allocation3 + $0x50] sm:$0xff] %v2538
      %2571 = vst [vmem:[#allocation3 + $0x58] sm:$0xff] %v2539
      %2572 = vst [vmem:[#allocation3 + $0x60] sm:$0xff] %v2540
      %2573 = vst [vmem:[#allocation3 + $0x68] sm:$0xff] %v2541
      %2574 = vst [vmem:[#allocation3 + $0x70] sm:$0xff] %v2542
      %2575 = vst [vmem:[#allocation3 + $0x78] sm:$0xff] %v2543
      %2576 = vst [vmem:[#allocation3 + $0x80] sm:$0xff] %v2544
      %2577 = vst [vmem:[#allocation3 + $0x88] sm:$0xff] %v2545
      %2578 = vst [vmem:[#allocation3 + $0x90] sm:$0xff] %v2546
      %2579 = vst [vmem:[#allocation3 + $0x98] sm:$0xff] %v2547
      %2580 = vst [vmem:[#allocation3 + $0xa0] sm:$0xff] %v2548
      %2581 = vst [vmem:[#allocation3 + $0xa8] sm:$0xff] %v2549
      %2582 = vst [vmem:[#allocation3 + $0xb0] sm:$0xff] %v2550
      %2583 = vst [vmem:[#allocation3 + $0xb8] sm:$0xff] %v2551
      %2584 = vst [vmem:[#allocation3 + $0xc0] sm:$0xff] %v2552
      %2585 = vst [vmem:[#allocation3 + $0xc8] sm:$0xff] %v2553
      %2586 = vst [vmem:[#allocation3 + $0xd0] sm:$0xff] %v2554
      %2587 = vst [vmem:[#allocation3 + $0xd8] sm:$0xff] %v2555
      %2588 = vst [vmem:[#allocation3 + $0xe0] sm:$0xff] %v2556
      %2589 = vst [vmem:[#allocation3 + $0xe8] sm:$0xff] %v2557
      %2590 = vst [vmem:[#allocation3 + $0xf0] sm:$0xff] %v2558
      %2591 = vst [vmem:[#allocation3 + $0xf8] sm:$0xff] %v2559
      %s2592 = scalar_lea.vmem %s4, 128
      %v2593 = vld [vmem:[%s2592] sm:$0xf]
      %v2594 = vld [vmem:[%s2592 + $0x4] sm:$0xf]
      %v2595 = vld [vmem:[%s2592 + $0x8] sm:$0xf]
      %v2596 = vld [vmem:[%s2592 + $0xc] sm:$0xf]
      %v2597 = vld [vmem:[%s2592 + $0x10] sm:$0xf]
      %v2598 = vld [vmem:[%s2592 + $0x14] sm:$0xf]
      %v2599 = vld [vmem:[%s2592 + $0x18] sm:$0xf]
      %v2600 = vld [vmem:[%s2592 + $0x1c] sm:$0xf]
      %v2601 = vld [vmem:[%s2592 + $0x20] sm:$0xf]
      %v2602 = vld [vmem:[%s2592 + $0x24] sm:$0xf]
      %v2603 = vld [vmem:[%s2592 + $0x28] sm:$0xf]
      %v2604 = vld [vmem:[%s2592 + $0x2c] sm:$0xf]
      %v2605 = vld [vmem:[%s2592 + $0x30] sm:$0xf]
      %v2606 = vld [vmem:[%s2592 + $0x34] sm:$0xf]
      %v2607 = vld [vmem:[%s2592 + $0x38] sm:$0xf]
      %v2608 = vld [vmem:[%s2592 + $0x3c] sm:$0xf]
      %v2641 = vunpack.c.l.b16 %v1929
      %v2642 = vunpack.c.l.b16 %v1930
      %v2643 = vunpack.c.l.b16 %v1931
      %v2644 = vunpack.c.l.b16 %v1932
      %v2645 = vunpack.c.l.b16 %v1933
      %v2646 = vunpack.c.l.b16 %v1934
      %v2647 = vunpack.c.l.b16 %v1935
      %v2648 = vunpack.c.l.b16 %v1936
      %v2649 = vunpack.c.l.b16 %v1937
      %v2650 = vunpack.c.l.b16 %v1938
      %v2651 = vunpack.c.l.b16 %v1939
      %v2652 = vunpack.c.l.b16 %v1940
      %v2653 = vunpack.c.l.b16 %v1941
      %v2654 = vunpack.c.l.b16 %v1942
      %v2655 = vunpack.c.l.b16 %v1943
      %v2656 = vunpack.c.l.b16 %v1944
      %v2657 = vunpack.c.l.b16 %v1945
      %v2658 = vunpack.c.l.b16 %v1946
      %v2659 = vunpack.c.l.b16 %v1947
      %v2660 = vunpack.c.l.b16 %v1948
      %v2661 = vunpack.c.l.b16 %v1949
      %v2662 = vunpack.c.l.b16 %v1950
      %v2663 = vunpack.c.l.b16 %v1951
      %v2664 = vunpack.c.l.b16 %v1952
      %v2665 = vunpack.c.l.b16 %v1953
      %v2666 = vunpack.c.l.b16 %v1954
      %v2667 = vunpack.c.l.b16 %v1955
      %v2668 = vunpack.c.l.b16 %v1956
      %v2669 = vunpack.c.l.b16 %v1957
      %v2670 = vunpack.c.l.b16 %v1958
      %v2671 = vunpack.c.l.b16 %v1959
      %v2672 = vunpack.c.l.b16 %v1960
      %v2673 = vpack.c.b16 %v2642, %v2641
      %v2674 = vpack.c.b16 %v2644, %v2643
      %v2675 = vpack.c.b16 %v2646, %v2645
      %v2676 = vpack.c.b16 %v2648, %v2647
      %v2677 = vpack.c.b16 %v2650, %v2649
      %v2678 = vpack.c.b16 %v2652, %v2651
      %v2679 = vpack.c.b16 %v2654, %v2653
      %v2680 = vpack.c.b16 %v2656, %v2655
      %v2681 = vpack.c.b16 %v2658, %v2657
      %v2682 = vpack.c.b16 %v2660, %v2659
      %v2683 = vpack.c.b16 %v2662, %v2661
      %v2684 = vpack.c.b16 %v2664, %v2663
      %v2685 = vpack.c.b16 %v2666, %v2665
      %v2686 = vpack.c.b16 %v2668, %v2667
      %v2687 = vpack.c.b16 %v2670, %v2669
      %v2688 = vpack.c.b16 %v2672, %v2671
      %v2721 = vunpack.c.l.b16 %v2593
      %v2722 = vunpack.c.l.b16 %v2594
      %v2723 = vunpack.c.l.b16 %v2595
      %v2724 = vunpack.c.l.b16 %v2596
      %v2725 = vunpack.c.l.b16 %v2597
      %v2726 = vunpack.c.l.b16 %v2598
      %v2727 = vunpack.c.l.b16 %v2599
      %v2728 = vunpack.c.l.b16 %v2600
      %v2729 = vunpack.c.l.b16 %v2601
      %v2730 = vunpack.c.l.b16 %v2602
      %v2731 = vunpack.c.l.b16 %v2603
      %v2732 = vunpack.c.l.b16 %v2604
      %v2733 = vunpack.c.l.b16 %v2605
      %v2734 = vunpack.c.l.b16 %v2606
      %v2735 = vunpack.c.l.b16 %v2607
      %v2736 = vunpack.c.l.b16 %v2608
      %v2737 = vpack.c.b16 %v2722, %v2721
      %v2738 = vpack.c.b16 %v2724, %v2723
      %v2739 = vpack.c.b16 %v2726, %v2725
      %v2740 = vpack.c.b16 %v2728, %v2727
      %v2741 = vpack.c.b16 %v2730, %v2729
      %v2742 = vpack.c.b16 %v2732, %v2731
      %v2743 = vpack.c.b16 %v2734, %v2733
      %v2744 = vpack.c.b16 %v2736, %v2735
      %2753 = vmatpush.bf16.msra.mxu0 %v2744
      %2754 = vmatpush.bf16.msra.mxu0 %v2743
      %2755 = vmatpush.bf16.msra.mxu0 %v2742
      %2756 = vmatpush.bf16.msra.mxu0 %v2741
      %2757 = vmatpush.bf16.msra.mxu0 %v2740
      %2758 = vmatpush.bf16.msra.mxu0 %v2739
      %2759 = vmatpush.bf16.msra.mxu0 %v2738
      %2760 = vmatpush.bf16.msra.mxu0 %v2737
      %2761 = vmatmul.bf16.gmra.mxu0 %v2673
      %v2762 = vpop.f32.mrf.mxu0
      %v2763 = vadd.f32 0.0, %v2762
      %v2764 = vpop.f32.mrf.mxu0
      %v2765 = vadd.f32 0.0, %v2764
      %2766 = vmatmul.bf16.gmra.mxu0 %v2674
      %v2767 = vpop.f32.mrf.mxu0
      %v2768 = vadd.f32 0.0, %v2767
      %v2769 = vpop.f32.mrf.mxu0
      %v2770 = vadd.f32 0.0, %v2769
      %2771 = vmatmul.bf16.gmra.mxu0 %v2675
      %v2772 = vpop.f32.mrf.mxu0
      %v2773 = vadd.f32 0.0, %v2772
      %v2774 = vpop.f32.mrf.mxu0
      %v2775 = vadd.f32 0.0, %v2774
      %2776 = vmatmul.bf16.gmra.mxu0 %v2676
      %v2777 = vpop.f32.mrf.mxu0
      %v2778 = vadd.f32 0.0, %v2777
      %v2779 = vpop.f32.mrf.mxu0
      %v2780 = vadd.f32 0.0, %v2779
      %2781 = vmatmul.bf16.gmra.mxu0 %v2677
      %v2782 = vpop.f32.mrf.mxu0
      %v2783 = vadd.f32 0.0, %v2782
      %v2784 = vpop.f32.mrf.mxu0
      %v2785 = vadd.f32 0.0, %v2784
      %2786 = vmatmul.bf16.gmra.mxu0 %v2678
      %v2787 = vpop.f32.mrf.mxu0
      %v2788 = vadd.f32 0.0, %v2787
      %v2789 = vpop.f32.mrf.mxu0
      %v2790 = vadd.f32 0.0, %v2789
      %2791 = vmatmul.bf16.gmra.mxu0 %v2679
      %v2792 = vpop.f32.mrf.mxu0
      %v2793 = vadd.f32 0.0, %v2792
      %v2794 = vpop.f32.mrf.mxu0
      %v2795 = vadd.f32 0.0, %v2794
      %2796 = vmatmul.bf16.gmra.mxu0 %v2680
      %v2797 = vpop.f32.mrf.mxu0
      %v2798 = vadd.f32 0.0, %v2797
      %v2799 = vpop.f32.mrf.mxu0
      %v2800 = vadd.f32 0.0, %v2799
      %2801 = vmatmul.bf16.gmra.mxu0 %v2681
      %v2802 = vpop.f32.mrf.mxu0
      %v2803 = vadd.f32 0.0, %v2802
      %v2804 = vpop.f32.mrf.mxu0
      %v2805 = vadd.f32 0.0, %v2804
      %2806 = vmatmul.bf16.gmra.mxu0 %v2682
      %v2807 = vpop.f32.mrf.mxu0
      %v2808 = vadd.f32 0.0, %v2807
      %v2809 = vpop.f32.mrf.mxu0
      %v2810 = vadd.f32 0.0, %v2809
      %2811 = vmatmul.bf16.gmra.mxu0 %v2683
      %v2812 = vpop.f32.mrf.mxu0
      %v2813 = vadd.f32 0.0, %v2812
      %v2814 = vpop.f32.mrf.mxu0
      %v2815 = vadd.f32 0.0, %v2814
      %2816 = vmatmul.bf16.gmra.mxu0 %v2684
      %v2817 = vpop.f32.mrf.mxu0
      %v2818 = vadd.f32 0.0, %v2817
      %v2819 = vpop.f32.mrf.mxu0
      %v2820 = vadd.f32 0.0, %v2819
      %2821 = vmatmul.bf16.gmra.mxu0 %v2685
      %v2822 = vpop.f32.mrf.mxu0
      %v2823 = vadd.f32 0.0, %v2822
      %v2824 = vpop.f32.mrf.mxu0
      %v2825 = vadd.f32 0.0, %v2824
      %2826 = vmatmul.bf16.gmra.mxu0 %v2686
      %v2827 = vpop.f32.mrf.mxu0
      %v2828 = vadd.f32 0.0, %v2827
      %v2829 = vpop.f32.mrf.mxu0
      %v2830 = vadd.f32 0.0, %v2829
      %2831 = vmatmul.bf16.gmra.mxu0 %v2687
      %v2832 = vpop.f32.mrf.mxu0
      %v2833 = vadd.f32 0.0, %v2832
      %v2834 = vpop.f32.mrf.mxu0
      %v2835 = vadd.f32 0.0, %v2834
      %2836 = vmatmul.bf16.gmra.mxu0 %v2688
      %v2837 = vpop.f32.mrf.mxu0
      %v2838 = vadd.f32 0.0, %v2837
      %v2839 = vpop.f32.mrf.mxu0
      %v2840 = vadd.f32 0.0, %v2839
      %2841 = vdwg.mxu0
      %v2842 = vld [vmem:[#allocation3] sm:$0xff]
      %v2843 = vld [vmem:[#allocation3 + $0x8] sm:$0xff]
      %v2844 = vld [vmem:[#allocation3 + $0x10] sm:$0xff]
      %v2845 = vld [vmem:[#allocation3 + $0x18] sm:$0xff]
      %v2846 = vld [vmem:[#allocation3 + $0x20] sm:$0xff]
      %v2847 = vld [vmem:[#allocation3 + $0x28] sm:$0xff]
      %v2848 = vld [vmem:[#allocation3 + $0x30] sm:$0xff]
      %v2849 = vld [vmem:[#allocation3 + $0x38] sm:$0xff]
      %v2850 = vld [vmem:[#allocation3 + $0x40] sm:$0xff]
      %v2851 = vld [vmem:[#allocation3 + $0x48] sm:$0xff]
      %v2852 = vld [vmem:[#allocation3 + $0x50] sm:$0xff]
      %v2853 = vld [vmem:[#allocation3 + $0x58] sm:$0xff]
      %v2854 = vld [vmem:[#allocation3 + $0x60] sm:$0xff]
      %v2855 = vld [vmem:[#allocation3 + $0x68] sm:$0xff]
      %v2856 = vld [vmem:[#allocation3 + $0x70] sm:$0xff]
      %v2857 = vld [vmem:[#allocation3 + $0x78] sm:$0xff]
      %v2858 = vld [vmem:[#allocation3 + $0x80] sm:$0xff]
      %v2859 = vld [vmem:[#allocation3 + $0x88] sm:$0xff]
      %v2860 = vld [vmem:[#allocation3 + $0x90] sm:$0xff]
      %v2861 = vld [vmem:[#allocation3 + $0x98] sm:$0xff]
      %v2862 = vld [vmem:[#allocation3 + $0xa0] sm:$0xff]
      %v2863 = vld [vmem:[#allocation3 + $0xa8] sm:$0xff]
      %v2864 = vld [vmem:[#allocation3 + $0xb0] sm:$0xff]
      %v2865 = vld [vmem:[#allocation3 + $0xb8] sm:$0xff]
      %v2866 = vld [vmem:[#allocation3 + $0xc0] sm:$0xff]
      %v2867 = vld [vmem:[#allocation3 + $0xc8] sm:$0xff]
      %v2868 = vld [vmem:[#allocation3 + $0xd0] sm:$0xff]
      %v2869 = vld [vmem:[#allocation3 + $0xd8] sm:$0xff]
      %v2870 = vld [vmem:[#allocation3 + $0xe0] sm:$0xff]
      %v2871 = vld [vmem:[#allocation3 + $0xe8] sm:$0xff]
      %v2872 = vld [vmem:[#allocation3 + $0xf0] sm:$0xff]
      %v2873 = vld [vmem:[#allocation3 + $0xf8] sm:$0xff]
      %v2874 = vadd.f32 %v2842, %v2763
      %v2875 = vadd.f32 %v2843, %v2765
      %v2876 = vadd.f32 %v2844, %v2768
      %v2877 = vadd.f32 %v2845, %v2770
      %v2878 = vadd.f32 %v2846, %v2773
      %v2879 = vadd.f32 %v2847, %v2775
      %v2880 = vadd.f32 %v2848, %v2778
      %v2881 = vadd.f32 %v2849, %v2780
      %v2882 = vadd.f32 %v2850, %v2783
      %v2883 = vadd.f32 %v2851, %v2785
      %v2884 = vadd.f32 %v2852, %v2788
      %v2885 = vadd.f32 %v2853, %v2790
      %v2886 = vadd.f32 %v2854, %v2793
      %v2887 = vadd.f32 %v2855, %v2795
      %v2888 = vadd.f32 %v2856, %v2798
      %v2889 = vadd.f32 %v2857, %v2800
      %v2890 = vadd.f32 %v2858, %v2803
      %v2891 = vadd.f32 %v2859, %v2805
      %v2892 = vadd.f32 %v2860, %v2808
      %v2893 = vadd.f32 %v2861, %v2810
      %v2894 = vadd.f32 %v2862, %v2813
      %v2895 = vadd.f32 %v2863, %v2815
      %v2896 = vadd.f32 %v2864, %v2818
      %v2897 = vadd.f32 %v2865, %v2820
      %v2898 = vadd.f32 %v2866, %v2823
      %v2899 = vadd.f32 %v2867, %v2825
      %v2900 = vadd.f32 %v2868, %v2828
      %v2901 = vadd.f32 %v2869, %v2830
      %v2902 = vadd.f32 %v2870, %v2833
      %v2903 = vadd.f32 %v2871, %v2835
      %v2904 = vadd.f32 %v2872, %v2838
      %v2905 = vadd.f32 %v2873, %v2840
      %2906 = vst [vmem:[#allocation3] sm:$0xff] %v2874
      %2907 = vst [vmem:[#allocation3 + $0x8] sm:$0xff] %v2875
      %2908 = vst [vmem:[#allocation3 + $0x10] sm:$0xff] %v2876
      %2909 = vst [vmem:[#allocation3 + $0x18] sm:$0xff] %v2877
      %2910 = vst [vmem:[#allocation3 + $0x20] sm:$0xff] %v2878
      %2911 = vst [vmem:[#allocation3 + $0x28] sm:$0xff] %v2879
      %2912 = vst [vmem:[#allocation3 + $0x30] sm:$0xff] %v2880
      %2913 = vst [vmem:[#allocation3 + $0x38] sm:$0xff] %v2881
      %2914 = vst [vmem:[#allocation3 + $0x40] sm:$0xff] %v2882
      %2915 = vst [vmem:[#allocation3 + $0x48] sm:$0xff] %v2883
      %2916 = vst [vmem:[#allocation3 + $0x50] sm:$0xff] %v2884
      %2917 = vst [vmem:[#allocation3 + $0x58] sm:$0xff] %v2885
      %2918 = vst [vmem:[#allocation3 + $0x60] sm:$0xff] %v2886
      %2919 = vst [vmem:[#allocation3 + $0x68] sm:$0xff] %v2887
      %2920 = vst [vmem:[#allocation3 + $0x70] sm:$0xff] %v2888
      %2921 = vst [vmem:[#allocation3 + $0x78] sm:$0xff] %v2889
      %2922 = vst [vmem:[#allocation3 + $0x80] sm:$0xff] %v2890
      %2923 = vst [vmem:[#allocation3 + $0x88] sm:$0xff] %v2891
      %2924 = vst [vmem:[#allocation3 + $0x90] sm:$0xff] %v2892
      %2925 = vst [vmem:[#allocation3 + $0x98] sm:$0xff] %v2893
      %2926 = vst [vmem:[#allocation3 + $0xa0] sm:$0xff] %v2894
      %2927 = vst [vmem:[#allocation3 + $0xa8] sm:$0xff] %v2895
      %2928 = vst [vmem:[#allocation3 + $0xb0] sm:$0xff] %v2896
      %2929 = vst [vmem:[#allocation3 + $0xb8] sm:$0xff] %v2897
      %2930 = vst [vmem:[#allocation3 + $0xc0] sm:$0xff] %v2898
      %2931 = vst [vmem:[#allocation3 + $0xc8] sm:$0xff] %v2899
      %2932 = vst [vmem:[#allocation3 + $0xd0] sm:$0xff] %v2900
      %2933 = vst [vmem:[#allocation3 + $0xd8] sm:$0xff] %v2901
      %2934 = vst [vmem:[#allocation3 + $0xe0] sm:$0xff] %v2902
      %2935 = vst [vmem:[#allocation3 + $0xe8] sm:$0xff] %v2903
      %2936 = vst [vmem:[#allocation3 + $0xf0] sm:$0xff] %v2904
      %2937 = vst [vmem:[#allocation3 + $0xf8] sm:$0xff] %v2905
      %s2938 = scalar_lea.vmem %s4, 192
      %v2939 = vld [vmem:[%s2938] sm:$0xf]
      %v2940 = vld [vmem:[%s2938 + $0x4] sm:$0xf]
      %v2941 = vld [vmem:[%s2938 + $0x8] sm:$0xf]
      %v2942 = vld [vmem:[%s2938 + $0xc] sm:$0xf]
      %v2943 = vld [vmem:[%s2938 + $0x10] sm:$0xf]
      %v2944 = vld [vmem:[%s2938 + $0x14] sm:$0xf]
      %v2945 = vld [vmem:[%s2938 + $0x18] sm:$0xf]
      %v2946 = vld [vmem:[%s2938 + $0x1c] sm:$0xf]
      %v2947 = vld [vmem:[%s2938 + $0x20] sm:$0xf]
      %v2948 = vld [vmem:[%s2938 + $0x24] sm:$0xf]
      %v2949 = vld [vmem:[%s2938 + $0x28] sm:$0xf]
      %v2950 = vld [vmem:[%s2938 + $0x2c] sm:$0xf]
      %v2951 = vld [vmem:[%s2938 + $0x30] sm:$0xf]
      %v2952 = vld [vmem:[%s2938 + $0x34] sm:$0xf]
      %v2953 = vld [vmem:[%s2938 + $0x38] sm:$0xf]
      %v2954 = vld [vmem:[%s2938 + $0x3c] sm:$0xf]
      %v2957 = vunpack.c.l.b16 %v1889
      %v2958 = vunpack.c.l.b16 %v1890
      %v2959 = vpack.c.b16 %v2958, %v2957
      %v2977 = vunpack.c.l.b16 %v2939
      %v2978 = vunpack.c.l.b16 %v2940
      %v2979 = vunpack.c.l.b16 %v2941
      %v2980 = vunpack.c.l.b16 %v2942
      %v2981 = vunpack.c.l.b16 %v2943
      %v2982 = vunpack.c.l.b16 %v2944
      %v2983 = vunpack.c.l.b16 %v2945
      %v2984 = vunpack.c.l.b16 %v2946
      %v2985 = vunpack.c.l.b16 %v2947
      %v2986 = vunpack.c.l.b16 %v2948
      %v2987 = vunpack.c.l.b16 %v2949
      %v2988 = vunpack.c.l.b16 %v2950
      %v2989 = vunpack.c.l.b16 %v2951
      %v2990 = vunpack.c.l.b16 %v2952
      %v2991 = vunpack.c.l.b16 %v2953
      %v2992 = vunpack.c.l.b16 %v2954
      %v2993 = vpack.c.b16 %v2978, %v2977
      %v2994 = vpack.c.b16 %v2980, %v2979
      %v2995 = vpack.c.b16 %v2982, %v2981
      %v2996 = vpack.c.b16 %v2984, %v2983
      %v2997 = vpack.c.b16 %v2986, %v2985
      %v2998 = vpack.c.b16 %v2988, %v2987
      %v2999 = vpack.c.b16 %v2990, %v2989
      %v3000 = vpack.c.b16 %v2992, %v2991
      %3009 = vmatpush.bf16.msra.mxu0 %v3000
      %3010 = vmatpush.bf16.msra.mxu0 %v2999
      %3011 = vmatpush.bf16.msra.mxu0 %v2998
      %3012 = vmatpush.bf16.msra.mxu0 %v2997
      %3013 = vmatpush.bf16.msra.mxu0 %v2996
      %3014 = vmatpush.bf16.msra.mxu0 %v2995
      %3015 = vmatpush.bf16.msra.mxu0 %v2994
      %3016 = vmatpush.bf16.msra.mxu0 %v2993
      %3017 = vmatmul.bf16.gmra.mxu0 %v2046
      %v3018 = vpop.f32.mrf.mxu0
      %v3019 = vadd.f32 0.0, %v3018
      %v3020 = vpop.f32.mrf.mxu0
      %v3021 = vadd.f32 0.0, %v3020
      %3022 = vmatmul.bf16.gmra.mxu0 %v2047
      %v3023 = vpop.f32.mrf.mxu0
      %v3024 = vadd.f32 0.0, %v3023
      %v3025 = vpop.f32.mrf.mxu0
      %v3026 = vadd.f32 0.0, %v3025
      %3027 = vmatmul.bf16.gmra.mxu0 %v2048
      %v3028 = vpop.f32.mrf.mxu0
      %v3029 = vadd.f32 0.0, %v3028
      %v3030 = vpop.f32.mrf.mxu0
      %v3031 = vadd.f32 0.0, %v3030
      %3032 = vmatmul.bf16.gmra.mxu0 %v2049
      %v3033 = vpop.f32.mrf.mxu0
      %v3034 = vadd.f32 0.0, %v3033
      %v3035 = vpop.f32.mrf.mxu0
      %v3036 = vadd.f32 0.0, %v3035
      %3037 = vmatmul.bf16.gmra.mxu0 %v2050
      %v3038 = vpop.f32.mrf.mxu0
      %v3039 = vadd.f32 0.0, %v3038
      %v3040 = vpop.f32.mrf.mxu0
      %v3041 = vadd.f32 0.0, %v3040
      %3042 = vmatmul.bf16.gmra.mxu0 %v2051
      %v3043 = vpop.f32.mrf.mxu0
      %v3044 = vadd.f32 0.0, %v3043
      %v3045 = vpop.f32.mrf.mxu0
      %v3046 = vadd.f32 0.0, %v3045
      %3047 = vmatmul.bf16.gmra.mxu0 %v2052
      %v3048 = vpop.f32.mrf.mxu0
      %v3049 = vadd.f32 0.0, %v3048
      %v3050 = vpop.f32.mrf.mxu0
      %v3051 = vadd.f32 0.0, %v3050
      %3052 = vmatmul.bf16.gmra.mxu0 %v2053
      %v3053 = vpop.f32.mrf.mxu0
      %v3054 = vadd.f32 0.0, %v3053
      %v3055 = vpop.f32.mrf.mxu0
      %v3056 = vadd.f32 0.0, %v3055
      %3057 = vmatmul.bf16.gmra.mxu0 %v2054
      %v3058 = vpop.f32.mrf.mxu0
      %v3059 = vadd.f32 0.0, %v3058
      %v3060 = vpop.f32.mrf.mxu0
      %v3061 = vadd.f32 0.0, %v3060
      %3062 = vmatmul.bf16.gmra.mxu0 %v2055
      %v3063 = vpop.f32.mrf.mxu0
      %v3064 = vadd.f32 0.0, %v3063
      %v3065 = vpop.f32.mrf.mxu0
      %v3066 = vadd.f32 0.0, %v3065
      %3067 = vmatmul.bf16.gmra.mxu0 %v2056
      %v3068 = vpop.f32.mrf.mxu0
      %v3069 = vadd.f32 0.0, %v3068
      %v3070 = vpop.f32.mrf.mxu0
      %v3071 = vadd.f32 0.0, %v3070
      %3072 = vmatmul.bf16.gmra.mxu0 %v2057
      %v3073 = vpop.f32.mrf.mxu0
      %v3074 = vadd.f32 0.0, %v3073
      %v3075 = vpop.f32.mrf.mxu0
      %v3076 = vadd.f32 0.0, %v3075
      %3077 = vmatmul.bf16.gmra.mxu0 %v2058
      %v3078 = vpop.f32.mrf.mxu0
      %v3079 = vadd.f32 0.0, %v3078
      %v3080 = vpop.f32.mrf.mxu0
      %v3081 = vadd.f32 0.0, %v3080
      %3082 = vmatmul.bf16.gmra.mxu0 %v2059
      %v3083 = vpop.f32.mrf.mxu0
      %v3084 = vadd.f32 0.0, %v3083
      %v3085 = vpop.f32.mrf.mxu0
      %v3086 = vadd.f32 0.0, %v3085
      %3087 = vmatmul.bf16.gmra.mxu0 %v2060
      %v3088 = vpop.f32.mrf.mxu0
      %v3089 = vadd.f32 0.0, %v3088
      %v3090 = vpop.f32.mrf.mxu0
      %v3091 = vadd.f32 0.0, %v3090
      %3092 = vmatmul.bf16.gmra.mxu0 %v2959
      %v3093 = vpop.f32.mrf.mxu0
      %v3094 = vadd.f32 0.0, %v3093
      %v3095 = vpop.f32.mrf.mxu0
      %v3096 = vadd.f32 0.0, %v3095
      %3097 = vdwg.mxu0
      %v3098 = vld [vmem:[#allocation3] sm:$0xff]
      %v3099 = vld [vmem:[#allocation3 + $0x8] sm:$0xff]
      %v3100 = vld [vmem:[#allocation3 + $0x10] sm:$0xff]
      %v3101 = vld [vmem:[#allocation3 + $0x18] sm:$0xff]
      %v3102 = vld [vmem:[#allocation3 + $0x20] sm:$0xff]
      %v3103 = vld [vmem:[#allocation3 + $0x28] sm:$0xff]
      %v3104 = vld [vmem:[#allocation3 + $0x30] sm:$0xff]
      %v3105 = vld [vmem:[#allocation3 + $0x38] sm:$0xff]
      %v3106 = vld [vmem:[#allocation3 + $0x40] sm:$0xff]
      %v3107 = vld [vmem:[#allocation3 + $0x48] sm:$0xff]
      %v3108 = vld [vmem:[#allocation3 + $0x50] sm:$0xff]
      %v3109 = vld [vmem:[#allocation3 + $0x58] sm:$0xff]
      %v3110 = vld [vmem:[#allocation3 + $0x60] sm:$0xff]
      %v3111 = vld [vmem:[#allocation3 + $0x68] sm:$0xff]
      %v3112 = vld [vmem:[#allocation3 + $0x70] sm:$0xff]
      %v3113 = vld [vmem:[#allocation3 + $0x78] sm:$0xff]
      %v3114 = vld [vmem:[#allocation3 + $0x80] sm:$0xff]
      %v3115 = vld [vmem:[#allocation3 + $0x88] sm:$0xff]
      %v3116 = vld [vmem:[#allocation3 + $0x90] sm:$0xff]
      %v3117 = vld [vmem:[#allocation3 + $0x98] sm:$0xff]
      %v3118 = vld [vmem:[#allocation3 + $0xa0] sm:$0xff]
      %v3119 = vld [vmem:[#allocation3 + $0xa8] sm:$0xff]
      %v3120 = vld [vmem:[#allocation3 + $0xb0] sm:$0xff]
      %v3121 = vld [vmem:[#allocation3 + $0xb8] sm:$0xff]
      %v3122 = vld [vmem:[#allocation3 + $0xc0] sm:$0xff]
      %v3123 = vld [vmem:[#allocation3 + $0xc8] sm:$0xff]
      %v3124 = vld [vmem:[#allocation3 + $0xd0] sm:$0xff]
      %v3125 = vld [vmem:[#allocation3 + $0xd8] sm:$0xff]
      %v3126 = vld [vmem:[#allocation3 + $0xe0] sm:$0xff]
      %v3127 = vld [vmem:[#allocation3 + $0xe8] sm:$0xff]
      %v3128 = vld [vmem:[#allocation3 + $0xf0] sm:$0xff]
      %v3129 = vld [vmem:[#allocation3 + $0xf8] sm:$0xff]
      %v3130 = vadd.f32 %v3098, %v3019
      %v3131 = vadd.f32 %v3099, %v3021
      %v3132 = vadd.f32 %v3100, %v3024
      %v3133 = vadd.f32 %v3101, %v3026
      %v3134 = vadd.f32 %v3102, %v3029
      %v3135 = vadd.f32 %v3103, %v3031
      %v3136 = vadd.f32 %v3104, %v3034
      %v3137 = vadd.f32 %v3105, %v3036
      %v3138 = vadd.f32 %v3106, %v3039
      %v3139 = vadd.f32 %v3107, %v3041
      %v3140 = vadd.f32 %v3108, %v3044
      %v3141 = vadd.f32 %v3109, %v3046
      %v3142 = vadd.f32 %v3110, %v3049
      %v3143 = vadd.f32 %v3111, %v3051
      %v3144 = vadd.f32 %v3112, %v3054
      %v3145 = vadd.f32 %v3113, %v3056
      %v3146 = vadd.f32 %v3114, %v3059
      %v3147 = vadd.f32 %v3115, %v3061
      %v3148 = vadd.f32 %v3116, %v3064
      %v3149 = vadd.f32 %v3117, %v3066
      %v3150 = vadd.f32 %v3118, %v3069
      %v3151 = vadd.f32 %v3119, %v3071
      %v3152 = vadd.f32 %v3120, %v3074
      %v3153 = vadd.f32 %v3121, %v3076
      %v3154 = vadd.f32 %v3122, %v3079
      %v3155 = vadd.f32 %v3123, %v3081
      %v3156 = vadd.f32 %v3124, %v3084
      %v3157 = vadd.f32 %v3125, %v3086
      %v3158 = vadd.f32 %v3126, %v3089
      %v3159 = vadd.f32 %v3127, %v3091
      %v3160 = vadd.f32 %v3128, %v3094
      %v3161 = vadd.f32 %v3129, %v3096
      %3162 = vst [vmem:[#allocation3] sm:$0xff] %v3130
      %3163 = vst [vmem:[#allocation3 + $0x8] sm:$0xff] %v3131
      %3164 = vst [vmem:[#allocation3 + $0x10] sm:$0xff] %v3132
      %3165 = vst [vmem:[#allocation3 + $0x18] sm:$0xff] %v3133
      %3166 = vst [vmem:[#allocation3 + $0x20] sm:$0xff] %v3134
      %3167 = vst [vmem:[#allocation3 + $0x28] sm:$0xff] %v3135
      %3168 = vst [vmem:[#allocation3 + $0x30] sm:$0xff] %v3136
      %3169 = vst [vmem:[#allocation3 + $0x38] sm:$0xff] %v3137
      %3170 = vst [vmem:[#allocation3 + $0x40] sm:$0xff] %v3138
      %3171 = vst [vmem:[#allocation3 + $0x48] sm:$0xff] %v3139
      %3172 = vst [vmem:[#allocation3 + $0x50] sm:$0xff] %v3140
      %3173 = vst [vmem:[#allocation3 + $0x58] sm:$0xff] %v3141
      %3174 = vst [vmem:[#allocation3 + $0x60] sm:$0xff] %v3142
      %3175 = vst [vmem:[#allocation3 + $0x68] sm:$0xff] %v3143
      %3176 = vst [vmem:[#allocation3 + $0x70] sm:$0xff] %v3144
      %3177 = vst [vmem:[#allocation3 + $0x78] sm:$0xff] %v3145
      %3178 = vst [vmem:[#allocation3 + $0x80] sm:$0xff] %v3146
      %3179 = vst [vmem:[#allocation3 + $0x88] sm:$0xff] %v3147
      %3180 = vst [vmem:[#allocation3 + $0x90] sm:$0xff] %v3148
      %3181 = vst [vmem:[#allocation3 + $0x98] sm:$0xff] %v3149
      %3182 = vst [vmem:[#allocation3 + $0xa0] sm:$0xff] %v3150
      %3183 = vst [vmem:[#allocation3 + $0xa8] sm:$0xff] %v3151
      %3184 = vst [vmem:[#allocation3 + $0xb0] sm:$0xff] %v3152
      %3185 = vst [vmem:[#allocation3 + $0xb8] sm:$0xff] %v3153
      %3186 = vst [vmem:[#allocation3 + $0xc0] sm:$0xff] %v3154
      %3187 = vst [vmem:[#allocation3 + $0xc8] sm:$0xff] %v3155
      %3188 = vst [vmem:[#allocation3 + $0xd0] sm:$0xff] %v3156
      %3189 = vst [vmem:[#allocation3 + $0xd8] sm:$0xff] %v3157
      %3190 = vst [vmem:[#allocation3 + $0xe0] sm:$0xff] %v3158
      %3191 = vst [vmem:[#allocation3 + $0xe8] sm:$0xff] %v3159
      %3192 = vst [vmem:[#allocation3 + $0xf0] sm:$0xff] %v3160
      %3193 = vst [vmem:[#allocation3 + $0xf8] sm:$0xff] %v3161
      %s3194 = scalar_lea.vmem %s4, 256
      %v3195 = vld [vmem:[%s3194] sm:$0xf]
      %v3196 = vld [vmem:[%s3194 + $0x4] sm:$0xf]
      %v3197 = vld [vmem:[%s3194 + $0x8] sm:$0xf]
      %v3198 = vld [vmem:[%s3194 + $0xc] sm:$0xf]
      %v3199 = vld [vmem:[%s3194 + $0x10] sm:$0xf]
      %v3200 = vld [vmem:[%s3194 + $0x14] sm:$0xf]
      %v3201 = vld [vmem:[%s3194 + $0x18] sm:$0xf]
      %v3202 = vld [vmem:[%s3194 + $0x1c] sm:$0xf]
      %v3203 = vld [vmem:[%s3194 + $0x20] sm:$0xf]
      %v3204 = vld [vmem:[%s3194 + $0x24] sm:$0xf]
      %v3205 = vld [vmem:[%s3194 + $0x28] sm:$0xf]
      %v3206 = vld [vmem:[%s3194 + $0x2c] sm:$0xf]
      %v3207 = vld [vmem:[%s3194 + $0x30] sm:$0xf]
      %v3208 = vld [vmem:[%s3194 + $0x34] sm:$0xf]
      %v3209 = vld [vmem:[%s3194 + $0x38] sm:$0xf]
      %v3210 = vld [vmem:[%s3194 + $0x3c] sm:$0xf]
      %v3213 = vunpack.c.l.b16 %v1925
      %v3214 = vunpack.c.l.b16 %v1926
      %v3215 = vpack.c.b16 %v3214, %v3213
      %v3233 = vunpack.c.l.b16 %v3195
      %v3234 = vunpack.c.l.b16 %v3196
      %v3235 = vunpack.c.l.b16 %v3197
      %v3236 = vunpack.c.l.b16 %v3198
      %v3237 = vunpack.c.l.b16 %v3199
      %v3238 = vunpack.c.l.b16 %v3200
      %v3239 = vunpack.c.l.b16 %v3201
      %v3240 = vunpack.c.l.b16 %v3202
      %v3241 = vunpack.c.l.b16 %v3203
      %v3242 = vunpack.c.l.b16 %v3204
      %v3243 = vunpack.c.l.b16 %v3205
      %v3244 = vunpack.c.l.b16 %v3206
      %v3245 = vunpack.c.l.b16 %v3207
      %v3246 = vunpack.c.l.b16 %v3208
      %v3247 = vunpack.c.l.b16 %v3209
      %v3248 = vunpack.c.l.b16 %v3210
      %v3249 = vpack.c.b16 %v3234, %v3233
      %v3250 = vpack.c.b16 %v3236, %v3235
      %v3251 = vpack.c.b16 %v3238, %v3237
      %v3252 = vpack.c.b16 %v3240, %v3239
      %v3253 = vpack.c.b16 %v3242, %v3241
      %v3254 = vpack.c.b16 %v3244, %v3243
      %v3255 = vpack.c.b16 %v3246, %v3245
      %v3256 = vpack.c.b16 %v3248, %v3247
      %3265 = vmatpush.bf16.msra.mxu0 %v3256
      %3266 = vmatpush.bf16.msra.mxu0 %v3255
      %3267 = vmatpush.bf16.msra.mxu0 %v3254
      %3268 = vmatpush.bf16.msra.mxu0 %v3253
      %3269 = vmatpush.bf16.msra.mxu0 %v3252
      %3270 = vmatpush.bf16.msra.mxu0 %v3251
      %3271 = vmatpush.bf16.msra.mxu0 %v3250
      %3272 = vmatpush.bf16.msra.mxu0 %v3249
      %3273 = vmatmul.bf16.gmra.mxu0 %v2328
      %v3274 = vpop.f32.mrf.mxu0
      %v3275 = vadd.f32 0.0, %v3274
      %v3276 = vpop.f32.mrf.mxu0
      %v3277 = vadd.f32 0.0, %v3276
      %3278 = vmatmul.bf16.gmra.mxu0 %v2329
      %v3279 = vpop.f32.mrf.mxu0
      %v3280 = vadd.f32 0.0, %v3279
      %v3281 = vpop.f32.mrf.mxu0
      %v3282 = vadd.f32 0.0, %v3281
      %3283 = vmatmul.bf16.gmra.mxu0 %v2330
      %v3284 = vpop.f32.mrf.mxu0
      %v3285 = vadd.f32 0.0, %v3284
      %v3286 = vpop.f32.mrf.mxu0
      %v3287 = vadd.f32 0.0, %v3286
      %3288 = vmatmul.bf16.gmra.mxu0 %v2331
      %v3289 = vpop.f32.mrf.mxu0
      %v3290 = vadd.f32 0.0, %v3289
      %v3291 = vpop.f32.mrf.mxu0
      %v3292 = vadd.f32 0.0, %v3291
      %3293 = vmatmul.bf16.gmra.mxu0 %v2332
      %v3294 = vpop.f32.mrf.mxu0
      %v3295 = vadd.f32 0.0, %v3294
      %v3296 = vpop.f32.mrf.mxu0
      %v3297 = vadd.f32 0.0, %v3296
      %3298 = vmatmul.bf16.gmra.mxu0 %v2333
      %v3299 = vpop.f32.mrf.mxu0
      %v3300 = vadd.f32 0.0, %v3299
      %v3301 = vpop.f32.mrf.mxu0
      %v3302 = vadd.f32 0.0, %v3301
      %3303 = vmatmul.bf16.gmra.mxu0 %v2334
      %v3304 = vpop.f32.mrf.mxu0
      %v3305 = vadd.f32 0.0, %v3304
      %v3306 = vpop.f32.mrf.mxu0
      %v3307 = vadd.f32 0.0, %v3306
      %3308 = vmatmul.bf16.gmra.mxu0 %v2335
      %v3309 = vpop.f32.mrf.mxu0
      %v3310 = vadd.f32 0.0, %v3309
      %v3311 = vpop.f32.mrf.mxu0
      %v3312 = vadd.f32 0.0, %v3311
      %3313 = vmatmul.bf16.gmra.mxu0 %v2336
      %v3314 = vpop.f32.mrf.mxu0
      %v3315 = vadd.f32 0.0, %v3314
      %v3316 = vpop.f32.mrf.mxu0
      %v3317 = vadd.f32 0.0, %v3316
      %3318 = vmatmul.bf16.gmra.mxu0 %v2337
      %v3319 = vpop.f32.mrf.mxu0
      %v3320 = vadd.f32 0.0, %v3319
      %v3321 = vpop.f32.mrf.mxu0
      %v3322 = vadd.f32 0.0, %v3321
      %3323 = vmatmul.bf16.gmra.mxu0 %v2338
      %v3324 = vpop.f32.mrf.mxu0
      %v3325 = vadd.f32 0.0, %v3324
      %v3326 = vpop.f32.mrf.mxu0
      %v3327 = vadd.f32 0.0, %v3326
      %3328 = vmatmul.bf16.gmra.mxu0 %v2339
      %v3329 = vpop.f32.mrf.mxu0
      %v3330 = vadd.f32 0.0, %v3329
      %v3331 = vpop.f32.mrf.mxu0
      %v3332 = vadd.f32 0.0, %v3331
      %3333 = vmatmul.bf16.gmra.mxu0 %v2340
      %v3334 = vpop.f32.mrf.mxu0
      %v3335 = vadd.f32 0.0, %v3334
      %v3336 = vpop.f32.mrf.mxu0
      %v3337 = vadd.f32 0.0, %v3336
      %3338 = vmatmul.bf16.gmra.mxu0 %v2341
      %v3339 = vpop.f32.mrf.mxu0
      %v3340 = vadd.f32 0.0, %v3339
      %v3341 = vpop.f32.mrf.mxu0
      %v3342 = vadd.f32 0.0, %v3341
      %3343 = vmatmul.bf16.gmra.mxu0 %v2342
      %v3344 = vpop.f32.mrf.mxu0
      %v3345 = vadd.f32 0.0, %v3344
      %v3346 = vpop.f32.mrf.mxu0
      %v3347 = vadd.f32 0.0, %v3346
      %3348 = vmatmul.bf16.gmra.mxu0 %v3215
      %v3349 = vpop.f32.mrf.mxu0
      %v3350 = vadd.f32 0.0, %v3349
      %v3351 = vpop.f32.mrf.mxu0
      %v3352 = vadd.f32 0.0, %v3351
      %3353 = vdwg.mxu0
      %v3354 = vld [vmem:[#allocation3] sm:$0xff]
      %v3355 = vld [vmem:[#allocation3 + $0x8] sm:$0xff]
      %v3356 = vld [vmem:[#allocation3 + $0x10] sm:$0xff]
      %v3357 = vld [vmem:[#allocation3 + $0x18] sm:$0xff]
      %v3358 = vld [vmem:[#allocation3 + $0x20] sm:$0xff]
      %v3359 = vld [vmem:[#allocation3 + $0x28] sm:$0xff]
      %v3360 = vld [vmem:[#allocation3 + $0x30] sm:$0xff]
      %v3361 = vld [vmem:[#allocation3 + $0x38] sm:$0xff]
      %v3362 = vld [vmem:[#allocation3 + $0x40] sm:$0xff]
      %v3363 = vld [vmem:[#allocation3 + $0x48] sm:$0xff]
      %v3364 = vld [vmem:[#allocation3 + $0x50] sm:$0xff]
      %v3365 = vld [vmem:[#allocation3 + $0x58] sm:$0xff]
      %v3366 = vld [vmem:[#allocation3 + $0x60] sm:$0xff]
      %v3367 = vld [vmem:[#allocation3 + $0x68] sm:$0xff]
      %v3368 = vld [vmem:[#allocation3 + $0x70] sm:$0xff]
      %v3369 = vld [vmem:[#allocation3 + $0x78] sm:$0xff]
      %v3370 = vld [vmem:[#allocation3 + $0x80] sm:$0xff]
      %v3371 = vld [vmem:[#allocation3 + $0x88] sm:$0xff]
      %v3372 = vld [vmem:[#allocation3 + $0x90] sm:$0xff]
      %v3373 = vld [vmem:[#allocation3 + $0x98] sm:$0xff]
      %v3374 = vld [vmem:[#allocation3 + $0xa0] sm:$0xff]
      %v3375 = vld [vmem:[#allocation3 + $0xa8] sm:$0xff]
      %v3376 = vld [vmem:[#allocation3 + $0xb0] sm:$0xff]
      %v3377 = vld [vmem:[#allocation3 + $0xb8] sm:$0xff]
      %v3378 = vld [vmem:[#allocation3 + $0xc0] sm:$0xff]
      %v3379 = vld [vmem:[#allocation3 + $0xc8] sm:$0xff]
      %v3380 = vld [vmem:[#allocation3 + $0xd0] sm:$0xff]
      %v3381 = vld [vmem:[#allocation3 + $0xd8] sm:$0xff]
      %v3382 = vld [vmem:[#allocation3 + $0xe0] sm:$0xff]
      %v3383 = vld [vmem:[#allocation3 + $0xe8] sm:$0xff]
      %v3384 = vld [vmem:[#allocation3 + $0xf0] sm:$0xff]
      %v3385 = vld [vmem:[#allocation3 + $0xf8] sm:$0xff]
      %v3386 = vadd.f32 %v3354, %v3275
      %v3387 = vadd.f32 %v3355, %v3277
      %v3388 = vadd.f32 %v3356, %v3280
      %v3389 = vadd.f32 %v3357, %v3282
      %v3390 = vadd.f32 %v3358, %v3285
      %v3391 = vadd.f32 %v3359, %v3287
      %v3392 = vadd.f32 %v3360, %v3290
      %v3393 = vadd.f32 %v3361, %v3292
      %v3394 = vadd.f32 %v3362, %v3295
      %v3395 = vadd.f32 %v3363, %v3297
      %v3396 = vadd.f32 %v3364, %v3300
      %v3397 = vadd.f32 %v3365, %v3302
      %v3398 = vadd.f32 %v3366, %v3305
      %v3399 = vadd.f32 %v3367, %v3307
      %v3400 = vadd.f32 %v3368, %v3310
      %v3401 = vadd.f32 %v3369, %v3312
      %v3402 = vadd.f32 %v3370, %v3315
      %v3403 = vadd.f32 %v3371, %v3317
      %v3404 = vadd.f32 %v3372, %v3320
      %v3405 = vadd.f32 %v3373, %v3322
      %v3406 = vadd.f32 %v3374, %v3325
      %v3407 = vadd.f32 %v3375, %v3327
      %v3408 = vadd.f32 %v3376, %v3330
      %v3409 = vadd.f32 %v3377, %v3332
      %v3410 = vadd.f32 %v3378, %v3335
      %v3411 = vadd.f32 %v3379, %v3337
      %v3412 = vadd.f32 %v3380, %v3340
      %v3413 = vadd.f32 %v3381, %v3342
      %v3414 = vadd.f32 %v3382, %v3345
      %v3415 = vadd.f32 %v3383, %v3347
      %v3416 = vadd.f32 %v3384, %v3350
      %v3417 = vadd.f32 %v3385, %v3352
      %3418 = vst [vmem:[#allocation3] sm:$0xff] %v3386
      %3419 = vst [vmem:[#allocation3 + $0x8] sm:$0xff] %v3387
      %3420 = vst [vmem:[#allocation3 + $0x10] sm:$0xff] %v3388
      %3421 = vst [vmem:[#allocation3 + $0x18] sm:$0xff] %v3389
      %3422 = vst [vmem:[#allocation3 + $0x20] sm:$0xff] %v3390
      %3423 = vst [vmem:[#allocation3 + $0x28] sm:$0xff] %v3391
      %3424 = vst [vmem:[#allocation3 + $0x30] sm:$0xff] %v3392
      %3425 = vst [vmem:[#allocation3 + $0x38] sm:$0xff] %v3393
      %3426 = vst [vmem:[#allocation3 + $0x40] sm:$0xff] %v3394
      %3427 = vst [vmem:[#allocation3 + $0x48] sm:$0xff] %v3395
      %3428 = vst [vmem:[#allocation3 + $0x50] sm:$0xff] %v3396
      %3429 = vst [vmem:[#allocation3 + $0x58] sm:$0xff] %v3397
      %3430 = vst [vmem:[#allocation3 + $0x60] sm:$0xff] %v3398
      %3431 = vst [vmem:[#allocation3 + $0x68] sm:$0xff] %v3399
      %3432 = vst [vmem:[#allocation3 + $0x70] sm:$0xff] %v3400
      %3433 = vst [vmem:[#allocation3 + $0x78] sm:$0xff] %v3401
      %3434 = vst [vmem:[#allocation3 + $0x80] sm:$0xff] %v3402
      %3435 = vst [vmem:[#allocation3 + $0x88] sm:$0xff] %v3403
      %3436 = vst [vmem:[#allocation3 + $0x90] sm:$0xff] %v3404
      %3437 = vst [vmem:[#allocation3 + $0x98] sm:$0xff] %v3405
      %3438 = vst [vmem:[#allocation3 + $0xa0] sm:$0xff] %v3406
      %3439 = vst [vmem:[#allocation3 + $0xa8] sm:$0xff] %v3407
      %3440 = vst [vmem:[#allocation3 + $0xb0] sm:$0xff] %v3408
      %3441 = vst [vmem:[#allocation3 + $0xb8] sm:$0xff] %v3409
      %3442 = vst [vmem:[#allocation3 + $0xc0] sm:$0xff] %v3410
      %3443 = vst [vmem:[#allocation3 + $0xc8] sm:$0xff] %v3411
      %3444 = vst [vmem:[#allocation3 + $0xd0] sm:$0xff] %v3412
      %3445 = vst [vmem:[#allocation3 + $0xd8] sm:$0xff] %v3413
      %3446 = vst [vmem:[#allocation3 + $0xe0] sm:$0xff] %v3414
      %3447 = vst [vmem:[#allocation3 + $0xe8] sm:$0xff] %v3415
      %3448 = vst [vmem:[#allocation3 + $0xf0] sm:$0xff] %v3416
      %3449 = vst [vmem:[#allocation3 + $0xf8] sm:$0xff] %v3417
      %s3450 = scalar_lea.vmem %s4, 320
      %v3451 = vld [vmem:[%s3450] sm:$0xf]
      %v3452 = vld [vmem:[%s3450 + $0x4] sm:$0xf]
      %v3453 = vld [vmem:[%s3450 + $0x8] sm:$0xf]
      %v3454 = vld [vmem:[%s3450 + $0xc] sm:$0xf]
      %v3455 = vld [vmem:[%s3450 + $0x10] sm:$0xf]
      %v3456 = vld [vmem:[%s3450 + $0x14] sm:$0xf]
      %v3457 = vld [vmem:[%s3450 + $0x18] sm:$0xf]
      %v3458 = vld [vmem:[%s3450 + $0x1c] sm:$0xf]
      %v3459 = vld [vmem:[%s3450 + $0x20] sm:$0xf]
      %v3460 = vld [vmem:[%s3450 + $0x24] sm:$0xf]
      %v3461 = vld [vmem:[%s3450 + $0x28] sm:$0xf]
      %v3462 = vld [vmem:[%s3450 + $0x2c] sm:$0xf]
      %v3463 = vld [vmem:[%s3450 + $0x30] sm:$0xf]
      %v3464 = vld [vmem:[%s3450 + $0x34] sm:$0xf]
      %v3465 = vld [vmem:[%s3450 + $0x38] sm:$0xf]
      %v3466 = vld [vmem:[%s3450 + $0x3c] sm:$0xf]
      %v3469 = vunpack.c.l.b16 %v1961
      %v3470 = vunpack.c.l.b16 %v1962
      %v3471 = vpack.c.b16 %v3470, %v3469
      %v3489 = vunpack.c.l.b16 %v3451
      %v3490 = vunpack.c.l.b16 %v3452
      %v3491 = vunpack.c.l.b16 %v3453
      %v3492 = vunpack.c.l.b16 %v3454
      %v3493 = vunpack.c.l.b16 %v3455
      %v3494 = vunpack.c.l.b16 %v3456
      %v3495 = vunpack.c.l.b16 %v3457
      %v3496 = vunpack.c.l.b16 %v3458
      %v3497 = vunpack.c.l.b16 %v3459
      %v3498 = vunpack.c.l.b16 %v3460
      %v3499 = vunpack.c.l.b16 %v3461
      %v3500 = vunpack.c.l.b16 %v3462
      %v3501 = vunpack.c.l.b16 %v3463
      %v3502 = vunpack.c.l.b16 %v3464
      %v3503 = vunpack.c.l.b16 %v3465
      %v3504 = vunpack.c.l.b16 %v3466
      %v3505 = vpack.c.b16 %v3490, %v3489
      %v3506 = vpack.c.b16 %v3492, %v3491
      %v3507 = vpack.c.b16 %v3494, %v3493
      %v3508 = vpack.c.b16 %v3496, %v3495
      %v3509 = vpack.c.b16 %v3498, %v3497
      %v3510 = vpack.c.b16 %v3500, %v3499
      %v3511 = vpack.c.b16 %v3502, %v3501
      %v3512 = vpack.c.b16 %v3504, %v3503
      %3521 = vmatpush.bf16.msra.mxu0 %v3512
      %3522 = vmatpush.bf16.msra.mxu0 %v3511
      %3523 = vmatpush.bf16.msra.mxu0 %v3510
      %3524 = vmatpush.bf16.msra.mxu0 %v3509
      %3525 = vmatpush.bf16.msra.mxu0 %v3508
      %3526 = vmatpush.bf16.msra.mxu0 %v3507
      %3527 = vmatpush.bf16.msra.mxu0 %v3506
      %3528 = vmatpush.bf16.msra.mxu0 %v3505
      %3529 = vmatmul.bf16.gmra.mxu0 %v2674
      %v3530 = vpop.f32.mrf.mxu0
      %v3531 = vadd.f32 0.0, %v3530
      %v3532 = vpop.f32.mrf.mxu0
      %v3533 = vadd.f32 0.0, %v3532
      %3534 = vmatmul.bf16.gmra.mxu0 %v2675
      %v3535 = vpop.f32.mrf.mxu0
      %v3536 = vadd.f32 0.0, %v3535
      %v3537 = vpop.f32.mrf.mxu0
      %v3538 = vadd.f32 0.0, %v3537
      %3539 = vmatmul.bf16.gmra.mxu0 %v2676
      %v3540 = vpop.f32.mrf.mxu0
      %v3541 = vadd.f32 0.0, %v3540
      %v3542 = vpop.f32.mrf.mxu0
      %v3543 = vadd.f32 0.0, %v3542
      %3544 = vmatmul.bf16.gmra.mxu0 %v2677
      %v3545 = vpop.f32.mrf.mxu0
      %v3546 = vadd.f32 0.0, %v3545
      %v3547 = vpop.f32.mrf.mxu0
      %v3548 = vadd.f32 0.0, %v3547
      %3549 = vmatmul.bf16.gmra.mxu0 %v2678
      %v3550 = vpop.f32.mrf.mxu0
      %v3551 = vadd.f32 0.0, %v3550
      %v3552 = vpop.f32.mrf.mxu0
      %v3553 = vadd.f32 0.0, %v3552
      %3554 = vmatmul.bf16.gmra.mxu0 %v2679
      %v3555 = vpop.f32.mrf.mxu0
      %v3556 = vadd.f32 0.0, %v3555
      %v3557 = vpop.f32.mrf.mxu0
      %v3558 = vadd.f32 0.0, %v3557
      %3559 = vmatmul.bf16.gmra.mxu0 %v2680
      %v3560 = vpop.f32.mrf.mxu0
      %v3561 = vadd.f32 0.0, %v3560
      %v3562 = vpop.f32.mrf.mxu0
      %v3563 = vadd.f32 0.0, %v3562
      %3564 = vmatmul.bf16.gmra.mxu0 %v2681
      %v3565 = vpop.f32.mrf.mxu0
      %v3566 = vadd.f32 0.0, %v3565
      %v3567 = vpop.f32.mrf.mxu0
      %v3568 = vadd.f32 0.0, %v3567
      %3569 = vmatmul.bf16.gmra.mxu0 %v2682
      %v3570 = vpop.f32.mrf.mxu0
      %v3571 = vadd.f32 0.0, %v3570
      %v3572 = vpop.f32.mrf.mxu0
      %v3573 = vadd.f32 0.0, %v3572
      %3574 = vmatmul.bf16.gmra.mxu0 %v2683
      %v3575 = vpop.f32.mrf.mxu0
      %v3576 = vadd.f32 0.0, %v3575
      %v3577 = vpop.f32.mrf.mxu0
      %v3578 = vadd.f32 0.0, %v3577
      %3579 = vmatmul.bf16.gmra.mxu0 %v2684
      %v3580 = vpop.f32.mrf.mxu0
      %v3581 = vadd.f32 0.0, %v3580
      %v3582 = vpop.f32.mrf.mxu0
      %v3583 = vadd.f32 0.0, %v3582
      %3584 = vmatmul.bf16.gmra.mxu0 %v2685
      %v3585 = vpop.f32.mrf.mxu0
      %v3586 = vadd.f32 0.0, %v3585
      %v3587 = vpop.f32.mrf.mxu0
      %v3588 = vadd.f32 0.0, %v3587
      %3589 = vmatmul.bf16.gmra.mxu0 %v2686
      %v3590 = vpop.f32.mrf.mxu0
      %v3591 = vadd.f32 0.0, %v3590
      %v3592 = vpop.f32.mrf.mxu0
      %v3593 = vadd.f32 0.0, %v3592
      %3594 = vmatmul.bf16.gmra.mxu0 %v2687
      %v3595 = vpop.f32.mrf.mxu0
      %v3596 = vadd.f32 0.0, %v3595
      %v3597 = vpop.f32.mrf.mxu0
      %v3598 = vadd.f32 0.0, %v3597
      %3599 = vmatmul.bf16.gmra.mxu0 %v2688
      %v3600 = vpop.f32.mrf.mxu0
      %v3601 = vadd.f32 0.0, %v3600
      %v3602 = vpop.f32.mrf.mxu0
      %v3603 = vadd.f32 0.0, %v3602
      %3604 = vmatmul.bf16.gmra.mxu0 %v3471
      %v3605 = vpop.f32.mrf.mxu0
      %v3606 = vadd.f32 0.0, %v3605
      %v3607 = vpop.f32.mrf.mxu0
      %v3608 = vadd.f32 0.0, %v3607
      %3609 = vdwg.mxu0
      %v3610 = vld [vmem:[#allocation3] sm:$0xff]
      %v3611 = vld [vmem:[#allocation3 + $0x8] sm:$0xff]
      %v3612 = vld [vmem:[#allocation3 + $0x10] sm:$0xff]
      %v3613 = vld [vmem:[#allocation3 + $0x18] sm:$0xff]
      %v3614 = vld [vmem:[#allocation3 + $0x20] sm:$0xff]
      %v3615 = vld [vmem:[#allocation3 + $0x28] sm:$0xff]
      %v3616 = vld [vmem:[#allocation3 + $0x30] sm:$0xff]
      %v3617 = vld [vmem:[#allocation3 + $0x38] sm:$0xff]
      %v3618 = vld [vmem:[#allocation3 + $0x40] sm:$0xff]
      %v3619 = vld [vmem:[#allocation3 + $0x48] sm:$0xff]
      %v3620 = vld [vmem:[#allocation3 + $0x50] sm:$0xff]
      %v3621 = vld [vmem:[#allocation3 + $0x58] sm:$0xff]
      %v3622 = vld [vmem:[#allocation3 + $0x60] sm:$0xff]
      %v3623 = vld [vmem:[#allocation3 + $0x68] sm:$0xff]
      %v3624 = vld [vmem:[#allocation3 + $0x70] sm:$0xff]
      %v3625 = vld [vmem:[#allocation3 + $0x78] sm:$0xff]
      %v3626 = vld [vmem:[#allocation3 + $0x80] sm:$0xff]
      %v3627 = vld [vmem:[#allocation3 + $0x88] sm:$0xff]
      %v3628 = vld [vmem:[#allocation3 + $0x90] sm:$0xff]
      %v3629 = vld [vmem:[#allocation3 + $0x98] sm:$0xff]
      %v3630 = vld [vmem:[#allocation3 + $0xa0] sm:$0xff]
      %v3631 = vld [vmem:[#allocation3 + $0xa8] sm:$0xff]
      %v3632 = vld [vmem:[#allocation3 + $0xb0] sm:$0xff]
      %v3633 = vld [vmem:[#allocation3 + $0xb8] sm:$0xff]
      %v3634 = vld [vmem:[#allocation3 + $0xc0] sm:$0xff]
      %v3635 = vld [vmem:[#allocation3 + $0xc8] sm:$0xff]
      %v3636 = vld [vmem:[#allocation3 + $0xd0] sm:$0xff]
      %v3637 = vld [vmem:[#allocation3 + $0xd8] sm:$0xff]
      %v3638 = vld [vmem:[#allocation3 + $0xe0] sm:$0xff]
      %v3639 = vld [vmem:[#allocation3 + $0xe8] sm:$0xff]
      %v3640 = vld [vmem:[#allocation3 + $0xf0] sm:$0xff]
      %v3641 = vld [vmem:[#allocation3 + $0xf8] sm:$0xff]
      %v3642 = vadd.f32 %v3610, %v3531
      %v3643 = vadd.f32 %v3611, %v3533
      %v3644 = vadd.f32 %v3612, %v3536
      %v3645 = vadd.f32 %v3613, %v3538
      %v3646 = vadd.f32 %v3614, %v3541
      %v3647 = vadd.f32 %v3615, %v3543
      %v3648 = vadd.f32 %v3616, %v3546
      %v3649 = vadd.f32 %v3617, %v3548
      %v3650 = vadd.f32 %v3618, %v3551
      %v3651 = vadd.f32 %v3619, %v3553
      %v3652 = vadd.f32 %v3620, %v3556
      %v3653 = vadd.f32 %v3621, %v3558
      %v3654 = vadd.f32 %v3622, %v3561
      %v3655 = vadd.f32 %v3623, %v3563
      %v3656 = vadd.f32 %v3624, %v3566
      %v3657 = vadd.f32 %v3625, %v3568
      %v3658 = vadd.f32 %v3626, %v3571
      %v3659 = vadd.f32 %v3627, %v3573
      %v3660 = vadd.f32 %v3628, %v3576
      %v3661 = vadd.f32 %v3629, %v3578
      %v3662 = vadd.f32 %v3630, %v3581
      %v3663 = vadd.f32 %v3631, %v3583
      %v3664 = vadd.f32 %v3632, %v3586
      %v3665 = vadd.f32 %v3633, %v3588
      %v3666 = vadd.f32 %v3634, %v3591
      %v3667 = vadd.f32 %v3635, %v3593
      %v3668 = vadd.f32 %v3636, %v3596
      %v3669 = vadd.f32 %v3637, %v3598
      %v3670 = vadd.f32 %v3638, %v3601
      %v3671 = vadd.f32 %v3639, %v3603
      %v3672 = vadd.f32 %v3640, %v3606
      %v3673 = vadd.f32 %v3641, %v3608
      %3674 = vst [vmem:[#allocation3] sm:$0xff] %v3642
      %3675 = vst [vmem:[#allocation3 + $0x8] sm:$0xff] %v3643
      %3676 = vst [vmem:[#allocation3 + $0x10] sm:$0xff] %v3644
      %3677 = vst [vmem:[#allocation3 + $0x18] sm:$0xff] %v3645
      %3678 = vst [vmem:[#allocation3 + $0x20] sm:$0xff] %v3646
      %3679 = vst [vmem:[#allocation3 + $0x28] sm:$0xff] %v3647
      %3680 = vst [vmem:[#allocation3 + $0x30] sm:$0xff] %v3648
      %3681 = vst [vmem:[#allocation3 + $0x38] sm:$0xff] %v3649
      %3682 = vst [vmem:[#allocation3 + $0x40] sm:$0xff] %v3650
      %3683 = vst [vmem:[#allocation3 + $0x48] sm:$0xff] %v3651
      %3684 = vst [vmem:[#allocation3 + $0x50] sm:$0xff] %v3652
      %3685 = vst [vmem:[#allocation3 + $0x58] sm:$0xff] %v3653
      %3686 = vst [vmem:[#allocation3 + $0x60] sm:$0xff] %v3654
      %3687 = vst [vmem:[#allocation3 + $0x68] sm:$0xff] %v3655
      %3688 = vst [vmem:[#allocation3 + $0x70] sm:$0xff] %v3656
      %3689 = vst [vmem:[#allocation3 + $0x78] sm:$0xff] %v3657
      %3690 = vst [vmem:[#allocation3 + $0x80] sm:$0xff] %v3658
      %3691 = vst [vmem:[#allocation3 + $0x88] sm:$0xff] %v3659
      %3692 = vst [vmem:[#allocation3 + $0x90] sm:$0xff] %v3660
      %3693 = vst [vmem:[#allocation3 + $0x98] sm:$0xff] %v3661
      %3694 = vst [vmem:[#allocation3 + $0xa0] sm:$0xff] %v3662
      %3695 = vst [vmem:[#allocation3 + $0xa8] sm:$0xff] %v3663
      %3696 = vst [vmem:[#allocation3 + $0xb0] sm:$0xff] %v3664
      %3697 = vst [vmem:[#allocation3 + $0xb8] sm:$0xff] %v3665
      %3698 = vst [vmem:[#allocation3 + $0xc0] sm:$0xff] %v3666
      %3699 = vst [vmem:[#allocation3 + $0xc8] sm:$0xff] %v3667
      %3700 = vst [vmem:[#allocation3 + $0xd0] sm:$0xff] %v3668
      %3701 = vst [vmem:[#allocation3 + $0xd8] sm:$0xff] %v3669
      %3702 = vst [vmem:[#allocation3 + $0xe0] sm:$0xff] %v3670
      %3703 = vst [vmem:[#allocation3 + $0xe8] sm:$0xff] %v3671
      %3704 = vst [vmem:[#allocation3 + $0xf0] sm:$0xff] %v3672
      %3705 = vst [vmem:[#allocation3 + $0xf8] sm:$0xff] %v3673
      %s3706 = scalar_lea.vmem %s4, 384
      %v3707 = vld [vmem:[%s3706] sm:$0xf]
      %v3708 = vld [vmem:[%s3706 + $0x4] sm:$0xf]
      %v3709 = vld [vmem:[%s3706 + $0x8] sm:$0xf]
      %v3710 = vld [vmem:[%s3706 + $0xc] sm:$0xf]
      %v3711 = vld [vmem:[%s3706 + $0x10] sm:$0xf]
      %v3712 = vld [vmem:[%s3706 + $0x14] sm:$0xf]
      %v3713 = vld [vmem:[%s3706 + $0x18] sm:$0xf]
      %v3714 = vld [vmem:[%s3706 + $0x1c] sm:$0xf]
      %v3715 = vld [vmem:[%s3706 + $0x20] sm:$0xf]
      %v3716 = vld [vmem:[%s3706 + $0x24] sm:$0xf]
      %v3717 = vld [vmem:[%s3706 + $0x28] sm:$0xf]
      %v3718 = vld [vmem:[%s3706 + $0x2c] sm:$0xf]
      %v3719 = vld [vmem:[%s3706 + $0x30] sm:$0xf]
      %v3720 = vld [vmem:[%s3706 + $0x34] sm:$0xf]
      %v3721 = vld [vmem:[%s3706 + $0x38] sm:$0xf]
      %v3722 = vld [vmem:[%s3706 + $0x3c] sm:$0xf]
      %v3725 = vunpack.c.l.b16 %v1891
      %v3726 = vunpack.c.l.b16 %v1892
      %v3727 = vpack.c.b16 %v3726, %v3725
      %v3745 = vunpack.c.l.b16 %v3707
      %v3746 = vunpack.c.l.b16 %v3708
      %v3747 = vunpack.c.l.b16 %v3709
      %v3748 = vunpack.c.l.b16 %v3710
      %v3749 = vunpack.c.l.b16 %v3711
      %v3750 = vunpack.c.l.b16 %v3712
      %v3751 = vunpack.c.l.b16 %v3713
      %v3752 = vunpack.c.l.b16 %v3714
      %v3753 = vunpack.c.l.b16 %v3715
      %v3754 = vunpack.c.l.b16 %v3716
      %v3755 = vunpack.c.l.b16 %v3717
      %v3756 = vunpack.c.l.b16 %v3718
      %v3757 = vunpack.c.l.b16 %v3719
      %v3758 = vunpack.c.l.b16 %v3720
      %v3759 = vunpack.c.l.b16 %v3721
      %v3760 = vunpack.c.l.b16 %v3722
      %v3761 = vpack.c.b16 %v3746, %v3745
      %v3762 = vpack.c.b16 %v3748, %v3747
      %v3763 = vpack.c.b16 %v3750, %v3749
      %v3764 = vpack.c.b16 %v3752, %v3751
      %v3765 = vpack.c.b16 %v3754, %v3753
      %v3766 = vpack.c.b16 %v3756, %v3755
      %v3767 = vpack.c.b16 %v3758, %v3757
      %v3768 = vpack.c.b16 %v3760, %v3759
      %3777 = vmatpush.bf16.msra.mxu0 %v3768
      %3778 = vmatpush.bf16.msra.mxu0 %v3767
      %3779 = vmatpush.bf16.msra.mxu0 %v3766
      %3780 = vmatpush.bf16.msra.mxu0 %v3765
      %3781 = vmatpush.bf16.msra.mxu0 %v3764
      %3782 = vmatpush.bf16.msra.mxu0 %v3763
      %3783 = vmatpush.bf16.msra.mxu0 %v3762
      %3784 = vmatpush.bf16.msra.mxu0 %v3761
      %3785 = vmatmul.bf16.gmra.mxu0 %v2047
      %v3786 = vpop.f32.mrf.mxu0
      %v3787 = vadd.f32 0.0, %v3786
      %v3788 = vpop.f32.mrf.mxu0
      %v3789 = vadd.f32 0.0, %v3788
      %3790 = vmatmul.bf16.gmra.mxu0 %v2048
      %v3791 = vpop.f32.mrf.mxu0
      %v3792 = vadd.f32 0.0, %v3791
      %v3793 = vpop.f32.mrf.mxu0
      %v3794 = vadd.f32 0.0, %v3793
      %3795 = vmatmul.bf16.gmra.mxu0 %v2049
      %v3796 = vpop.f32.mrf.mxu0
      %v3797 = vadd.f32 0.0, %v3796
      %v3798 = vpop.f32.mrf.mxu0
      %v3799 = vadd.f32 0.0, %v3798
      %3800 = vmatmul.bf16.gmra.mxu0 %v2050
      %v3801 = vpop.f32.mrf.mxu0
      %v3802 = vadd.f32 0.0, %v3801
      %v3803 = vpop.f32.mrf.mxu0
      %v3804 = vadd.f32 0.0, %v3803
      %3805 = vmatmul.bf16.gmra.mxu0 %v2051
      %v3806 = vpop.f32.mrf.mxu0
      %v3807 = vadd.f32 0.0, %v3806
      %v3808 = vpop.f32.mrf.mxu0
      %v3809 = vadd.f32 0.0, %v3808
      %3810 = vmatmul.bf16.gmra.mxu0 %v2052
      %v3811 = vpop.f32.mrf.mxu0
      %v3812 = vadd.f32 0.0, %v3811
      %v3813 = vpop.f32.mrf.mxu0
      %v3814 = vadd.f32 0.0, %v3813
      %3815 = vmatmul.bf16.gmra.mxu0 %v2053
      %v3816 = vpop.f32.mrf.mxu0
      %v3817 = vadd.f32 0.0, %v3816
      %v3818 = vpop.f32.mrf.mxu0
      %v3819 = vadd.f32 0.0, %v3818
      %3820 = vmatmul.bf16.gmra.mxu0 %v2054
      %v3821 = vpop.f32.mrf.mxu0
      %v3822 = vadd.f32 0.0, %v3821
      %v3823 = vpop.f32.mrf.mxu0
      %v3824 = vadd.f32 0.0, %v3823
      %3825 = vmatmul.bf16.gmra.mxu0 %v2055
      %v3826 = vpop.f32.mrf.mxu0
      %v3827 = vadd.f32 0.0, %v3826
      %v3828 = vpop.f32.mrf.mxu0
      %v3829 = vadd.f32 0.0, %v3828
      %3830 = vmatmul.bf16.gmra.mxu0 %v2056
      %v3831 = vpop.f32.mrf.mxu0
      %v3832 = vadd.f32 0.0, %v3831
      %v3833 = vpop.f32.mrf.mxu0
      %v3834 = vadd.f32 0.0, %v3833
      %3835 = vmatmul.bf16.gmra.mxu0 %v2057
      %v3836 = vpop.f32.mrf.mxu0
      %v3837 = vadd.f32 0.0, %v3836
      %v3838 = vpop.f32.mrf.mxu0
      %v3839 = vadd.f32 0.0, %v3838
      %3840 = vmatmul.bf16.gmra.mxu0 %v2058
      %v3841 = vpop.f32.mrf.mxu0
      %v3842 = vadd.f32 0.0, %v3841
      %v3843 = vpop.f32.mrf.mxu0
      %v3844 = vadd.f32 0.0, %v3843
      %3845 = vmatmul.bf16.gmra.mxu0 %v2059
      %v3846 = vpop.f32.mrf.mxu0
      %v3847 = vadd.f32 0.0, %v3846
      %v3848 = vpop.f32.mrf.mxu0
      %v3849 = vadd.f32 0.0, %v3848
      %3850 = vmatmul.bf16.gmra.mxu0 %v2060
      %v3851 = vpop.f32.mrf.mxu0
      %v3852 = vadd.f32 0.0, %v3851
      %v3853 = vpop.f32.mrf.mxu0
      %v3854 = vadd.f32 0.0, %v3853
      %3855 = vmatmul.bf16.gmra.mxu0 %v2959
      %v3856 = vpop.f32.mrf.mxu0
      %v3857 = vadd.f32 0.0, %v3856
      %v3858 = vpop.f32.mrf.mxu0
      %v3859 = vadd.f32 0.0, %v3858
      %3860 = vmatmul.bf16.gmra.mxu0 %v3727
      %v3861 = vpop.f32.mrf.mxu0
      %v3862 = vadd.f32 0.0, %v3861
      %v3863 = vpop.f32.mrf.mxu0
      %v3864 = vadd.f32 0.0, %v3863
      %3865 = vdwg.mxu0
      %v3866 = vld [vmem:[#allocation3] sm:$0xff]
      %v3867 = vld [vmem:[#allocation3 + $0x8] sm:$0xff]
      %v3868 = vld [vmem:[#allocation3 + $0x10] sm:$0xff]
      %v3869 = vld [vmem:[#allocation3 + $0x18] sm:$0xff]
      %v3870 = vld [vmem:[#allocation3 + $0x20] sm:$0xff]
      %v3871 = vld [vmem:[#allocation3 + $0x28] sm:$0xff]
      %v3872 = vld [vmem:[#allocation3 + $0x30] sm:$0xff]
      %v3873 = vld [vmem:[#allocation3 + $0x38] sm:$0xff]
      %v3874 = vld [vmem:[#allocation3 + $0x40] sm:$0xff]
      %v3875 = vld [vmem:[#allocation3 + $0x48] sm:$0xff]
      %v3876 = vld [vmem:[#allocation3 + $0x50] sm:$0xff]
      %v3877 = vld [vmem:[#allocation3 + $0x58] sm:$0xff]
      %v3878 = vld [vmem:[#allocation3 + $0x60] sm:$0xff]
      %v3879 = vld [vmem:[#allocation3 + $0x68] sm:$0xff]
      %v3880 = vld [vmem:[#allocation3 + $0x70] sm:$0xff]
      %v3881 = vld [vmem:[#allocation3 + $0x78] sm:$0xff]
      %v3882 = vld [vmem:[#allocation3 + $0x80] sm:$0xff]
      %v3883 = vld [vmem:[#allocation3 + $0x88] sm:$0xff]
      %v3884 = vld [vmem:[#allocation3 + $0x90] sm:$0xff]
      %v3885 = vld [vmem:[#allocation3 + $0x98] sm:$0xff]
      %v3886 = vld [vmem:[#allocation3 + $0xa0] sm:$0xff]
      %v3887 = vld [vmem:[#allocation3 + $0xa8] sm:$0xff]
      %v3888 = vld [vmem:[#allocation3 + $0xb0] sm:$0xff]
      %v3889 = vld [vmem:[#allocation3 + $0xb8] sm:$0xff]
      %v3890 = vld [vmem:[#allocation3 + $0xc0] sm:$0xff]
      %v3891 = vld [vmem:[#allocation3 + $0xc8] sm:$0xff]
      %v3892 = vld [vmem:[#allocation3 + $0xd0] sm:$0xff]
      %v3893 = vld [vmem:[#allocation3 + $0xd8] sm:$0xff]
      %v3894 = vld [vmem:[#allocation3 + $0xe0] sm:$0xff]
      %v3895 = vld [vmem:[#allocation3 + $0xe8] sm:$0xff]
      %v3896 = vld [vmem:[#allocation3 + $0xf0] sm:$0xff]
      %v3897 = vld [vmem:[#allocation3 + $0xf8] sm:$0xff]
      %v3898 = vadd.f32 %v3866, %v3787
      %v3899 = vadd.f32 %v3867, %v3789
      %v3900 = vadd.f32 %v3868, %v3792
      %v3901 = vadd.f32 %v3869, %v3794
      %v3902 = vadd.f32 %v3870, %v3797
      %v3903 = vadd.f32 %v3871, %v3799
      %v3904 = vadd.f32 %v3872, %v3802
      %v3905 = vadd.f32 %v3873, %v3804
      %v3906 = vadd.f32 %v3874, %v3807
      %v3907 = vadd.f32 %v3875, %v3809
      %v3908 = vadd.f32 %v3876, %v3812
      %v3909 = vadd.f32 %v3877, %v3814
      %v3910 = vadd.f32 %v3878, %v3817
      %v3911 = vadd.f32 %v3879, %v3819
      %v3912 = vadd.f32 %v3880, %v3822
      %v3913 = vadd.f32 %v3881, %v3824
      %v3914 = vadd.f32 %v3882, %v3827
      %v3915 = vadd.f32 %v3883, %v3829
      %v3916 = vadd.f32 %v3884, %v3832
      %v3917 = vadd.f32 %v3885, %v3834
      %v3918 = vadd.f32 %v3886, %v3837
      %v3919 = vadd.f32 %v3887, %v3839
      %v3920 = vadd.f32 %v3888, %v3842
      %v3921 = vadd.f32 %v3889, %v3844
      %v3922 = vadd.f32 %v3890, %v3847
      %v3923 = vadd.f32 %v3891, %v3849
      %v3924 = vadd.f32 %v3892, %v3852
      %v3925 = vadd.f32 %v3893, %v3854
      %v3926 = vadd.f32 %v3894, %v3857
      %v3927 = vadd.f32 %v3895, %v3859
      %v3928 = vadd.f32 %v3896, %v3862
      %v3929 = vadd.f32 %v3897, %v3864
      %3930 = vst [vmem:[#allocation3] sm:$0xff] %v3898
      %3931 = vst [vmem:[#allocation3 + $0x8] sm:$0xff] %v3899
      %3932 = vst [vmem:[#allocation3 + $0x10] sm:$0xff] %v3900
      %3933 = vst [vmem:[#allocation3 + $0x18] sm:$0xff] %v3901
      %3934 = vst [vmem:[#allocation3 + $0x20] sm:$0xff] %v3902
      %3935 = vst [vmem:[#allocation3 + $0x28] sm:$0xff] %v3903
      %3936 = vst [vmem:[#allocation3 + $0x30] sm:$0xff] %v3904
      %3937 = vst [vmem:[#allocation3 + $0x38] sm:$0xff] %v3905
      %3938 = vst [vmem:[#allocation3 + $0x40] sm:$0xff] %v3906
      %3939 = vst [vmem:[#allocation3 + $0x48] sm:$0xff] %v3907
      %3940 = vst [vmem:[#allocation3 + $0x50] sm:$0xff] %v3908
      %3941 = vst [vmem:[#allocation3 + $0x58] sm:$0xff] %v3909
      %3942 = vst [vmem:[#allocation3 + $0x60] sm:$0xff] %v3910
      %3943 = vst [vmem:[#allocation3 + $0x68] sm:$0xff] %v3911
      %3944 = vst [vmem:[#allocation3 + $0x70] sm:$0xff] %v3912
      %3945 = vst [vmem:[#allocation3 + $0x78] sm:$0xff] %v3913
      %3946 = vst [vmem:[#allocation3 + $0x80] sm:$0xff] %v3914
      %3947 = vst [vmem:[#allocation3 + $0x88] sm:$0xff] %v3915
      %3948 = vst [vmem:[#allocation3 + $0x90] sm:$0xff] %v3916
      %3949 = vst [vmem:[#allocation3 + $0x98] sm:$0xff] %v3917
      %3950 = vst [vmem:[#allocation3 + $0xa0] sm:$0xff] %v3918
      %3951 = vst [vmem:[#allocation3 + $0xa8] sm:$0xff] %v3919
      %3952 = vst [vmem:[#allocation3 + $0xb0] sm:$0xff] %v3920
      %3953 = vst [vmem:[#allocation3 + $0xb8] sm:$0xff] %v3921
      %3954 = vst [vmem:[#allocation3 + $0xc0] sm:$0xff] %v3922
      %3955 = vst [vmem:[#allocation3 + $0xc8] sm:$0xff] %v3923
      %3956 = vst [vmem:[#allocation3 + $0xd0] sm:$0xff] %v3924
      %3957 = vst [vmem:[#allocation3 + $0xd8] sm:$0xff] %v3925
      %3958 = vst [vmem:[#allocation3 + $0xe0] sm:$0xff] %v3926
      %3959 = vst [vmem:[#allocation3 + $0xe8] sm:$0xff] %v3927
      %3960 = vst [vmem:[#allocation3 + $0xf0] sm:$0xff] %v3928
      %3961 = vst [vmem:[#allocation3 + $0xf8] sm:$0xff] %v3929
      %s3962 = scalar_lea.vmem %s4, 448
      %v3963 = vld [vmem:[%s3962] sm:$0xf]
      %v3964 = vld [vmem:[%s3962 + $0x4] sm:$0xf]
      %v3965 = vld [vmem:[%s3962 + $0x8] sm:$0xf]
      %v3966 = vld [vmem:[%s3962 + $0xc] sm:$0xf]
      %v3967 = vld [vmem:[%s3962 + $0x10] sm:$0xf]
      %v3968 = vld [vmem:[%s3962 + $0x14] sm:$0xf]
      %v3969 = vld [vmem:[%s3962 + $0x18] sm:$0xf]
      %v3970 = vld [vmem:[%s3962 + $0x1c] sm:$0xf]
      %v3971 = vld [vmem:[%s3962 + $0x20] sm:$0xf]
      %v3972 = vld [vmem:[%s3962 + $0x24] sm:$0xf]
      %v3973 = vld [vmem:[%s3962 + $0x28] sm:$0xf]
      %v3974 = vld [vmem:[%s3962 + $0x2c] sm:$0xf]
      %v3975 = vld [vmem:[%s3962 + $0x30] sm:$0xf]
      %v3976 = vld [vmem:[%s3962 + $0x34] sm:$0xf]
      %v3977 = vld [vmem:[%s3962 + $0x38] sm:$0xf]
      %v3978 = vld [vmem:[%s3962 + $0x3c] sm:$0xf]
      %v3981 = vunpack.c.l.b16 %v1927
      %v3982 = vunpack.c.l.b16 %v1928
      %v3983 = vpack.c.b16 %v3982, %v3981
      %v4001 = vunpack.c.l.b16 %v3963
      %v4002 = vunpack.c.l.b16 %v3964
      %v4003 = vunpack.c.l.b16 %v3965
      %v4004 = vunpack.c.l.b16 %v3966
      %v4005 = vunpack.c.l.b16 %v3967
      %v4006 = vunpack.c.l.b16 %v3968
      %v4007 = vunpack.c.l.b16 %v3969
      %v4008 = vunpack.c.l.b16 %v3970
      %v4009 = vunpack.c.l.b16 %v3971
      %v4010 = vunpack.c.l.b16 %v3972
      %v4011 = vunpack.c.l.b16 %v3973
      %v4012 = vunpack.c.l.b16 %v3974
      %v4013 = vunpack.c.l.b16 %v3975
      %v4014 = vunpack.c.l.b16 %v3976
      %v4015 = vunpack.c.l.b16 %v3977
      %v4016 = vunpack.c.l.b16 %v3978
      %v4017 = vpack.c.b16 %v4002, %v4001
      %v4018 = vpack.c.b16 %v4004, %v4003
      %v4019 = vpack.c.b16 %v4006, %v4005
      %v4020 = vpack.c.b16 %v4008, %v4007
      %v4021 = vpack.c.b16 %v4010, %v4009
      %v4022 = vpack.c.b16 %v4012, %v4011
      %v4023 = vpack.c.b16 %v4014, %v4013
      %v4024 = vpack.c.b16 %v4016, %v4015
      %4033 = vmatpush.bf16.msra.mxu0 %v4024
      %4034 = vmatpush.bf16.msra.mxu0 %v4023
      %4035 = vmatpush.bf16.msra.mxu0 %v4022
      %4036 = vmatpush.bf16.msra.mxu0 %v4021
      %4037 = vmatpush.bf16.msra.mxu0 %v4020
      %4038 = vmatpush.bf16.msra.mxu0 %v4019
      %4039 = vmatpush.bf16.msra.mxu0 %v4018
      %4040 = vmatpush.bf16.msra.mxu0 %v4017
      %4041 = vmatmul.bf16.gmra.mxu0 %v2329
      %v4042 = vpop.f32.mrf.mxu0
      %v4043 = vadd.f32 0.0, %v4042
      %v4044 = vpop.f32.mrf.mxu0
      %v4045 = vadd.f32 0.0, %v4044
      %4046 = vmatmul.bf16.gmra.mxu0 %v2330
      %v4047 = vpop.f32.mrf.mxu0
      %v4048 = vadd.f32 0.0, %v4047
      %v4049 = vpop.f32.mrf.mxu0
      %v4050 = vadd.f32 0.0, %v4049
      %4051 = vmatmul.bf16.gmra.mxu0 %v2331
      %v4052 = vpop.f32.mrf.mxu0
      %v4053 = vadd.f32 0.0, %v4052
      %v4054 = vpop.f32.mrf.mxu0
      %v4055 = vadd.f32 0.0, %v4054
      %4056 = vmatmul.bf16.gmra.mxu0 %v2332
      %v4057 = vpop.f32.mrf.mxu0
      %v4058 = vadd.f32 0.0, %v4057
      %v4059 = vpop.f32.mrf.mxu0
      %v4060 = vadd.f32 0.0, %v4059
      %4061 = vmatmul.bf16.gmra.mxu0 %v2333
      %v4062 = vpop.f32.mrf.mxu0
      %v4063 = vadd.f32 0.0, %v4062
      %v4064 = vpop.f32.mrf.mxu0
      %v4065 = vadd.f32 0.0, %v4064
      %4066 = vmatmul.bf16.gmra.mxu0 %v2334
      %v4067 = vpop.f32.mrf.mxu0
      %v4068 = vadd.f32 0.0, %v4067
      %v4069 = vpop.f32.mrf.mxu0
      %v4070 = vadd.f32 0.0, %v4069
      %4071 = vmatmul.bf16.gmra.mxu0 %v2335
      %v4072 = vpop.f32.mrf.mxu0
      %v4073 = vadd.f32 0.0, %v4072
      %v4074 = vpop.f32.mrf.mxu0
      %v4075 = vadd.f32 0.0, %v4074
      %4076 = vmatmul.bf16.gmra.mxu0 %v2336
      %v4077 = vpop.f32.mrf.mxu0
      %v4078 = vadd.f32 0.0, %v4077
      %v4079 = vpop.f32.mrf.mxu0
      %v4080 = vadd.f32 0.0, %v4079
      %4081 = vmatmul.bf16.gmra.mxu0 %v2337
      %v4082 = vpop.f32.mrf.mxu0
      %v4083 = vadd.f32 0.0, %v4082
      %v4084 = vpop.f32.mrf.mxu0
      %v4085 = vadd.f32 0.0, %v4084
      %4086 = vmatmul.bf16.gmra.mxu0 %v2338
      %v4087 = vpop.f32.mrf.mxu0
      %v4088 = vadd.f32 0.0, %v4087
      %v4089 = vpop.f32.mrf.mxu0
      %v4090 = vadd.f32 0.0, %v4089
      %4091 = vmatmul.bf16.gmra.mxu0 %v2339
      %v4092 = vpop.f32.mrf.mxu0
      %v4093 = vadd.f32 0.0, %v4092
      %v4094 = vpop.f32.mrf.mxu0
      %v4095 = vadd.f32 0.0, %v4094
      %4096 = vmatmul.bf16.gmra.mxu0 %v2340
      %v4097 = vpop.f32.mrf.mxu0
      %v4098 = vadd.f32 0.0, %v4097
      %v4099 = vpop.f32.mrf.mxu0
      %v4100 = vadd.f32 0.0, %v4099
      %4101 = vmatmul.bf16.gmra.mxu0 %v2341
      %v4102 = vpop.f32.mrf.mxu0
      %v4103 = vadd.f32 0.0, %v4102
      %v4104 = vpop.f32.mrf.mxu0
      %v4105 = vadd.f32 0.0, %v4104
      %4106 = vmatmul.bf16.gmra.mxu0 %v2342
      %v4107 = vpop.f32.mrf.mxu0
      %v4108 = vadd.f32 0.0, %v4107
      %v4109 = vpop.f32.mrf.mxu0
      %v4110 = vadd.f32 0.0, %v4109
      %4111 = vmatmul.bf16.gmra.mxu0 %v3215
      %v4112 = vpop.f32.mrf.mxu0
      %v4113 = vadd.f32 0.0, %v4112
      %v4114 = vpop.f32.mrf.mxu0
      %v4115 = vadd.f32 0.0, %v4114
      %4116 = vmatmul.bf16.gmra.mxu0 %v3983
      %v4117 = vpop.f32.mrf.mxu0
      %v4118 = vadd.f32 0.0, %v4117
      %v4119 = vpop.f32.mrf.mxu0
      %v4120 = vadd.f32 0.0, %v4119
      %4121 = vdwg.mxu0
      %v4122 = vld [vmem:[#allocation3] sm:$0xff]
      %v4123 = vld [vmem:[#allocation3 + $0x8] sm:$0xff]
      %v4124 = vld [vmem:[#allocation3 + $0x10] sm:$0xff]
      %v4125 = vld [vmem:[#allocation3 + $0x18] sm:$0xff]
      %v4126 = vld [vmem:[#allocation3 + $0x20] sm:$0xff]
      %v4127 = vld [vmem:[#allocation3 + $0x28] sm:$0xff]
      %v4128 = vld [vmem:[#allocation3 + $0x30] sm:$0xff]
      %v4129 = vld [vmem:[#allocation3 + $0x38] sm:$0xff]
      %v4130 = vld [vmem:[#allocation3 + $0x40] sm:$0xff]
      %v4131 = vld [vmem:[#allocation3 + $0x48] sm:$0xff]
      %v4132 = vld [vmem:[#allocation3 + $0x50] sm:$0xff]
      %v4133 = vld [vmem:[#allocation3 + $0x58] sm:$0xff]
      %v4134 = vld [vmem:[#allocation3 + $0x60] sm:$0xff]
      %v4135 = vld [vmem:[#allocation3 + $0x68] sm:$0xff]
      %v4136 = vld [vmem:[#allocation3 + $0x70] sm:$0xff]
      %v4137 = vld [vmem:[#allocation3 + $0x78] sm:$0xff]
      %v4138 = vld [vmem:[#allocation3 + $0x80] sm:$0xff]
      %v4139 = vld [vmem:[#allocation3 + $0x88] sm:$0xff]
      %v4140 = vld [vmem:[#allocation3 + $0x90] sm:$0xff]
      %v4141 = vld [vmem:[#allocation3 + $0x98] sm:$0xff]
      %v4142 = vld [vmem:[#allocation3 + $0xa0] sm:$0xff]
      %v4143 = vld [vmem:[#allocation3 + $0xa8] sm:$0xff]
      %v4144 = vld [vmem:[#allocation3 + $0xb0] sm:$0xff]
      %v4145 = vld [vmem:[#allocation3 + $0xb8] sm:$0xff]
      %v4146 = vld [vmem:[#allocation3 + $0xc0] sm:$0xff]
      %v4147 = vld [vmem:[#allocation3 + $0xc8] sm:$0xff]
      %v4148 = vld [vmem:[#allocation3 + $0xd0] sm:$0xff]
      %v4149 = vld [vmem:[#allocation3 + $0xd8] sm:$0xff]
      %v4150 = vld [vmem:[#allocation3 + $0xe0] sm:$0xff]
      %v4151 = vld [vmem:[#allocation3 + $0xe8] sm:$0xff]
      %v4152 = vld [vmem:[#allocation3 + $0xf0] sm:$0xff]
      %v4153 = vld [vmem:[#allocation3 + $0xf8] sm:$0xff]
      %v4154 = vadd.f32 %v4122, %v4043
      %v4155 = vadd.f32 %v4123, %v4045
      %v4156 = vadd.f32 %v4124, %v4048
      %v4157 = vadd.f32 %v4125, %v4050
      %v4158 = vadd.f32 %v4126, %v4053
      %v4159 = vadd.f32 %v4127, %v4055
      %v4160 = vadd.f32 %v4128, %v4058
      %v4161 = vadd.f32 %v4129, %v4060
      %v4162 = vadd.f32 %v4130, %v4063
      %v4163 = vadd.f32 %v4131, %v4065
      %v4164 = vadd.f32 %v4132, %v4068
      %v4165 = vadd.f32 %v4133, %v4070
      %v4166 = vadd.f32 %v4134, %v4073
      %v4167 = vadd.f32 %v4135, %v4075
      %v4168 = vadd.f32 %v4136, %v4078
      %v4169 = vadd.f32 %v4137, %v4080
      %v4170 = vadd.f32 %v4138, %v4083
      %v4171 = vadd.f32 %v4139, %v4085
      %v4172 = vadd.f32 %v4140, %v4088
      %v4173 = vadd.f32 %v4141, %v4090
      %v4174 = vadd.f32 %v4142, %v4093
      %v4175 = vadd.f32 %v4143, %v4095
      %v4176 = vadd.f32 %v4144, %v4098
      %v4177 = vadd.f32 %v4145, %v4100
      %v4178 = vadd.f32 %v4146, %v4103
      %v4179 = vadd.f32 %v4147, %v4105
      %v4180 = vadd.f32 %v4148, %v4108
      %v4181 = vadd.f32 %v4149, %v4110
      %v4182 = vadd.f32 %v4150, %v4113
      %v4183 = vadd.f32 %v4151, %v4115
      %v4184 = vadd.f32 %v4152, %v4118
      %v4185 = vadd.f32 %v4153, %v4120
      %4186 = vst [vmem:[#allocation3] sm:$0xff] %v4154
      %4187 = vst [vmem:[#allocation3 + $0x8] sm:$0xff] %v4155
      %4188 = vst [vmem:[#allocation3 + $0x10] sm:$0xff] %v4156
      %4189 = vst [vmem:[#allocation3 + $0x18] sm:$0xff] %v4157
      %4190 = vst [vmem:[#allocation3 + $0x20] sm:$0xff] %v4158
      %4191 = vst [vmem:[#allocation3 + $0x28] sm:$0xff] %v4159
      %4192 = vst [vmem:[#allocation3 + $0x30] sm:$0xff] %v4160
      %4193 = vst [vmem:[#allocation3 + $0x38] sm:$0xff] %v4161
      %4194 = vst [vmem:[#allocation3 + $0x40] sm:$0xff] %v4162
      %4195 = vst [vmem:[#allocation3 + $0x48] sm:$0xff] %v4163
      %4196 = vst [vmem:[#allocation3 + $0x50] sm:$0xff] %v4164
      %4197 = vst [vmem:[#allocation3 + $0x58] sm:$0xff] %v4165
      %4198 = vst [vmem:[#allocation3 + $0x60] sm:$0xff] %v4166
      %4199 = vst [vmem:[#allocation3 + $0x68] sm:$0xff] %v4167
      %4200 = vst [vmem:[#allocation3 + $0x70] sm:$0xff] %v4168
      %4201 = vst [vmem:[#allocation3 + $0x78] sm:$0xff] %v4169
      %4202 = vst [vmem:[#allocation3 + $0x80] sm:$0xff] %v4170
      %4203 = vst [vmem:[#allocation3 + $0x88] sm:$0xff] %v4171
      %4204 = vst [vmem:[#allocation3 + $0x90] sm:$0xff] %v4172
      %4205 = vst [vmem:[#allocation3 + $0x98] sm:$0xff] %v4173
      %4206 = vst [vmem:[#allocation3 + $0xa0] sm:$0xff] %v4174
      %4207 = vst [vmem:[#allocation3 + $0xa8] sm:$0xff] %v4175
      %4208 = vst [vmem:[#allocation3 + $0xb0] sm:$0xff] %v4176
      %4209 = vst [vmem:[#allocation3 + $0xb8] sm:$0xff] %v4177
      %4210 = vst [vmem:[#allocation3 + $0xc0] sm:$0xff] %v4178
      %4211 = vst [vmem:[#allocation3 + $0xc8] sm:$0xff] %v4179
      %4212 = vst [vmem:[#allocation3 + $0xd0] sm:$0xff] %v4180
      %4213 = vst [vmem:[#allocation3 + $0xd8] sm:$0xff] %v4181
      %4214 = vst [vmem:[#allocation3 + $0xe0] sm:$0xff] %v4182
      %4215 = vst [vmem:[#allocation3 + $0xe8] sm:$0xff] %v4183
      %4216 = vst [vmem:[#allocation3 + $0xf0] sm:$0xff] %v4184
      %4217 = vst [vmem:[#allocation3 + $0xf8] sm:$0xff] %v4185
      %s4218 = scalar_lea.vmem %s4, 512
      %v4219 = vld [vmem:[%s4218] sm:$0xf]
      %v4220 = vld [vmem:[%s4218 + $0x4] sm:$0xf]
      %v4221 = vld [vmem:[%s4218 + $0x8] sm:$0xf]
      %v4222 = vld [vmem:[%s4218 + $0xc] sm:$0xf]
      %v4223 = vld [vmem:[%s4218 + $0x10] sm:$0xf]
      %v4224 = vld [vmem:[%s4218 + $0x14] sm:$0xf]
      %v4225 = vld [vmem:[%s4218 + $0x18] sm:$0xf]
      %v4226 = vld [vmem:[%s4218 + $0x1c] sm:$0xf]
      %v4227 = vld [vmem:[%s4218 + $0x20] sm:$0xf]
      %v4228 = vld [vmem:[%s4218 + $0x24] sm:$0xf]
      %v4229 = vld [vmem:[%s4218 + $0x28] sm:$0xf]
      %v4230 = vld [vmem:[%s4218 + $0x2c] sm:$0xf]
      %v4231 = vld [vmem:[%s4218 + $0x30] sm:$0xf]
      %v4232 = vld [vmem:[%s4218 + $0x34] sm:$0xf]
      %v4233 = vld [vmem:[%s4218 + $0x38] sm:$0xf]
      %v4234 = vld [vmem:[%s4218 + $0x3c] sm:$0xf]
      %v4237 = vunpack.c.l.b16 %v1963
      %v4238 = vunpack.c.l.b16 %v1964
      %v4239 = vpack.c.b16 %v4238, %v4237
      %v4257 = vunpack.c.l.b16 %v4219
      %v4258 = vunpack.c.l.b16 %v4220
      %v4259 = vunpack.c.l.b16 %v4221
      %v4260 = vunpack.c.l.b16 %v4222
      %v4261 = vunpack.c.l.b16 %v4223
      %v4262 = vunpack.c.l.b16 %v4224
      %v4263 = vunpack.c.l.b16 %v4225
      %v4264 = vunpack.c.l.b16 %v4226
      %v4265 = vunpack.c.l.b16 %v4227
      %v4266 = vunpack.c.l.b16 %v4228
      %v4267 = vunpack.c.l.b16 %v4229
      %v4268 = vunpack.c.l.b16 %v4230
      %v4269 = vunpack.c.l.b16 %v4231
      %v4270 = vunpack.c.l.b16 %v4232
      %v4271 = vunpack.c.l.b16 %v4233
      %v4272 = vunpack.c.l.b16 %v4234
      %v4273 = vpack.c.b16 %v4258, %v4257
      %v4274 = vpack.c.b16 %v4260, %v4259
      %v4275 = vpack.c.b16 %v4262, %v4261
      %v4276 = vpack.c.b16 %v4264, %v4263
      %v4277 = vpack.c.b16 %v4266, %v4265
      %v4278 = vpack.c.b16 %v4268, %v4267
      %v4279 = vpack.c.b16 %v4270, %v4269
      %v4280 = vpack.c.b16 %v4272, %v4271
      %4289 = vmatpush.bf16.msra.mxu0 %v4280
      %4290 = vmatpush.bf16.msra.mxu0 %v4279
      %4291 = vmatpush.bf16.msra.mxu0 %v4278
      %4292 = vmatpush.bf16.msra.mxu0 %v4277
      %4293 = vmatpush.bf16.msra.mxu0 %v4276
      %4294 = vmatpush.bf16.msra.mxu0 %v4275
      %4295 = vmatpush.bf16.msra.mxu0 %v4274
      %4296 = vmatpush.bf16.msra.mxu0 %v4273
      %4297 = vmatmul.bf16.gmra.mxu0 %v2675
      %v4298 = vpop.f32.mrf.mxu0
      %v4299 = vadd.f32 0.0, %v4298
      %v4300 = vpop.f32.mrf.mxu0
      %v4301 = vadd.f32 0.0, %v4300
      %4302 = vmatmul.bf16.gmra.mxu0 %v2676
      %v4303 = vpop.f32.mrf.mxu0
      %v4304 = vadd.f32 0.0, %v4303
      %v4305 = vpop.f32.mrf.mxu0
      %v4306 = vadd.f32 0.0, %v4305
      %4307 = vmatmul.bf16.gmra.mxu0 %v2677
      %v4308 = vpop.f32.mrf.mxu0
      %v4309 = vadd.f32 0.0, %v4308
      %v4310 = vpop.f32.mrf.mxu0
      %v4311 = vadd.f32 0.0, %v4310
      %4312 = vmatmul.bf16.gmra.mxu0 %v2678
      %v4313 = vpop.f32.mrf.mxu0
      %v4314 = vadd.f32 0.0, %v4313
      %v4315 = vpop.f32.mrf.mxu0
      %v4316 = vadd.f32 0.0, %v4315
      %4317 = vmatmul.bf16.gmra.mxu0 %v2679
      %v4318 = vpop.f32.mrf.mxu0
      %v4319 = vadd.f32 0.0, %v4318
      %v4320 = vpop.f32.mrf.mxu0
      %v4321 = vadd.f32 0.0, %v4320
      %4322 = vmatmul.bf16.gmra.mxu0 %v2680
      %v4323 = vpop.f32.mrf.mxu0
      %v4324 = vadd.f32 0.0, %v4323
      %v4325 = vpop.f32.mrf.mxu0
      %v4326 = vadd.f32 0.0, %v4325
      %4327 = vmatmul.bf16.gmra.mxu0 %v2681
      %v4328 = vpop.f32.mrf.mxu0
      %v4329 = vadd.f32 0.0, %v4328
      %v4330 = vpop.f32.mrf.mxu0
      %v4331 = vadd.f32 0.0, %v4330
      %4332 = vmatmul.bf16.gmra.mxu0 %v2682
      %v4333 = vpop.f32.mrf.mxu0
      %v4334 = vadd.f32 0.0, %v4333
      %v4335 = vpop.f32.mrf.mxu0
      %v4336 = vadd.f32 0.0, %v4335
      %4337 = vmatmul.bf16.gmra.mxu0 %v2683
      %v4338 = vpop.f32.mrf.mxu0
      %v4339 = vadd.f32 0.0, %v4338
      %v4340 = vpop.f32.mrf.mxu0
      %v4341 = vadd.f32 0.0, %v4340
      %4342 = vmatmul.bf16.gmra.mxu0 %v2684
      %v4343 = vpop.f32.mrf.mxu0
      %v4344 = vadd.f32 0.0, %v4343
      %v4345 = vpop.f32.mrf.mxu0
      %v4346 = vadd.f32 0.0, %v4345
      %4347 = vmatmul.bf16.gmra.mxu0 %v2685
      %v4348 = vpop.f32.mrf.mxu0
      %v4349 = vadd.f32 0.0, %v4348
      %v4350 = vpop.f32.mrf.mxu0
      %v4351 = vadd.f32 0.0, %v4350
      %4352 = vmatmul.bf16.gmra.mxu0 %v2686
      %v4353 = vpop.f32.mrf.mxu0
      %v4354 = vadd.f32 0.0, %v4353
      %v4355 = vpop.f32.mrf.mxu0
      %v4356 = vadd.f32 0.0, %v4355
      %4357 = vmatmul.bf16.gmra.mxu0 %v2687
      %v4358 = vpop.f32.mrf.mxu0
      %v4359 = vadd.f32 0.0, %v4358
      %v4360 = vpop.f32.mrf.mxu0
      %v4361 = vadd.f32 0.0, %v4360
      %4362 = vmatmul.bf16.gmra.mxu0 %v2688
      %v4363 = vpop.f32.mrf.mxu0
      %v4364 = vadd.f32 0.0, %v4363
      %v4365 = vpop.f32.mrf.mxu0
      %v4366 = vadd.f32 0.0, %v4365
      %4367 = vmatmul.bf16.gmra.mxu0 %v3471
      %v4368 = vpop.f32.mrf.mxu0
      %v4369 = vadd.f32 0.0, %v4368
      %v4370 = vpop.f32.mrf.mxu0
      %v4371 = vadd.f32 0.0, %v4370
      %4372 = vmatmul.bf16.gmra.mxu0 %v4239
      %v4373 = vpop.f32.mrf.mxu0
      %v4374 = vadd.f32 0.0, %v4373
      %v4375 = vpop.f32.mrf.mxu0
      %v4376 = vadd.f32 0.0, %v4375
      %4377 = vdwg.mxu0
      %v4378 = vld [vmem:[#allocation3] sm:$0xff]
      %v4379 = vld [vmem:[#allocation3 + $0x8] sm:$0xff]
      %v4380 = vld [vmem:[#allocation3 + $0x10] sm:$0xff]
      %v4381 = vld [vmem:[#allocation3 + $0x18] sm:$0xff]
      %v4382 = vld [vmem:[#allocation3 + $0x20] sm:$0xff]
      %v4383 = vld [vmem:[#allocation3 + $0x28] sm:$0xff]
      %v4384 = vld [vmem:[#allocation3 + $0x30] sm:$0xff]
      %v4385 = vld [vmem:[#allocation3 + $0x38] sm:$0xff]
      %v4386 = vld [vmem:[#allocation3 + $0x40] sm:$0xff]
      %v4387 = vld [vmem:[#allocation3 + $0x48] sm:$0xff]
      %v4388 = vld [vmem:[#allocation3 + $0x50] sm:$0xff]
      %v4389 = vld [vmem:[#allocation3 + $0x58] sm:$0xff]
      %v4390 = vld [vmem:[#allocation3 + $0x60] sm:$0xff]
      %v4391 = vld [vmem:[#allocation3 + $0x68] sm:$0xff]
      %v4392 = vld [vmem:[#allocation3 + $0x70] sm:$0xff]
      %v4393 = vld [vmem:[#allocation3 + $0x78] sm:$0xff]
      %v4394 = vld [vmem:[#allocation3 + $0x80] sm:$0xff]
      %v4395 = vld [vmem:[#allocation3 + $0x88] sm:$0xff]
      %v4396 = vld [vmem:[#allocation3 + $0x90] sm:$0xff]
      %v4397 = vld [vmem:[#allocation3 + $0x98] sm:$0xff]
      %v4398 = vld [vmem:[#allocation3 + $0xa0] sm:$0xff]
      %v4399 = vld [vmem:[#allocation3 + $0xa8] sm:$0xff]
      %v4400 = vld [vmem:[#allocation3 + $0xb0] sm:$0xff]
      %v4401 = vld [vmem:[#allocation3 + $0xb8] sm:$0xff]
      %v4402 = vld [vmem:[#allocation3 + $0xc0] sm:$0xff]
      %v4403 = vld [vmem:[#allocation3 + $0xc8] sm:$0xff]
      %v4404 = vld [vmem:[#allocation3 + $0xd0] sm:$0xff]
      %v4405 = vld [vmem:[#allocation3 + $0xd8] sm:$0xff]
      %v4406 = vld [vmem:[#allocation3 + $0xe0] sm:$0xff]
      %v4407 = vld [vmem:[#allocation3 + $0xe8] sm:$0xff]
      %v4408 = vld [vmem:[#allocation3 + $0xf0] sm:$0xff]
      %v4409 = vld [vmem:[#allocation3 + $0xf8] sm:$0xff]
      %v4410 = vadd.f32 %v4378, %v4299
      %v4411 = vadd.f32 %v4379, %v4301
      %v4412 = vadd.f32 %v4380, %v4304
      %v4413 = vadd.f32 %v4381, %v4306
      %v4414 = vadd.f32 %v4382, %v4309
      %v4415 = vadd.f32 %v4383, %v4311
      %v4416 = vadd.f32 %v4384, %v4314
      %v4417 = vadd.f32 %v4385, %v4316
      %v4418 = vadd.f32 %v4386, %v4319
      %v4419 = vadd.f32 %v4387, %v4321
      %v4420 = vadd.f32 %v4388, %v4324
      %v4421 = vadd.f32 %v4389, %v4326
      %v4422 = vadd.f32 %v4390, %v4329
      %v4423 = vadd.f32 %v4391, %v4331
      %v4424 = vadd.f32 %v4392, %v4334
      %v4425 = vadd.f32 %v4393, %v4336
      %v4426 = vadd.f32 %v4394, %v4339
      %v4427 = vadd.f32 %v4395, %v4341
      %v4428 = vadd.f32 %v4396, %v4344
      %v4429 = vadd.f32 %v4397, %v4346
      %v4430 = vadd.f32 %v4398, %v4349
      %v4431 = vadd.f32 %v4399, %v4351
      %v4432 = vadd.f32 %v4400, %v4354
      %v4433 = vadd.f32 %v4401, %v4356
      %v4434 = vadd.f32 %v4402, %v4359
      %v4435 = vadd.f32 %v4403, %v4361
      %v4436 = vadd.f32 %v4404, %v4364
      %v4437 = vadd.f32 %v4405, %v4366
      %v4438 = vadd.f32 %v4406, %v4369
      %v4439 = vadd.f32 %v4407, %v4371
      %v4440 = vadd.f32 %v4408, %v4374
      %v4441 = vadd.f32 %v4409, %v4376
      %4442 = vst [vmem:[#allocation3] sm:$0xff] %v4410
      %4443 = vst [vmem:[#allocation3 + $0x8] sm:$0xff] %v4411
      %4444 = vst [vmem:[#allocation3 + $0x10] sm:$0xff] %v4412
      %4445 = vst [vmem:[#allocation3 + $0x18] sm:$0xff] %v4413
      %4446 = vst [vmem:[#allocation3 + $0x20] sm:$0xff] %v4414
      %4447 = vst [vmem:[#allocation3 + $0x28] sm:$0xff] %v4415
      %4448 = vst [vmem:[#allocation3 + $0x30] sm:$0xff] %v4416
      %4449 = vst [vmem:[#allocation3 + $0x38] sm:$0xff] %v4417
      %4450 = vst [vmem:[#allocation3 + $0x40] sm:$0xff] %v4418
      %4451 = vst [vmem:[#allocation3 + $0x48] sm:$0xff] %v4419
      %4452 = vst [vmem:[#allocation3 + $0x50] sm:$0xff] %v4420
      %4453 = vst [vmem:[#allocation3 + $0x58] sm:$0xff] %v4421
      %4454 = vst [vmem:[#allocation3 + $0x60] sm:$0xff] %v4422
      %4455 = vst [vmem:[#allocation3 + $0x68] sm:$0xff] %v4423
      %4456 = vst [vmem:[#allocation3 + $0x70] sm:$0xff] %v4424
      %4457 = vst [vmem:[#allocation3 + $0x78] sm:$0xff] %v4425
      %4458 = vst [vmem:[#allocation3 + $0x80] sm:$0xff] %v4426
      %4459 = vst [vmem:[#allocation3 + $0x88] sm:$0xff] %v4427
      %4460 = vst [vmem:[#allocation3 + $0x90] sm:$0xff] %v4428
      %4461 = vst [vmem:[#allocation3 + $0x98] sm:$0xff] %v4429
      %4462 = vst [vmem:[#allocation3 + $0xa0] sm:$0xff] %v4430
      %4463 = vst [vmem:[#allocation3 + $0xa8] sm:$0xff] %v4431
      %4464 = vst [vmem:[#allocation3 + $0xb0] sm:$0xff] %v4432
      %4465 = vst [vmem:[#allocation3 + $0xb8] sm:$0xff] %v4433
      %4466 = vst [vmem:[#allocation3 + $0xc0] sm:$0xff] %v4434
      %4467 = vst [vmem:[#allocation3 + $0xc8] sm:$0xff] %v4435
      %4468 = vst [vmem:[#allocation3 + $0xd0] sm:$0xff] %v4436
      %4469 = vst [vmem:[#allocation3 + $0xd8] sm:$0xff] %v4437
      %4470 = vst [vmem:[#allocation3 + $0xe0] sm:$0xff] %v4438
      %4471 = vst [vmem:[#allocation3 + $0xe8] sm:$0xff] %v4439
      %4472 = vst [vmem:[#allocation3 + $0xf0] sm:$0xff] %v4440
      %4473 = vst [vmem:[#allocation3 + $0xf8] sm:$0xff] %v4441
      %v4474 = vld [vmem:[#allocation3] sm:$0xff]
      %v4475 = vld [vmem:[#allocation3 + $0x8] sm:$0xff]
      %v4476 = vld [vmem:[#allocation3 + $0x10] sm:$0xff]
      %v4477 = vld [vmem:[#allocation3 + $0x18] sm:$0xff]
      %v4478 = vld [vmem:[#allocation3 + $0x20] sm:$0xff]
      %v4479 = vld [vmem:[#allocation3 + $0x28] sm:$0xff]
      %v4480 = vld [vmem:[#allocation3 + $0x30] sm:$0xff]
      %v4481 = vld [vmem:[#allocation3 + $0x38] sm:$0xff]
      %v4482 = vld [vmem:[#allocation3 + $0x40] sm:$0xff]
      %v4483 = vld [vmem:[#allocation3 + $0x48] sm:$0xff]
      %v4484 = vld [vmem:[#allocation3 + $0x50] sm:$0xff]
      %v4485 = vld [vmem:[#allocation3 + $0x58] sm:$0xff]
      %v4486 = vld [vmem:[#allocation3 + $0x60] sm:$0xff]
      %v4487 = vld [vmem:[#allocation3 + $0x68] sm:$0xff]
      %v4488 = vld [vmem:[#allocation3 + $0x70] sm:$0xff]
      %v4489 = vld [vmem:[#allocation3 + $0x78] sm:$0xff]
      %v4490 = vld [vmem:[#allocation3 + $0x80] sm:$0xff]
      %v4491 = vld [vmem:[#allocation3 + $0x88] sm:$0xff]
      %v4492 = vld [vmem:[#allocation3 + $0x90] sm:$0xff]
      %v4493 = vld [vmem:[#allocation3 + $0x98] sm:$0xff]
      %v4494 = vld [vmem:[#allocation3 + $0xa0] sm:$0xff]
      %v4495 = vld [vmem:[#allocation3 + $0xa8] sm:$0xff]
      %v4496 = vld [vmem:[#allocation3 + $0xb0] sm:$0xff]
      %v4497 = vld [vmem:[#allocation3 + $0xb8] sm:$0xff]
      %v4498 = vld [vmem:[#allocation3 + $0xc0] sm:$0xff]
      %v4499 = vld [vmem:[#allocation3 + $0xc8] sm:$0xff]
      %v4500 = vld [vmem:[#allocation3 + $0xd0] sm:$0xff]
      %v4501 = vld [vmem:[#allocation3 + $0xd8] sm:$0xff]
      %v4502 = vld [vmem:[#allocation3 + $0xe0] sm:$0xff]
      %v4503 = vld [vmem:[#allocation3 + $0xe8] sm:$0xff]
      %v4504 = vld [vmem:[#allocation3 + $0xf0] sm:$0xff]
      %v4505 = vld [vmem:[#allocation3 + $0xf8] sm:$0xff]
      %v4506 = vld [vmem:[%s5] sm:$0x1]
      %v4508 = vperm.slane %v4506, 0
      %v4510 = vadd.f32 %v4474, %v4508
      %v4511 = vadd.f32 %v4475, %v4508
      %v4512 = vadd.f32 %v4476, %v4508
      %v4513 = vadd.f32 %v4477, %v4508
      %v4514 = vadd.f32 %v4478, %v4508
      %v4515 = vadd.f32 %v4479, %v4508
      %v4516 = vadd.f32 %v4480, %v4508
      %v4517 = vadd.f32 %v4481, %v4508
      %v4518 = vadd.f32 %v4482, %v4508
      %v4519 = vadd.f32 %v4483, %v4508
      %v4520 = vadd.f32 %v4484, %v4508
      %v4521 = vadd.f32 %v4485, %v4508
      %v4522 = vadd.f32 %v4486, %v4508
      %v4523 = vadd.f32 %v4487, %v4508
      %v4524 = vadd.f32 %v4488, %v4508
      %v4525 = vadd.f32 %v4489, %v4508
      %v4526 = vadd.f32 %v4490, %v4508
      %v4527 = vadd.f32 %v4491, %v4508
      %v4528 = vadd.f32 %v4492, %v4508
      %v4529 = vadd.f32 %v4493, %v4508
      %v4530 = vadd.f32 %v4494, %v4508
      %v4531 = vadd.f32 %v4495, %v4508
      %v4532 = vadd.f32 %v4496, %v4508
      %v4533 = vadd.f32 %v4497, %v4508
      %v4534 = vadd.f32 %v4498, %v4508
      %v4535 = vadd.f32 %v4499, %v4508
      %v4536 = vadd.f32 %v4500, %v4508
      %v4537 = vadd.f32 %v4501, %v4508
      %v4538 = vadd.f32 %v4502, %v4508
      %v4539 = vadd.f32 %v4503, %v4508
      %v4540 = vadd.f32 %v4504, %v4508
      %v4541 = vadd.f32 %v4505, %v4508
      %v4542 = vxor.u32 %v4510, 2147483648
      %v4543 = vxor.u32 %v4511, 2147483648
      %v4544 = vxor.u32 %v4512, 2147483648
      %v4545 = vxor.u32 %v4513, 2147483648
      %v4546 = vxor.u32 %v4514, 2147483648
      %v4547 = vxor.u32 %v4515, 2147483648
      %v4548 = vxor.u32 %v4516, 2147483648
      %v4549 = vxor.u32 %v4517, 2147483648
      %v4550 = vxor.u32 %v4518, 2147483648
      %v4551 = vxor.u32 %v4519, 2147483648
      %v4552 = vxor.u32 %v4520, 2147483648
      %v4553 = vxor.u32 %v4521, 2147483648
      %v4554 = vxor.u32 %v4522, 2147483648
      %v4555 = vxor.u32 %v4523, 2147483648
      %v4556 = vxor.u32 %v4524, 2147483648
      %v4557 = vxor.u32 %v4525, 2147483648
      %v4558 = vxor.u32 %v4526, 2147483648
      %v4559 = vxor.u32 %v4527, 2147483648
      %v4560 = vxor.u32 %v4528, 2147483648
      %v4561 = vxor.u32 %v4529, 2147483648
      %v4562 = vxor.u32 %v4530, 2147483648
      %v4563 = vxor.u32 %v4531, 2147483648
      %v4564 = vxor.u32 %v4532, 2147483648
      %v4565 = vxor.u32 %v4533, 2147483648
      %v4566 = vxor.u32 %v4534, 2147483648
      %v4567 = vxor.u32 %v4535, 2147483648
      %v4568 = vxor.u32 %v4536, 2147483648
      %v4569 = vxor.u32 %v4537, 2147483648
      %v4570 = vxor.u32 %v4538, 2147483648
      %v4571 = vxor.u32 %v4539, 2147483648
      %v4572 = vxor.u32 %v4540, 2147483648
      %v4573 = vxor.u32 %v4541, 2147483648
      %v4574 = vmul.f32 %v4542, 1.442695
      %v4575 = vpow.pop %v4574
      %v4576 = vmul.f32 %v4543, 1.442695
      %v4577 = vpow.pop %v4576
      %v4578 = vmul.f32 %v4544, 1.442695
      %v4579 = vpow.pop %v4578
      %v4580 = vmul.f32 %v4545, 1.442695
      %v4581 = vpow.pop %v4580
      %v4582 = vmul.f32 %v4546, 1.442695
      %v4583 = vpow.pop %v4582
      %v4584 = vmul.f32 %v4547, 1.442695
      %v4585 = vpow.pop %v4584
      %v4586 = vmul.f32 %v4548, 1.442695
      %v4587 = vpow.pop %v4586
      %v4588 = vmul.f32 %v4549, 1.442695
      %v4589 = vpow.pop %v4588
      %v4590 = vmul.f32 %v4550, 1.442695
      %v4591 = vpow.pop %v4590
      %v4592 = vmul.f32 %v4551, 1.442695
      %v4593 = vpow.pop %v4592
      %v4594 = vmul.f32 %v4552, 1.442695
      %v4595 = vpow.pop %v4594
      %v4596 = vmul.f32 %v4553, 1.442695
      %v4597 = vpow.pop %v4596
      %v4598 = vmul.f32 %v4554, 1.442695
      %v4599 = vpow.pop %v4598
      %v4600 = vmul.f32 %v4555, 1.442695
      %v4601 = vpow.pop %v4600
      %v4602 = vmul.f32 %v4556, 1.442695
      %v4603 = vpow.pop %v4602
      %v4604 = vmul.f32 %v4557, 1.442695
      %v4605 = vpow.pop %v4604
      %v4606 = vmul.f32 %v4558, 1.442695
      %v4607 = vpow.pop %v4606
      %v4608 = vmul.f32 %v4559, 1.442695
      %v4609 = vpow.pop %v4608
      %v4610 = vmul.f32 %v4560, 1.442695
      %v4611 = vpow.pop %v4610
      %v4612 = vmul.f32 %v4561, 1.442695
      %v4613 = vpow.pop %v4612
      %v4614 = vmul.f32 %v4562, 1.442695
      %v4615 = vpow.pop %v4614
      %v4616 = vmul.f32 %v4563, 1.442695
      %v4617 = vpow.pop %v4616
      %v4618 = vmul.f32 %v4564, 1.442695
      %v4619 = vpow.pop %v4618
      %v4620 = vmul.f32 %v4565, 1.442695
      %v4621 = vpow.pop %v4620
      %v4622 = vmul.f32 %v4566, 1.442695
      %v4623 = vpow.pop %v4622
      %v4624 = vmul.f32 %v4567, 1.442695
      %v4625 = vpow.pop %v4624
      %v4626 = vmul.f32 %v4568, 1.442695
      %v4627 = vpow.pop %v4626
      %v4628 = vmul.f32 %v4569, 1.442695
      %v4629 = vpow.pop %v4628
      %v4630 = vmul.f32 %v4570, 1.442695
      %v4631 = vpow.pop %v4630
      %v4632 = vmul.f32 %v4571, 1.442695
      %v4633 = vpow.pop %v4632
      %v4634 = vmul.f32 %v4572, 1.442695
      %v4635 = vpow.pop %v4634
      %v4636 = vmul.f32 %v4573, 1.442695
      %v4637 = vpow.pop %v4636
      %v4638 = vadd.f32 %v4575, 1.0
      %v4639 = vadd.f32 %v4577, 1.0
      %v4640 = vadd.f32 %v4579, 1.0
      %v4641 = vadd.f32 %v4581, 1.0
      %v4642 = vadd.f32 %v4583, 1.0
      %v4643 = vadd.f32 %v4585, 1.0
      %v4644 = vadd.f32 %v4587, 1.0
      %v4645 = vadd.f32 %v4589, 1.0
      %v4646 = vadd.f32 %v4591, 1.0
      %v4647 = vadd.f32 %v4593, 1.0
      %v4648 = vadd.f32 %v4595, 1.0
      %v4649 = vadd.f32 %v4597, 1.0
      %v4650 = vadd.f32 %v4599, 1.0
      %v4651 = vadd.f32 %v4601, 1.0
      %v4652 = vadd.f32 %v4603, 1.0
      %v4653 = vadd.f32 %v4605, 1.0
      %v4654 = vadd.f32 %v4607, 1.0
      %v4655 = vadd.f32 %v4609, 1.0
      %v4656 = vadd.f32 %v4611, 1.0
      %v4657 = vadd.f32 %v4613, 1.0
      %v4658 = vadd.f32 %v4615, 1.0
      %v4659 = vadd.f32 %v4617, 1.0
      %v4660 = vadd.f32 %v4619, 1.0
      %v4661 = vadd.f32 %v4621, 1.0
      %v4662 = vadd.f32 %v4623, 1.0
      %v4663 = vadd.f32 %v4625, 1.0
      %v4664 = vadd.f32 %v4627, 1.0
      %v4665 = vadd.f32 %v4629, 1.0
      %v4666 = vadd.f32 %v4631, 1.0
      %v4667 = vadd.f32 %v4633, 1.0
      %v4668 = vadd.f32 %v4635, 1.0
      %v4669 = vadd.f32 %v4637, 1.0
      %v4670 = vrcp.pop %v4638
      %v4671 = vmul.f32 %v4638, %v4670
      %v4672 = vsub.f32 1.0, %v4671
      %v4673 = vmul.f32 %v4670, %v4672
      %v4674 = vadd.f32 %v4670, %v4673
      %vm4675 = vweird.f32 %v4638
      %vm4676 = vweird.f32 %v4670
      %vm4677 = vmor %vm4675, %vm4676
      %v4678 = vsel %vm4677, %v4670, %v4674
      %v4679 = vand.u32 2147483647, %v4638
      %vm4680 = vcmp.eq.f32.partialorder %v4679, 8.507059e+37
      %v4681 = vand.u32 %v4638, 2147483648
      %v4682 = vor.u32 1.1754944e-38, %v4681
      %v4683 = vsel %vm4680, %v4682, %v4678
      %v4684 = vmul.f32 1.0, %v4683
      %v4685 = vrcp.pop %v4639
      %v4686 = vmul.f32 %v4639, %v4685
      %v4687 = vsub.f32 1.0, %v4686
      %v4688 = vmul.f32 %v4685, %v4687
      %v4689 = vadd.f32 %v4685, %v4688
      %vm4690 = vweird.f32 %v4639
      %vm4691 = vweird.f32 %v4685
      %vm4692 = vmor %vm4690, %vm4691
      %v4693 = vsel %vm4692, %v4685, %v4689
      %v4694 = vand.u32 2147483647, %v4639
      %vm4695 = vcmp.eq.f32.partialorder %v4694, 8.507059e+37
      %v4696 = vand.u32 %v4639, 2147483648
      %v4697 = vor.u32 1.1754944e-38, %v4696
      %v4698 = vsel %vm4695, %v4697, %v4693
      %v4699 = vmul.f32 1.0, %v4698
      %v4700 = vrcp.pop %v4640
      %v4701 = vmul.f32 %v4640, %v4700
      %v4702 = vsub.f32 1.0, %v4701
      %v4703 = vmul.f32 %v4700, %v4702
      %v4704 = vadd.f32 %v4700, %v4703
      %vm4705 = vweird.f32 %v4640
      %vm4706 = vweird.f32 %v4700
      %vm4707 = vmor %vm4705, %vm4706
      %v4708 = vsel %vm4707, %v4700, %v4704
      %v4709 = vand.u32 2147483647, %v4640
      %vm4710 = vcmp.eq.f32.partialorder %v4709, 8.507059e+37
      %v4711 = vand.u32 %v4640, 2147483648
      %v4712 = vor.u32 1.1754944e-38, %v4711
      %v4713 = vsel %vm4710, %v4712, %v4708
      %v4714 = vmul.f32 1.0, %v4713
      %v4715 = vrcp.pop %v4641
      %v4716 = vmul.f32 %v4641, %v4715
      %v4717 = vsub.f32 1.0, %v4716
      %v4718 = vmul.f32 %v4715, %v4717
      %v4719 = vadd.f32 %v4715, %v4718
      %vm4720 = vweird.f32 %v4641
      %vm4721 = vweird.f32 %v4715
      %vm4722 = vmor %vm4720, %vm4721
      %v4723 = vsel %vm4722, %v4715, %v4719
      %v4724 = vand.u32 2147483647, %v4641
      %vm4725 = vcmp.eq.f32.partialorder %v4724, 8.507059e+37
      %v4726 = vand.u32 %v4641, 2147483648
      %v4727 = vor.u32 1.1754944e-38, %v4726
      %v4728 = vsel %vm4725, %v4727, %v4723
      %v4729 = vmul.f32 1.0, %v4728
      %v4730 = vrcp.pop %v4642
      %v4731 = vmul.f32 %v4642, %v4730
      %v4732 = vsub.f32 1.0, %v4731
      %v4733 = vmul.f32 %v4730, %v4732
      %v4734 = vadd.f32 %v4730, %v4733
      %vm4735 = vweird.f32 %v4642
      %vm4736 = vweird.f32 %v4730
      %vm4737 = vmor %vm4735, %vm4736
      %v4738 = vsel %vm4737, %v4730, %v4734
      %v4739 = vand.u32 2147483647, %v4642
      %vm4740 = vcmp.eq.f32.partialorder %v4739, 8.507059e+37
      %v4741 = vand.u32 %v4642, 2147483648
      %v4742 = vor.u32 1.1754944e-38, %v4741
      %v4743 = vsel %vm4740, %v4742, %v4738
      %v4744 = vmul.f32 1.0, %v4743
      %v4745 = vrcp.pop %v4643
      %v4746 = vmul.f32 %v4643, %v4745
      %v4747 = vsub.f32 1.0, %v4746
      %v4748 = vmul.f32 %v4745, %v4747
      %v4749 = vadd.f32 %v4745, %v4748
      %vm4750 = vweird.f32 %v4643
      %vm4751 = vweird.f32 %v4745
      %vm4752 = vmor %vm4750, %vm4751
      %v4753 = vsel %vm4752, %v4745, %v4749
      %v4754 = vand.u32 2147483647, %v4643
      %vm4755 = vcmp.eq.f32.partialorder %v4754, 8.507059e+37
      %v4756 = vand.u32 %v4643, 2147483648
      %v4757 = vor.u32 1.1754944e-38, %v4756
      %v4758 = vsel %vm4755, %v4757, %v4753
      %v4759 = vmul.f32 1.0, %v4758
      %v4760 = vrcp.pop %v4644
      %v4761 = vmul.f32 %v4644, %v4760
      %v4762 = vsub.f32 1.0, %v4761
      %v4763 = vmul.f32 %v4760, %v4762
      %v4764 = vadd.f32 %v4760, %v4763
      %vm4765 = vweird.f32 %v4644
      %vm4766 = vweird.f32 %v4760
      %vm4767 = vmor %vm4765, %vm4766
      %v4768 = vsel %vm4767, %v4760, %v4764
      %v4769 = vand.u32 2147483647, %v4644
      %vm4770 = vcmp.eq.f32.partialorder %v4769, 8.507059e+37
      %v4771 = vand.u32 %v4644, 2147483648
      %v4772 = vor.u32 1.1754944e-38, %v4771
      %v4773 = vsel %vm4770, %v4772, %v4768
      %v4774 = vmul.f32 1.0, %v4773
      %v4775 = vrcp.pop %v4645
      %v4776 = vmul.f32 %v4645, %v4775
      %v4777 = vsub.f32 1.0, %v4776
      %v4778 = vmul.f32 %v4775, %v4777
      %v4779 = vadd.f32 %v4775, %v4778
      %vm4780 = vweird.f32 %v4645
      %vm4781 = vweird.f32 %v4775
      %vm4782 = vmor %vm4780, %vm4781
      %v4783 = vsel %vm4782, %v4775, %v4779
      %v4784 = vand.u32 2147483647, %v4645
      %vm4785 = vcmp.eq.f32.partialorder %v4784, 8.507059e+37
      %v4786 = vand.u32 %v4645, 2147483648
      %v4787 = vor.u32 1.1754944e-38, %v4786
      %v4788 = vsel %vm4785, %v4787, %v4783
      %v4789 = vmul.f32 1.0, %v4788
      %v4790 = vrcp.pop %v4646
      %v4791 = vmul.f32 %v4646, %v4790
      %v4792 = vsub.f32 1.0, %v4791
      %v4793 = vmul.f32 %v4790, %v4792
      %v4794 = vadd.f32 %v4790, %v4793
      %vm4795 = vweird.f32 %v4646
      %vm4796 = vweird.f32 %v4790
      %vm4797 = vmor %vm4795, %vm4796
      %v4798 = vsel %vm4797, %v4790, %v4794
      %v4799 = vand.u32 2147483647, %v4646
      %vm4800 = vcmp.eq.f32.partialorder %v4799, 8.507059e+37
      %v4801 = vand.u32 %v4646, 2147483648
      %v4802 = vor.u32 1.1754944e-38, %v4801
      %v4803 = vsel %vm4800, %v4802, %v4798
      %v4804 = vmul.f32 1.0, %v4803
      %v4805 = vrcp.pop %v4647
      %v4806 = vmul.f32 %v4647, %v4805
      %v4807 = vsub.f32 1.0, %v4806
      %v4808 = vmul.f32 %v4805, %v4807
      %v4809 = vadd.f32 %v4805, %v4808
      %vm4810 = vweird.f32 %v4647
      %vm4811 = vweird.f32 %v4805
      %vm4812 = vmor %vm4810, %vm4811
      %v4813 = vsel %vm4812, %v4805, %v4809
      %v4814 = vand.u32 2147483647, %v4647
      %vm4815 = vcmp.eq.f32.partialorder %v4814, 8.507059e+37
      %v4816 = vand.u32 %v4647, 2147483648
      %v4817 = vor.u32 1.1754944e-38, %v4816
      %v4818 = vsel %vm4815, %v4817, %v4813
      %v4819 = vmul.f32 1.0, %v4818
      %v4820 = vrcp.pop %v4648
      %v4821 = vmul.f32 %v4648, %v4820
      %v4822 = vsub.f32 1.0, %v4821
      %v4823 = vmul.f32 %v4820, %v4822
      %v4824 = vadd.f32 %v4820, %v4823
      %vm4825 = vweird.f32 %v4648
      %vm4826 = vweird.f32 %v4820
      %vm4827 = vmor %vm4825, %vm4826
      %v4828 = vsel %vm4827, %v4820, %v4824
      %v4829 = vand.u32 2147483647, %v4648
      %vm4830 = vcmp.eq.f32.partialorder %v4829, 8.507059e+37
      %v4831 = vand.u32 %v4648, 2147483648
      %v4832 = vor.u32 1.1754944e-38, %v4831
      %v4833 = vsel %vm4830, %v4832, %v4828
      %v4834 = vmul.f32 1.0, %v4833
      %v4835 = vrcp.pop %v4649
      %v4836 = vmul.f32 %v4649, %v4835
      %v4837 = vsub.f32 1.0, %v4836
      %v4838 = vmul.f32 %v4835, %v4837
      %v4839 = vadd.f32 %v4835, %v4838
      %vm4840 = vweird.f32 %v4649
      %vm4841 = vweird.f32 %v4835
      %vm4842 = vmor %vm4840, %vm4841
      %v4843 = vsel %vm4842, %v4835, %v4839
      %v4844 = vand.u32 2147483647, %v4649
      %vm4845 = vcmp.eq.f32.partialorder %v4844, 8.507059e+37
      %v4846 = vand.u32 %v4649, 2147483648
      %v4847 = vor.u32 1.1754944e-38, %v4846
      %v4848 = vsel %vm4845, %v4847, %v4843
      %v4849 = vmul.f32 1.0, %v4848
      %v4850 = vrcp.pop %v4650
      %v4851 = vmul.f32 %v4650, %v4850
      %v4852 = vsub.f32 1.0, %v4851
      %v4853 = vmul.f32 %v4850, %v4852
      %v4854 = vadd.f32 %v4850, %v4853
      %vm4855 = vweird.f32 %v4650
      %vm4856 = vweird.f32 %v4850
      %vm4857 = vmor %vm4855, %vm4856
      %v4858 = vsel %vm4857, %v4850, %v4854
      %v4859 = vand.u32 2147483647, %v4650
      %vm4860 = vcmp.eq.f32.partialorder %v4859, 8.507059e+37
      %v4861 = vand.u32 %v4650, 2147483648
      %v4862 = vor.u32 1.1754944e-38, %v4861
      %v4863 = vsel %vm4860, %v4862, %v4858
      %v4864 = vmul.f32 1.0, %v4863
      %v4865 = vrcp.pop %v4651
      %v4866 = vmul.f32 %v4651, %v4865
      %v4867 = vsub.f32 1.0, %v4866
      %v4868 = vmul.f32 %v4865, %v4867
      %v4869 = vadd.f32 %v4865, %v4868
      %vm4870 = vweird.f32 %v4651
      %vm4871 = vweird.f32 %v4865
      %vm4872 = vmor %vm4870, %vm4871
      %v4873 = vsel %vm4872, %v4865, %v4869
      %v4874 = vand.u32 2147483647, %v4651
      %vm4875 = vcmp.eq.f32.partialorder %v4874, 8.507059e+37
      %v4876 = vand.u32 %v4651, 2147483648
      %v4877 = vor.u32 1.1754944e-38, %v4876
      %v4878 = vsel %vm4875, %v4877, %v4873
      %v4879 = vmul.f32 1.0, %v4878
      %v4880 = vrcp.pop %v4652
      %v4881 = vmul.f32 %v4652, %v4880
      %v4882 = vsub.f32 1.0, %v4881
      %v4883 = vmul.f32 %v4880, %v4882
      %v4884 = vadd.f32 %v4880, %v4883
      %vm4885 = vweird.f32 %v4652
      %vm4886 = vweird.f32 %v4880
      %vm4887 = vmor %vm4885, %vm4886
      %v4888 = vsel %vm4887, %v4880, %v4884
      %v4889 = vand.u32 2147483647, %v4652
      %vm4890 = vcmp.eq.f32.partialorder %v4889, 8.507059e+37
      %v4891 = vand.u32 %v4652, 2147483648
      %v4892 = vor.u32 1.1754944e-38, %v4891
      %v4893 = vsel %vm4890, %v4892, %v4888
      %v4894 = vmul.f32 1.0, %v4893
      %v4895 = vrcp.pop %v4653
      %v4896 = vmul.f32 %v4653, %v4895
      %v4897 = vsub.f32 1.0, %v4896
      %v4898 = vmul.f32 %v4895, %v4897
      %v4899 = vadd.f32 %v4895, %v4898
      %vm4900 = vweird.f32 %v4653
      %vm4901 = vweird.f32 %v4895
      %vm4902 = vmor %vm4900, %vm4901
      %v4903 = vsel %vm4902, %v4895, %v4899
      %v4904 = vand.u32 2147483647, %v4653
      %vm4905 = vcmp.eq.f32.partialorder %v4904, 8.507059e+37
      %v4906 = vand.u32 %v4653, 2147483648
      %v4907 = vor.u32 1.1754944e-38, %v4906
      %v4908 = vsel %vm4905, %v4907, %v4903
      %v4909 = vmul.f32 1.0, %v4908
      %v4910 = vrcp.pop %v4654
      %v4911 = vmul.f32 %v4654, %v4910
      %v4912 = vsub.f32 1.0, %v4911
      %v4913 = vmul.f32 %v4910, %v4912
      %v4914 = vadd.f32 %v4910, %v4913
      %vm4915 = vweird.f32 %v4654
      %vm4916 = vweird.f32 %v4910
      %vm4917 = vmor %vm4915, %vm4916
      %v4918 = vsel %vm4917, %v4910, %v4914
      %v4919 = vand.u32 2147483647, %v4654
      %vm4920 = vcmp.eq.f32.partialorder %v4919, 8.507059e+37
      %v4921 = vand.u32 %v4654, 2147483648
      %v4922 = vor.u32 1.1754944e-38, %v4921
      %v4923 = vsel %vm4920, %v4922, %v4918
      %v4924 = vmul.f32 1.0, %v4923
      %v4925 = vrcp.pop %v4655
      %v4926 = vmul.f32 %v4655, %v4925
      %v4927 = vsub.f32 1.0, %v4926
      %v4928 = vmul.f32 %v4925, %v4927
      %v4929 = vadd.f32 %v4925, %v4928
      %vm4930 = vweird.f32 %v4655
      %vm4931 = vweird.f32 %v4925
      %vm4932 = vmor %vm4930, %vm4931
      %v4933 = vsel %vm4932, %v4925, %v4929
      %v4934 = vand.u32 2147483647, %v4655
      %vm4935 = vcmp.eq.f32.partialorder %v4934, 8.507059e+37
      %v4936 = vand.u32 %v4655, 2147483648
      %v4937 = vor.u32 1.1754944e-38, %v4936
      %v4938 = vsel %vm4935, %v4937, %v4933
      %v4939 = vmul.f32 1.0, %v4938
      %v4940 = vrcp.pop %v4656
      %v4941 = vmul.f32 %v4656, %v4940
      %v4942 = vsub.f32 1.0, %v4941
      %v4943 = vmul.f32 %v4940, %v4942
      %v4944 = vadd.f32 %v4940, %v4943
      %vm4945 = vweird.f32 %v4656
      %vm4946 = vweird.f32 %v4940
      %vm4947 = vmor %vm4945, %vm4946
      %v4948 = vsel %vm4947, %v4940, %v4944
      %v4949 = vand.u32 2147483647, %v4656
      %vm4950 = vcmp.eq.f32.partialorder %v4949, 8.507059e+37
      %v4951 = vand.u32 %v4656, 2147483648
      %v4952 = vor.u32 1.1754944e-38, %v4951
      %v4953 = vsel %vm4950, %v4952, %v4948
      %v4954 = vmul.f32 1.0, %v4953
      %v4955 = vrcp.pop %v4657
      %v4956 = vmul.f32 %v4657, %v4955
      %v4957 = vsub.f32 1.0, %v4956
      %v4958 = vmul.f32 %v4955, %v4957
      %v4959 = vadd.f32 %v4955, %v4958
      %vm4960 = vweird.f32 %v4657
      %vm4961 = vweird.f32 %v4955
      %vm4962 = vmor %vm4960, %vm4961
      %v4963 = vsel %vm4962, %v4955, %v4959
      %v4964 = vand.u32 2147483647, %v4657
      %vm4965 = vcmp.eq.f32.partialorder %v4964, 8.507059e+37
      %v4966 = vand.u32 %v4657, 2147483648
      %v4967 = vor.u32 1.1754944e-38, %v4966
      %v4968 = vsel %vm4965, %v4967, %v4963
      %v4969 = vmul.f32 1.0, %v4968
      %v4970 = vrcp.pop %v4658
      %v4971 = vmul.f32 %v4658, %v4970
      %v4972 = vsub.f32 1.0, %v4971
      %v4973 = vmul.f32 %v4970, %v4972
      %v4974 = vadd.f32 %v4970, %v4973
      %vm4975 = vweird.f32 %v4658
      %vm4976 = vweird.f32 %v4970
      %vm4977 = vmor %vm4975, %vm4976
      %v4978 = vsel %vm4977, %v4970, %v4974
      %v4979 = vand.u32 2147483647, %v4658
      %vm4980 = vcmp.eq.f32.partialorder %v4979, 8.507059e+37
      %v4981 = vand.u32 %v4658, 2147483648
      %v4982 = vor.u32 1.1754944e-38, %v4981
      %v4983 = vsel %vm4980, %v4982, %v4978
      %v4984 = vmul.f32 1.0, %v4983
      %v4985 = vrcp.pop %v4659
      %v4986 = vmul.f32 %v4659, %v4985
      %v4987 = vsub.f32 1.0, %v4986
      %v4988 = vmul.f32 %v4985, %v4987
      %v4989 = vadd.f32 %v4985, %v4988
      %vm4990 = vweird.f32 %v4659
      %vm4991 = vweird.f32 %v4985
      %vm4992 = vmor %vm4990, %vm4991
      %v4993 = vsel %vm4992, %v4985, %v4989
      %v4994 = vand.u32 2147483647, %v4659
      %vm4995 = vcmp.eq.f32.partialorder %v4994, 8.507059e+37
      %v4996 = vand.u32 %v4659, 2147483648
      %v4997 = vor.u32 1.1754944e-38, %v4996
      %v4998 = vsel %vm4995, %v4997, %v4993
      %v4999 = vmul.f32 1.0, %v4998
      %v5000 = vrcp.pop %v4660
      %v5001 = vmul.f32 %v4660, %v5000
      %v5002 = vsub.f32 1.0, %v5001
      %v5003 = vmul.f32 %v5000, %v5002
      %v5004 = vadd.f32 %v5000, %v5003
      %vm5005 = vweird.f32 %v4660
      %vm5006 = vweird.f32 %v5000
      %vm5007 = vmor %vm5005, %vm5006
      %v5008 = vsel %vm5007, %v5000, %v5004
      %v5009 = vand.u32 2147483647, %v4660
      %vm5010 = vcmp.eq.f32.partialorder %v5009, 8.507059e+37
      %v5011 = vand.u32 %v4660, 2147483648
      %v5012 = vor.u32 1.1754944e-38, %v5011
      %v5013 = vsel %vm5010, %v5012, %v5008
      %v5014 = vmul.f32 1.0, %v5013
      %v5015 = vrcp.pop %v4661
      %v5016 = vmul.f32 %v4661, %v5015
      %v5017 = vsub.f32 1.0, %v5016
      %v5018 = vmul.f32 %v5015, %v5017
      %v5019 = vadd.f32 %v5015, %v5018
      %vm5020 = vweird.f32 %v4661
      %vm5021 = vweird.f32 %v5015
      %vm5022 = vmor %vm5020, %vm5021
      %v5023 = vsel %vm5022, %v5015, %v5019
      %v5024 = vand.u32 2147483647, %v4661
      %vm5025 = vcmp.eq.f32.partialorder %v5024, 8.507059e+37
      %v5026 = vand.u32 %v4661, 2147483648
      %v5027 = vor.u32 1.1754944e-38, %v5026
      %v5028 = vsel %vm5025, %v5027, %v5023
      %v5029 = vmul.f32 1.0, %v5028
      %v5030 = vrcp.pop %v4662
      %v5031 = vmul.f32 %v4662, %v5030
      %v5032 = vsub.f32 1.0, %v5031
      %v5033 = vmul.f32 %v5030, %v5032
      %v5034 = vadd.f32 %v5030, %v5033
      %vm5035 = vweird.f32 %v4662
      %vm5036 = vweird.f32 %v5030
      %vm5037 = vmor %vm5035, %vm5036
      %v5038 = vsel %vm5037, %v5030, %v5034
      %v5039 = vand.u32 2147483647, %v4662
      %vm5040 = vcmp.eq.f32.partialorder %v5039, 8.507059e+37
      %v5041 = vand.u32 %v4662, 2147483648
      %v5042 = vor.u32 1.1754944e-38, %v5041
      %v5043 = vsel %vm5040, %v5042, %v5038
      %v5044 = vmul.f32 1.0, %v5043
      %v5045 = vrcp.pop %v4663
      %v5046 = vmul.f32 %v4663, %v5045
      %v5047 = vsub.f32 1.0, %v5046
      %v5048 = vmul.f32 %v5045, %v5047
      %v5049 = vadd.f32 %v5045, %v5048
      %vm5050 = vweird.f32 %v4663
      %vm5051 = vweird.f32 %v5045
      %vm5052 = vmor %vm5050, %vm5051
      %v5053 = vsel %vm5052, %v5045, %v5049
      %v5054 = vand.u32 2147483647, %v4663
      %vm5055 = vcmp.eq.f32.partialorder %v5054, 8.507059e+37
      %v5056 = vand.u32 %v4663, 2147483648
      %v5057 = vor.u32 1.1754944e-38, %v5056
      %v5058 = vsel %vm5055, %v5057, %v5053
      %v5059 = vmul.f32 1.0, %v5058
      %v5060 = vrcp.pop %v4664
      %v5061 = vmul.f32 %v4664, %v5060
      %v5062 = vsub.f32 1.0, %v5061
      %v5063 = vmul.f32 %v5060, %v5062
      %v5064 = vadd.f32 %v5060, %v5063
      %vm5065 = vweird.f32 %v4664
      %vm5066 = vweird.f32 %v5060
      %vm5067 = vmor %vm5065, %vm5066
      %v5068 = vsel %vm5067, %v5060, %v5064
      %v5069 = vand.u32 2147483647, %v4664
      %vm5070 = vcmp.eq.f32.partialorder %v5069, 8.507059e+37
      %v5071 = vand.u32 %v4664, 2147483648
      %v5072 = vor.u32 1.1754944e-38, %v5071
      %v5073 = vsel %vm5070, %v5072, %v5068
      %v5074 = vmul.f32 1.0, %v5073
      %v5075 = vrcp.pop %v4665
      %v5076 = vmul.f32 %v4665, %v5075
      %v5077 = vsub.f32 1.0, %v5076
      %v5078 = vmul.f32 %v5075, %v5077
      %v5079 = vadd.f32 %v5075, %v5078
      %vm5080 = vweird.f32 %v4665
      %vm5081 = vweird.f32 %v5075
      %vm5082 = vmor %vm5080, %vm5081
      %v5083 = vsel %vm5082, %v5075, %v5079
      %v5084 = vand.u32 2147483647, %v4665
      %vm5085 = vcmp.eq.f32.partialorder %v5084, 8.507059e+37
      %v5086 = vand.u32 %v4665, 2147483648
      %v5087 = vor.u32 1.1754944e-38, %v5086
      %v5088 = vsel %vm5085, %v5087, %v5083
      %v5089 = vmul.f32 1.0, %v5088
      %v5090 = vrcp.pop %v4666
      %v5091 = vmul.f32 %v4666, %v5090
      %v5092 = vsub.f32 1.0, %v5091
      %v5093 = vmul.f32 %v5090, %v5092
      %v5094 = vadd.f32 %v5090, %v5093
      %vm5095 = vweird.f32 %v4666
      %vm5096 = vweird.f32 %v5090
      %vm5097 = vmor %vm5095, %vm5096
      %v5098 = vsel %vm5097, %v5090, %v5094
      %v5099 = vand.u32 2147483647, %v4666
      %vm5100 = vcmp.eq.f32.partialorder %v5099, 8.507059e+37
      %v5101 = vand.u32 %v4666, 2147483648
      %v5102 = vor.u32 1.1754944e-38, %v5101
      %v5103 = vsel %vm5100, %v5102, %v5098
      %v5104 = vmul.f32 1.0, %v5103
      %v5105 = vrcp.pop %v4667
      %v5106 = vmul.f32 %v4667, %v5105
      %v5107 = vsub.f32 1.0, %v5106
      %v5108 = vmul.f32 %v5105, %v5107
      %v5109 = vadd.f32 %v5105, %v5108
      %vm5110 = vweird.f32 %v4667
      %vm5111 = vweird.f32 %v5105
      %vm5112 = vmor %vm5110, %vm5111
      %v5113 = vsel %vm5112, %v5105, %v5109
      %v5114 = vand.u32 2147483647, %v4667
      %vm5115 = vcmp.eq.f32.partialorder %v5114, 8.507059e+37
      %v5116 = vand.u32 %v4667, 2147483648
      %v5117 = vor.u32 1.1754944e-38, %v5116
      %v5118 = vsel %vm5115, %v5117, %v5113
      %v5119 = vmul.f32 1.0, %v5118
      %v5120 = vrcp.pop %v4668
      %v5121 = vmul.f32 %v4668, %v5120
      %v5122 = vsub.f32 1.0, %v5121
      %v5123 = vmul.f32 %v5120, %v5122
      %v5124 = vadd.f32 %v5120, %v5123
      %vm5125 = vweird.f32 %v4668
      %vm5126 = vweird.f32 %v5120
      %vm5127 = vmor %vm5125, %vm5126
      %v5128 = vsel %vm5127, %v5120, %v5124
      %v5129 = vand.u32 2147483647, %v4668
      %vm5130 = vcmp.eq.f32.partialorder %v5129, 8.507059e+37
      %v5131 = vand.u32 %v4668, 2147483648
      %v5132 = vor.u32 1.1754944e-38, %v5131
      %v5133 = vsel %vm5130, %v5132, %v5128
      %v5134 = vmul.f32 1.0, %v5133
      %v5135 = vrcp.pop %v4669
      %v5136 = vmul.f32 %v4669, %v5135
      %v5137 = vsub.f32 1.0, %v5136
      %v5138 = vmul.f32 %v5135, %v5137
      %v5139 = vadd.f32 %v5135, %v5138
      %vm5140 = vweird.f32 %v4669
      %vm5141 = vweird.f32 %v5135
      %vm5142 = vmor %vm5140, %vm5141
      %v5143 = vsel %vm5142, %v5135, %v5139
      %v5144 = vand.u32 2147483647, %v4669
      %vm5145 = vcmp.eq.f32.partialorder %v5144, 8.507059e+37
      %v5146 = vand.u32 %v4669, 2147483648
      %v5147 = vor.u32 1.1754944e-38, %v5146
      %v5148 = vsel %vm5145, %v5147, %v5143
      %v5149 = vmul.f32 1.0, %v5148
      %v5150 = vmul.f32 %v4510, %v4684
      %v5151 = vmul.f32 %v4511, %v4699
      %v5152 = vmul.f32 %v4512, %v4714
      %v5153 = vmul.f32 %v4513, %v4729
      %v5154 = vmul.f32 %v4514, %v4744
      %v5155 = vmul.f32 %v4515, %v4759
      %v5156 = vmul.f32 %v4516, %v4774
      %v5157 = vmul.f32 %v4517, %v4789
      %v5158 = vmul.f32 %v4518, %v4804
      %v5159 = vmul.f32 %v4519, %v4819
      %v5160 = vmul.f32 %v4520, %v4834
      %v5161 = vmul.f32 %v4521, %v4849
      %v5162 = vmul.f32 %v4522, %v4864
      %v5163 = vmul.f32 %v4523, %v4879
      %v5164 = vmul.f32 %v4524, %v4894
      %v5165 = vmul.f32 %v4525, %v4909
      %v5166 = vmul.f32 %v4526, %v4924
      %v5167 = vmul.f32 %v4527, %v4939
      %v5168 = vmul.f32 %v4528, %v4954
      %v5169 = vmul.f32 %v4529, %v4969
      %v5170 = vmul.f32 %v4530, %v4984
      %v5171 = vmul.f32 %v4531, %v4999
      %v5172 = vmul.f32 %v4532, %v5014
      %v5173 = vmul.f32 %v4533, %v5029
      %v5174 = vmul.f32 %v4534, %v5044
      %v5175 = vmul.f32 %v4535, %v5059
      %v5176 = vmul.f32 %v4536, %v5074
      %v5177 = vmul.f32 %v4537, %v5089
      %v5178 = vmul.f32 %v4538, %v5104
      %v5179 = vmul.f32 %v4539, %v5119
      %v5180 = vmul.f32 %v4540, %v5134
      %v5181 = vmul.f32 %v4541, %v5149
      %v5182 = vadd.f32 %v5150, %v1590
      %v5183 = vadd.f32 %v5151, %v1591
      %v5184 = vadd.f32 %v5152, %v1592
      %v5185 = vadd.f32 %v5153, %v1593
      %v5186 = vadd.f32 %v5154, %v1594
      %v5187 = vadd.f32 %v5155, %v1595
      %v5188 = vadd.f32 %v5156, %v1596
      %v5189 = vadd.f32 %v5157, %v1597
      %v5190 = vadd.f32 %v5158, %v1598
      %v5191 = vadd.f32 %v5159, %v1599
      %v5192 = vadd.f32 %v5160, %v1600
      %v5193 = vadd.f32 %v5161, %v1601
      %v5194 = vadd.f32 %v5162, %v1602
      %v5195 = vadd.f32 %v5163, %v1603
      %v5196 = vadd.f32 %v5164, %v1604
      %v5197 = vadd.f32 %v5165, %v1605
      %v5198 = vadd.f32 %v5166, %v1606
      %v5199 = vadd.f32 %v5167, %v1607
      %v5200 = vadd.f32 %v5168, %v1608
      %v5201 = vadd.f32 %v5169, %v1609
      %v5202 = vadd.f32 %v5170, %v1610
      %v5203 = vadd.f32 %v5171, %v1611
      %v5204 = vadd.f32 %v5172, %v1612
      %v5205 = vadd.f32 %v5173, %v1613
      %v5206 = vadd.f32 %v5174, %v1614
      %v5207 = vadd.f32 %v5175, %v1615
      %v5208 = vadd.f32 %v5176, %v1616
      %v5209 = vadd.f32 %v5177, %v1617
      %v5210 = vadd.f32 %v5178, %v1618
      %v5211 = vadd.f32 %v5179, %v1619
      %v5212 = vadd.f32 %v5180, %v1620
      %v5213 = vadd.f32 %v5181, %v1621
      %5214 = vst [vmem:[%s372] sm:$0xff] %v5182
      %5215 = vst [vmem:[%s372 + $0x8] sm:$0xff] %v5183
      %5216 = vst [vmem:[%s372 + $0x10] sm:$0xff] %v5184
      %5217 = vst [vmem:[%s372 + $0x18] sm:$0xff] %v5185
      %5218 = vst [vmem:[%s372 + $0x20] sm:$0xff] %v5186
      %5219 = vst [vmem:[%s372 + $0x28] sm:$0xff] %v5187
      %5220 = vst [vmem:[%s372 + $0x30] sm:$0xff] %v5188
      %5221 = vst [vmem:[%s372 + $0x38] sm:$0xff] %v5189
      %5222 = vst [vmem:[%s372 + $0x40] sm:$0xff] %v5190
      %5223 = vst [vmem:[%s372 + $0x48] sm:$0xff] %v5191
      %5224 = vst [vmem:[%s372 + $0x50] sm:$0xff] %v5192
      %5225 = vst [vmem:[%s372 + $0x58] sm:$0xff] %v5193
      %5226 = vst [vmem:[%s372 + $0x60] sm:$0xff] %v5194
      %5227 = vst [vmem:[%s372 + $0x68] sm:$0xff] %v5195
      %5228 = vst [vmem:[%s372 + $0x70] sm:$0xff] %v5196
      %5229 = vst [vmem:[%s372 + $0x78] sm:$0xff] %v5197
      %5230 = vst [vmem:[%s372 + $0x80] sm:$0xff] %v5198
      %5231 = vst [vmem:[%s372 + $0x88] sm:$0xff] %v5199
      %5232 = vst [vmem:[%s372 + $0x90] sm:$0xff] %v5200
      %5233 = vst [vmem:[%s372 + $0x98] sm:$0xff] %v5201
      %5234 = vst [vmem:[%s372 + $0xa0] sm:$0xff] %v5202
      %5235 = vst [vmem:[%s372 + $0xa8] sm:$0xff] %v5203
      %5236 = vst [vmem:[%s372 + $0xb0] sm:$0xff] %v5204
      %5237 = vst [vmem:[%s372 + $0xb8] sm:$0xff] %v5205
      %5238 = vst [vmem:[%s372 + $0xc0] sm:$0xff] %v5206
      %5239 = vst [vmem:[%s372 + $0xc8] sm:$0xff] %v5207
      %5240 = vst [vmem:[%s372 + $0xd0] sm:$0xff] %v5208
      %5241 = vst [vmem:[%s372 + $0xd8] sm:$0xff] %v5209
      %5242 = vst [vmem:[%s372 + $0xe0] sm:$0xff] %v5210
      %5243 = vst [vmem:[%s372 + $0xe8] sm:$0xff] %v5211
      %5244 = vst [vmem:[%s372 + $0xf0] sm:$0xff] %v5212
      %5245 = vst [vmem:[%s372 + $0xf8] sm:$0xff] %v5213
      %s5246 = smul.u32 16, %s22
      %p5247 = scmp.lt.s32.totalorder %s21, 1
      %s5248 = scalar_select %p5247, %s21, 1
      %p5249 = scmp.lt.s32.totalorder %s5246, 15
      %s5250 = scalar_select %p5249, %s5246, 15
      %s5251 = smul.addr %s5250, 2
      %s5252 = smul.addr %s5248, 32
      %s5253 = sadd.s32 %s5251, %s5252
      %s5254 = smul.addr %s5253, 8
      %s5255 = scalar_lea.vmem %s6, %s5254
      // Predicated region
      $region45: #{c1_forward.1} parent=43 // pred_check
        %p5256 = pneg %p193
      $region46: #{c1_forward.1} parent=43 // pred_check_branch
        %5258 = sbr.rel (%p5256) target = $region48
      $region47: #{c1_forward.1} parent=43 // pred_region
        %s5259 = smul.u32 16, %s22
      $region48: #{c1_forward.1} parent=43 // pred_fallthru
        _
    $region44: #{c1_forward.1} parent=5 // pred_fallthru
      _
    %p5260 = scmp.le.s32.totalorder 2, %s12
    // Predicated region
    $region49: #{c1_forward.1} parent=5 // pred_check
      %p5261 = pneg %p5260
    $region50: #{c1_forward.1} parent=5 // pred_check_branch
      %5263 = sbr.rel (%p5261) target = $region52
    $region51: #{c1_forward.1} parent=5 // pred_region
      %s5264 = ssub.s32 %s12, 2
      // Predicated region
      $region53: #{c1_forward.1} parent=51 // pred_check
        %p5265 = pneg %p199
      $region54: #{c1_forward.1} parent=51 // pred_check_branch
        %5267 = sbr.rel (%p5265) target = $region56
      $region55: #{c1_forward.1} parent=51 // pred_region
        %s5268 = smul.u32 16, %s24
        %p5269 = scmp.lt.s32.totalorder %s23, 1
        %s5270 = scalar_select %p5269, %s23, 1
        %p5271 = scmp.lt.s32.totalorder %s5268, 15
        %s5272 = scalar_select %p5271, %s5268, 15
        %s5273 = smul.addr %s5272, 2
        %s5274 = smul.addr %s5270, 32
        %s5275 = sadd.s32 %s5273, %s5274
        %s5276 = smul.addr %s5275, 8
        %s5277 = scalar_lea.vmem %s6, %s5276
      $region56: #{c1_forward.1} parent=51 // pred_fallthru
        _
    $region52: #{c1_forward.1} parent=5 // pred_fallthru
      _
  $region6: #{c1_forward.1} parent=0 // loop_footer
    %s16 = sadd.s32 1, %s12
  $region7: #{c1_forward.1} parent=0 // loop_footer_branch
    %11 = sbr.rel target = $region3
  $region8: #{c1_forward.1} parent=0 // loop_exit
    _

</llo_original>
